<compile_context>
chip_gen: v7x
topology: tpu7x:2x2x1
jax: 0.10.0
libtpu: 0.0.40
codegen_flags: <defaults>
</compile_context>

<pallas_src>
import jax
import jax.numpy as jnp
from jax.experimental import pallas as pl
from jax.experimental.pallas import tpu as pltpu


# --------------------------- fused conv+bias+relu+pool kernel ----------------

def _conv_relu_pool_kernel(p_ref, w_ref, b_ref, o_ref):
    """One sample: Conv3d (as dense tap-packed matmul) + bias + ReLU + 2x2 max-pool.

    p_ref: (1, 4, K, B)  per-pool-cell patch matrices, taps packed along K.
    w_ref: (Cout, K)     conv weights, taps packed along K (matches p_ref).
    b_ref: (Cout, 1)     bias (f32).
    o_ref: (1, Cout, B)  pooled output pixels (bf16 for inner layers, f32 last).
    """
    w = w_ref[...]
    b = b_ref[...]
    pooled = None
    for g in range(4):                       # the four cells of the 2x2 max-pool
        conv = jnp.dot(w, p_ref[0, g], preferred_element_type=jnp.float32)
        conv = jnp.maximum(conv + b, 0.0)    # bias + ReLU in f32
        pooled = conv if pooled is None else jnp.maximum(pooled, conv)
    o_ref[0] = pooled.astype(o_ref.dtype)


# --------------------------- XLA-side patch gather ---------------------------

def _build_pool_patches(act, dhw, ksize, stride, pad, dtype):
    """Gather conv-input patches for every pooled output position.

    act: (N, Cin, D*H*W) channel-first activation (spatial flattened).
    Returns (patches, (Do, Hpo, Wpo)) with
      patches: (N, 4, K, B); K = kd*kh*kw*Cin (tap-major, cin-minor),
               B = Do*Hpo*Wpo; axis 1 indexes the 2x2 pool cell (gy*2+gx).
    Only conv positions kept by the floor-mode 2x2 max-pool are gathered.
    """
    N, Cin, _ = act.shape
    D, H, W = dhw
    kd, kh, kw = ksize
    sd, sh, sw = stride
    pd, ph, pw = pad

    a = act.reshape(N, Cin, D, H, W)
    a = jnp.pad(a, ((0, 0), (0, 0), (pd, pd), (ph, ph), (pw, pw)))
    Dp, Hp, Wp = D + 2 * pd, H + 2 * ph, W + 2 * pw
    Do = (Dp - kd) // sd + 1
    Ho = (Hp - kh) // sh + 1
    Wo = (Wp - kw) // sw + 1
    Hpo, Wpo = Ho // 2, Wo // 2              # MaxPool3d((1,2,2),(1,2,2)), floor
    assert Do >= 1 and Hpo >= 1 and Wpo >= 1, (Do, Hpo, Wpo)

    taps = []
    for dz in range(kd):
        for dy in range(kh):
            for dx in range(kw):
                taps.append(a[:, :,
                              dz: dz + (Do - 1) * sd + 1: sd,
                              dy: dy + (2 * Hpo - 1) * sh + 1: sh,
                              dx: dx + (2 * Wpo - 1) * sw + 1: sw])
    p = jnp.stack(taps, axis=1)              # (N, kd*kh*kw, Cin, Do, 2Hpo, 2Wpo)
    K = kd * kh * kw * Cin
    p = p.reshape(N, K, Do, Hpo, 2, Wpo, 2)
    p = p.transpose(0, 4, 6, 1, 2, 3, 5)     # (N, gy, gx, K, Do, Hpo, Wpo)
    p = p.reshape(N, 4, K, Do * Hpo * Wpo).astype(dtype)
    return p, (Do, Hpo, Wpo)


# --------------------------- layer wrapper ------------------------------------

def conv3d_relu_pool(act, dhw, weight, bias, stride, pad, *,
                     out_dtype, mxu_dtype=jnp.bfloat16):
    """Fused Conv3d (PyTorch semantics) + bias + ReLU + MaxPool3d((1,2,2),(1,2,2)).

    act:    (N, Cin, D*H*W) channel-first activation.
    weight: (Cout, Cin, kd, kh, kw) PyTorch layout;  bias: (Cout,).
    Returns ((N, Cout, Do*Hpo*Wpo) activation in out_dtype, (Do, Hpo, Wpo)).
    """
    N, Cin, _ = act.shape
    Cout, Cin_w, kd, kh, kw = weight.shape
    assert Cin_w == Cin

    patches, (Do, Hpo, Wpo) = _build_pool_patches(
        act, dhw, (kd, kh, kw), stride, pad, mxu_dtype)
    K = kd * kh * kw * Cin
    B = Do * Hpo * Wpo

    # weight -> (Cout, K), K ordered (dz, dy, dx, cin) to match the patches.
    wmat = jnp.transpose(weight, (0, 2, 3, 4, 1)).reshape(Cout, K).astype(mxu_dtype)
    bcol = bias.reshape(Cout, 1).astype(jnp.float32)

    # keep the contraction dim a multiple of 8 (only layer 1's K=27 pads, to 32)
    Kp = -(-K // 8) * 8
    if Kp != K:
        patches = jnp.pad(patches, ((0, 0), (0, 0), (0, Kp - K), (0, 0)))
        wmat = jnp.pad(wmat, ((0, 0), (0, Kp - K)))

    flops = 2 * N * 4 * B * K * Cout         # real (unpadded) work
    bytes_accessed = (patches.size * patches.dtype.itemsize
                      + wmat.size * wmat.dtype.itemsize + bcol.size * 4
                      + N * Cout * B * jnp.dtype(out_dtype).itemsize)

    out = pl.pallas_call(
        _conv_relu_pool_kernel,
        out_shape=jax.ShapeDtypeStruct((N, Cout, B), out_dtype),
        grid_spec=pltpu.PrefetchScalarGridSpec(
            num_scalar_prefetch=0,
            grid=(N,),                        # Do folded into the pixel axis
            in_specs=[
                pl.BlockSpec((1, 4, Kp, B), lambda n: (n, 0, 0, 0)),
                pl.BlockSpec((Cout, Kp), lambda n: (0, 0)),   # weights resident
                pl.BlockSpec((Cout, 1), lambda n: (0, 0)),
            ],
            out_specs=pl.BlockSpec((1, Cout, B), lambda n: (n, 0, 0)),
        ),
        compiler_params=pltpu.CompilerParams(
            dimension_semantics=("parallel",)),  # megacore split over samples
        cost_estimate=pl.CostEstimate(
            flops=flops, transcendentals=0, bytes_accessed=bytes_accessed),
    )(patches, wmat, bcol)
    # TODO(synk): for large video resolutions, add a grid axis tiling the pixel
    # (B) dim so the per-step VMEM block stays bounded on v7x (64 MiB VMEM).
    return out, (Do, Hpo, Wpo)


# --------------------------- module ------------------------------------------

def init_params(key, channels=(8, 16, 32)):
    c0, c1, c2 = channels
    shapes = [((c0, 1, 3, 3, 3), (c0,)),
              ((c1, c0, 3, 3, 3), (c1,)),
              ((c2, c1, 3, 3, 3), (c2,))]
    params = []
    for ws, bs in shapes:
        key, kw_, kb_ = jax.random.split(key, 3)
        fan_in = ws[1] * ws[2] * ws[3] * ws[4]
        bound = 1.0 / (fan_in ** 0.5)
        w = jax.random.uniform(kw_, ws, jnp.float32, -bound, bound)
        b = jax.random.uniform(kb_, bs, jnp.float32, -bound, bound)
        params.append((w, b))
    return params


def conv3d_encoder(x, params, *, mxu_dtype=jnp.bfloat16):
    """Forward of Conv3dEncoder.  x: (N, 1, T, H, W) f32 -> (N, C3, T', H', W').

    mxu_dtype=jnp.float32 gives an exact-precision fallback (inference default
    is bf16 operands with f32 accumulation / epilogue).
    """
    (w1, b1), (w2, b2), (w3, b3) = params
    N, c0, D, H, W = x.shape
    assert c0 == 1
    act = x.reshape(N, 1, D * H * W)
    # TODO(synk): Dropout / Dropout3d are stochastic training-time ops; modeled
    # as identity (inference mode) here.
    act, dhw = conv3d_relu_pool(act, (D, H, W), w1, b1, (1, 2, 2), (1, 2, 2),
                                out_dtype=mxu_dtype, mxu_dtype=mxu_dtype)
    act, dhw = conv3d_relu_pool(act, dhw, w2, b2, (1, 1, 1), (1, 2, 2),
                                out_dtype=mxu_dtype, mxu_dtype=mxu_dtype)
    act, dhw = conv3d_relu_pool(act, dhw, w3, b3, (1, 1, 1), (1, 1, 1),
                                out_dtype=jnp.float32, mxu_dtype=mxu_dtype)
    C3 = w3.shape[0]
    return act.reshape(N, C3, *dhw)          # already NCDHW order; pure reshape


# --------------------------- reference (plain XLA) ----------------------------

def _reference_forward(x, params):
    def conv(z, w, b, stride, pad):
        y = jax.lax.conv_general_dilated(
            z, w, window_strides=stride,
            padding=[(pad[0], pad[0]), (pad[1], pad[1]), (pad[2], pad[2])],
            dimension_numbers=("NCDHW", "OIDHW", "NCDHW"))
        return y + b.reshape(1, -1, 1, 1, 1)

    def pool(z):
        return jax.lax.reduce_window(
            z, -jnp.inf, jax.lax.max,
            window_dimensions=(1, 1, 1, 2, 2),
            window_strides=(1, 1, 1, 2, 2), padding="VALID")

    (w1, b1), (w2, b2), (w3, b3) = params
    x = pool(jax.nn.relu(conv(x, w1, b1, (1, 2, 2), (1, 2, 2))))
    x = pool(jax.nn.relu(conv(x, w2, b2, (1, 1, 1), (1, 2, 2))))
    x = pool(jax.nn.relu(conv(x, w3, b3, (1, 1, 1), (1, 1, 1))))
    return x


if __name__ == "__main__":
    key = jax.random.PRNGKey(0)
    kx, kp = jax.random.split(key)

    # small video batch: (N=2, C=1, T=8, H=32, W=32)
    x = jax.random.normal(kx, (2, 1, 8, 32, 32), dtype=jnp.float32)
    params = init_params(kp, channels=(8, 16, 32))

    out = jax.jit(conv3d_encoder)(x, params)
    out = jax.block_until_ready(out)

    # expected: (2, 32, 8, 2, 2)
    assert out.shape == (2, 32, 8, 2, 2), out.shape
    assert bool(jnp.all(jnp.isfinite(out)))

    # numerical check vs plain-XLA reference (bf16 MXU operands -> loose tol)
    ref = _reference_forward(x, params)
    err = float(jnp.max(jnp.abs(out - ref)))
    assert err < 5e-2, f"max abs err {err}"

    print("KERNEL_OK")
</pallas_src>

<mosaic_0001>
module attributes {stable_mosaic.version = 11 : i64} {
  func.func @_conv_relu_pool_kernel(%arg0: i32, %arg1: memref<1x4x32x512xbf16, #tpu.memory_space<vmem>>, %arg2: memref<8x32xbf16, #tpu.memory_space<vmem>>, %arg3: memref<8x1xf32, #tpu.memory_space<vmem>>, %arg4: memref<1x8x512xbf16, #tpu.memory_space<vmem>>) attributes {dimension_semantics = [#tpu.dimension_semantics<parallel>], iteration_bounds = array<i64: 2>, scalar_prefetch = 0 : i64, scratch_operands = 0 : i64, tpu.core_type = #tpu.core_type<tc>, window_params = [{transform_indices = @transform_0, window_bounds = array<i64: 1, 4, 32, 512>}, {pipeline_mode = #tpu.pipeline_mode<synchronous>, transform_indices = @transform_1, window_bounds = array<i64: 8, 32>}, {pipeline_mode = #tpu.pipeline_mode<synchronous>, transform_indices = @transform_2, window_bounds = array<i64: 8, 1>}, {transform_indices = @transform_3, window_bounds = array<i64: 1, 8, 512>}]} {
    %c0 = arith.constant 0 : index
    %c0_0 = arith.constant 0 : index
    %0 = vector.load %arg2[%c0, %c0_0] : memref<8x32xbf16, #tpu.memory_space<vmem>>, vector<8x32xbf16>
    %c0_1 = arith.constant 0 : index
    %c0_2 = arith.constant 0 : index
    %1 = vector.load %arg3[%c0_1, %c0_2] : memref<8x1xf32, #tpu.memory_space<vmem>>, vector<8x1xf32>
    %c0_3 = arith.constant 0 : index
    %c0_4 = arith.constant 0 : index
    %c0_5 = arith.constant 0 : index
    %c0_6 = arith.constant 0 : index
    %2 = vector.load %arg1[%c0_3, %c0_4, %c0_5, %c0_6] : memref<1x4x32x512xbf16, #tpu.memory_space<vmem>>, vector<1x1x32x512xbf16>
    %3 = vector.shape_cast %2 : vector<1x1x32x512xbf16> to vector<32x512xbf16>
    %cst = arith.constant dense<0.000000e+00> : vector<8x512xf32>
    %4 = tpu.matmul %0, %3, %cst {dimension_numbers = #tpu.dot_dimension_numbers<[1], [0], [0], [1], [0, 0, 1, 1], [], []>} : vector<8x32xbf16>, vector<32x512xbf16>, vector<8x512xf32> -> vector<8x512xf32>
    %5 = vector.broadcast %1 : vector<8x1xf32> to vector<8x512xf32>
    %6 = arith.addf %4, %5 : vector<8x512xf32>
    %cst_7 = arith.constant 0.000000e+00 : f32
    %7 = vector.broadcast %cst_7 : f32 to vector<8x512xf32>
    %8 = arith.maximumf %6, %7 : vector<8x512xf32>
    %c0_8 = arith.constant 0 : index
    %c1 = arith.constant 1 : index
    %c0_9 = arith.constant 0 : index
    %c0_10 = arith.constant 0 : index
    %9 = vector.load %arg1[%c0_8, %c1, %c0_9, %c0_10] : memref<1x4x32x512xbf16, #tpu.memory_space<vmem>>, vector<1x1x32x512xbf16>
    %10 = vector.shape_cast %9 : vector<1x1x32x512xbf16> to vector<32x512xbf16>
    %cst_11 = arith.constant dense<0.000000e+00> : vector<8x512xf32>
    %11 = tpu.matmul %0, %10, %cst_11 {dimension_numbers = #tpu.dot_dimension_numbers<[1], [0], [0], [1], [0, 0, 1, 1], [], []>} : vector<8x32xbf16>, vector<32x512xbf16>, vector<8x512xf32> -> vector<8x512xf32>
    %12 = vector.broadcast %1 : vector<8x1xf32> to vector<8x512xf32>
    %13 = arith.addf %11, %12 : vector<8x512xf32>
    %cst_12 = arith.constant 0.000000e+00 : f32
    %14 = vector.broadcast %cst_12 : f32 to vector<8x512xf32>
    %15 = arith.maximumf %13, %14 : vector<8x512xf32>
    %16 = arith.maximumf %8, %15 : vector<8x512xf32>
    %c0_13 = arith.constant 0 : index
    %c2 = arith.constant 2 : index
    %c0_14 = arith.constant 0 : index
    %c0_15 = arith.constant 0 : index
    %17 = vector.load %arg1[%c0_13, %c2, %c0_14, %c0_15] : memref<1x4x32x512xbf16, #tpu.memory_space<vmem>>, vector<1x1x32x512xbf16>
    %18 = vector.shape_cast %17 : vector<1x1x32x512xbf16> to vector<32x512xbf16>
    %cst_16 = arith.constant dense<0.000000e+00> : vector<8x512xf32>
    %19 = tpu.matmul %0, %18, %cst_16 {dimension_numbers = #tpu.dot_dimension_numbers<[1], [0], [0], [1], [0, 0, 1, 1], [], []>} : vector<8x32xbf16>, vector<32x512xbf16>, vector<8x512xf32> -> vector<8x512xf32>
    %20 = vector.broadcast %1 : vector<8x1xf32> to vector<8x512xf32>
    %21 = arith.addf %19, %20 : vector<8x512xf32>
    %cst_17 = arith.constant 0.000000e+00 : f32
    %22 = vector.broadcast %cst_17 : f32 to vector<8x512xf32>
    %23 = arith.maximumf %21, %22 : vector<8x512xf32>
    %24 = arith.maximumf %16, %23 : vector<8x512xf32>
    %c0_18 = arith.constant 0 : index
    %c3 = arith.constant 3 : index
    %c0_19 = arith.constant 0 : index
    %c0_20 = arith.constant 0 : index
    %25 = vector.load %arg1[%c0_18, %c3, %c0_19, %c0_20] : memref<1x4x32x512xbf16, #tpu.memory_space<vmem>>, vector<1x1x32x512xbf16>
    %26 = vector.shape_cast %25 : vector<1x1x32x512xbf16> to vector<32x512xbf16>
    %cst_21 = arith.constant dense<0.000000e+00> : vector<8x512xf32>
    %27 = tpu.matmul %0, %26, %cst_21 {dimension_numbers = #tpu.dot_dimension_numbers<[1], [0], [0], [1], [0, 0, 1, 1], [], []>} : vector<8x32xbf16>, vector<32x512xbf16>, vector<8x512xf32> -> vector<8x512xf32>
    %28 = vector.broadcast %1 : vector<8x1xf32> to vector<8x512xf32>
    %29 = arith.addf %27, %28 : vector<8x512xf32>
    %cst_22 = arith.constant 0.000000e+00 : f32
    %30 = vector.broadcast %cst_22 : f32 to vector<8x512xf32>
    %31 = arith.maximumf %29, %30 : vector<8x512xf32>
    %32 = arith.maximumf %24, %31 : vector<8x512xf32>
    %33 = arith.truncf %32 : vector<8x512xf32> to vector<8x512xbf16>
    %c0_23 = arith.constant 0 : index
    %c0_24 = arith.constant 0 : index
    %c0_25 = arith.constant 0 : index
    %34 = vector.load %arg4[%c0_23, %c0_24, %c0_25] : memref<1x8x512xbf16, #tpu.memory_space<vmem>>, vector<1x8x512xbf16>
    %35 = vector.shape_cast %34 : vector<1x8x512xbf16> to vector<8x512xbf16>
    %36 = vector.shape_cast %33 : vector<8x512xbf16> to vector<1x8x512xbf16>
    tpu.vector_store %arg4[%c0_23, %c0_24, %c0_25], %36 {strides = array<i32>} : memref<1x8x512xbf16, #tpu.memory_space<vmem>>, vector<1x8x512xbf16>,
    return
  }
  func.func @transform_0(%arg0: i32) -> (i32, i32, i32, i32) {
    %c0_i32 = arith.constant 0 : i32
    %c0_i32_0 = arith.constant 0 : i32
    %c0_i32_1 = arith.constant 0 : i32
    %c0_i32_2 = arith.constant 0 : i32
    return %arg0, %c0_i32, %c0_i32_0, %c0_i32_1 : i32, i32, i32, i32
  }
  func.func @transform_1(%arg0: i32) -> (i32, i32) {
    %c0_i32 = arith.constant 0 : i32
    %c0_i32_0 = arith.constant 0 : i32
    %c0_i32_1 = arith.constant 0 : i32
    return %c0_i32, %c0_i32_0 : i32, i32
  }
  func.func @transform_2(%arg0: i32) -> (i32, i32) {
    %c0_i32 = arith.constant 0 : i32
    %c0_i32_0 = arith.constant 0 : i32
    %c0_i32_1 = arith.constant 0 : i32
    return %c0_i32, %c0_i32_0 : i32, i32
  }
  func.func @transform_3(%arg0: i32) -> (i32, i32, i32) {
    %c0_i32 = arith.constant 0 : i32
    %c0_i32_0 = arith.constant 0 : i32
    %c0_i32_1 = arith.constant 0 : i32
    return %arg0, %c0_i32, %c0_i32_0 : i32, i32, i32
  }
}

module attributes {stable_mosaic.version = 11 : i64} {
  func.func @_conv_relu_pool_kernel(%arg0: i32, %arg1: memref<1x4x216x200xbf16, #tpu.memory_space<vmem>>, %arg2: memref<16x216xbf16, #tpu.memory_space<vmem>>, %arg3: memref<16x1xf32, #tpu.memory_space<vmem>>, %arg4: memref<1x16x200xbf16, #tpu.memory_space<vmem>>) attributes {dimension_semantics = [#tpu.dimension_semantics<parallel>], iteration_bounds = array<i64: 2>, scalar_prefetch = 0 : i64, scratch_operands = 0 : i64, tpu.core_type = #tpu.core_type<tc>, window_params = [{transform_indices = @transform_0, window_bounds = array<i64: 1, 4, 216, 200>}, {pipeline_mode = #tpu.pipeline_mode<synchronous>, transform_indices = @transform_1, window_bounds = array<i64: 16, 216>}, {pipeline_mode = #tpu.pipeline_mode<synchronous>, transform_indices = @transform_2, window_bounds = array<i64: 16, 1>}, {transform_indices = @transform_3, window_bounds = array<i64: 1, 16, 200>}]} {
    %c0 = arith.constant 0 : index
    %c0_0 = arith.constant 0 : index
    %0 = vector.load %arg2[%c0, %c0_0] : memref<16x216xbf16, #tpu.memory_space<vmem>>, vector<16x216xbf16>
    %c0_1 = arith.constant 0 : index
    %c0_2 = arith.constant 0 : index
    %1 = vector.load %arg3[%c0_1, %c0_2] : memref<16x1xf32, #tpu.memory_space<vmem>>, vector<16x1xf32>
    %c0_3 = arith.constant 0 : index
    %c0_4 = arith.constant 0 : index
    %c0_5 = arith.constant 0 : index
    %c0_6 = arith.constant 0 : index
    %2 = vector.load %arg1[%c0_3, %c0_4, %c0_5, %c0_6] : memref<1x4x216x200xbf16, #tpu.memory_space<vmem>>, vector<1x1x216x200xbf16>
    %3 = vector.shape_cast %2 : vector<1x1x216x200xbf16> to vector<216x200xbf16>
    %cst = arith.constant dense<0.000000e+00> : vector<16x200xf32>
    %4 = tpu.matmul %0, %3, %cst {dimension_numbers = #tpu.dot_dimension_numbers<[1], [0], [0], [1], [0, 0, 1, 1], [], []>} : vector<16x216xbf16>, vector<216x200xbf16>, vector<16x200xf32> -> vector<16x200xf32>
    %5 = vector.broadcast %1 : vector<16x1xf32> to vector<16x200xf32>
    %6 = arith.addf %4, %5 : vector<16x200xf32>
    %cst_7 = arith.constant 0.000000e+00 : f32
    %7 = vector.broadcast %cst_7 : f32 to vector<16x200xf32>
    %8 = arith.maximumf %6, %7 : vector<16x200xf32>
    %c0_8 = arith.constant 0 : index
    %c1 = arith.constant 1 : index
    %c0_9 = arith.constant 0 : index
    %c0_10 = arith.constant 0 : index
    %9 = vector.load %arg1[%c0_8, %c1, %c0_9, %c0_10] : memref<1x4x216x200xbf16, #tpu.memory_space<vmem>>, vector<1x1x216x200xbf16>
    %10 = vector.shape_cast %9 : vector<1x1x216x200xbf16> to vector<216x200xbf16>
    %cst_11 = arith.constant dense<0.000000e+00> : vector<16x200xf32>
    %11 = tpu.matmul %0, %10, %cst_11 {dimension_numbers = #tpu.dot_dimension_numbers<[1], [0], [0], [1], [0, 0, 1, 1], [], []>} : vector<16x216xbf16>, vector<216x200xbf16>, vector<16x200xf32> -> vector<16x200xf32>
    %12 = vector.broadcast %1 : vector<16x1xf32> to vector<16x200xf32>
    %13 = arith.addf %11, %12 : vector<16x200xf32>
    %cst_12 = arith.constant 0.000000e+00 : f32
    %14 = vector.broadcast %cst_12 : f32 to vector<16x200xf32>
    %15 = arith.maximumf %13, %14 : vector<16x200xf32>
    %16 = arith.maximumf %8, %15 : vector<16x200xf32>
    %c0_13 = arith.constant 0 : index
    %c2 = arith.constant 2 : index
    %c0_14 = arith.constant 0 : index
    %c0_15 = arith.constant 0 : index
    %17 = vector.load %arg1[%c0_13, %c2, %c0_14, %c0_15] : memref<1x4x216x200xbf16, #tpu.memory_space<vmem>>, vector<1x1x216x200xbf16>
    %18 = vector.shape_cast %17 : vector<1x1x216x200xbf16> to vector<216x200xbf16>
    %cst_16 = arith.constant dense<0.000000e+00> : vector<16x200xf32>
    %19 = tpu.matmul %0, %18, %cst_16 {dimension_numbers = #tpu.dot_dimension_numbers<[1], [0], [0], [1], [0, 0, 1, 1], [], []>} : vector<16x216xbf16>, vector<216x200xbf16>, vector<16x200xf32> -> vector<16x200xf32>
    %20 = vector.broadcast %1 : vector<16x1xf32> to vector<16x200xf32>
    %21 = arith.addf %19, %20 : vector<16x200xf32>
    %cst_17 = arith.constant 0.000000e+00 : f32
    %22 = vector.broadcast %cst_17 : f32 to vector<16x200xf32>
    %23 = arith.maximumf %21, %22 : vector<16x200xf32>
    %24 = arith.maximumf %16, %23 : vector<16x200xf32>
    %c0_18 = arith.constant 0 : index
    %c3 = arith.constant 3 : index
    %c0_19 = arith.constant 0 : index
    %c0_20 = arith.constant 0 : index
    %25 = vector.load %arg1[%c0_18, %c3, %c0_19, %c0_20] : memref<1x4x216x200xbf16, #tpu.memory_space<vmem>>, vector<1x1x216x200xbf16>
    %26 = vector.shape_cast %25 : vector<1x1x216x200xbf16> to vector<216x200xbf16>
    %cst_21 = arith.constant dense<0.000000e+00> : vector<16x200xf32>
    %27 = tpu.matmul %0, %26, %cst_21 {dimension_numbers = #tpu.dot_dimension_numbers<[1], [0], [0], [1], [0, 0, 1, 1], [], []>} : vector<16x216xbf16>, vector<216x200xbf16>, vector<16x200xf32> -> vector<16x200xf32>
    %28 = vector.broadcast %1 : vector<16x1xf32> to vector<16x200xf32>
    %29 = arith.addf %27, %28 : vector<16x200xf32>
    %cst_22 = arith.constant 0.000000e+00 : f32
    %30 = vector.broadcast %cst_22 : f32 to vector<16x200xf32>
    %31 = arith.maximumf %29, %30 : vector<16x200xf32>
    %32 = arith.maximumf %24, %31 : vector<16x200xf32>
    %33 = arith.truncf %32 : vector<16x200xf32> to vector<16x200xbf16>
    %c0_23 = arith.constant 0 : index
    %c0_24 = arith.constant 0 : index
    %c0_25 = arith.constant 0 : index
    %34 = vector.load %arg4[%c0_23, %c0_24, %c0_25] : memref<1x16x200xbf16, #tpu.memory_space<vmem>>, vector<1x16x200xbf16>
    %35 = vector.shape_cast %34 : vector<1x16x200xbf16> to vector<16x200xbf16>
    %36 = vector.shape_cast %33 : vector<16x200xbf16> to vector<1x16x200xbf16>
    tpu.vector_store %arg4[%c0_23, %c0_24, %c0_25], %36 {strides = array<i32>} : memref<1x16x200xbf16, #tpu.memory_space<vmem>>, vector<1x16x200xbf16>,
    return
  }
  func.func @transform_0(%arg0: i32) -> (i32, i32, i32, i32) {
    %c0_i32 = arith.constant 0 : i32
    %c0_i32_0 = arith.constant 0 : i32
    %c0_i32_1 = arith.constant 0 : i32
    %c0_i32_2 = arith.constant 0 : i32
    return %arg0, %c0_i32, %c0_i32_0, %c0_i32_1 : i32, i32, i32, i32
  }
  func.func @transform_1(%arg0: i32) -> (i32, i32) {
    %c0_i32 = arith.constant 0 : i32
    %c0_i32_0 = arith.constant 0 : i32
    %c0_i32_1 = arith.constant 0 : i32
    return %c0_i32, %c0_i32_0 : i32, i32
  }
  func.func @transform_2(%arg0: i32) -> (i32, i32) {
    %c0_i32 = arith.constant 0 : i32
    %c0_i32_0 = arith.constant 0 : i32
    %c0_i32_1 = arith.constant 0 : i32
    return %c0_i32, %c0_i32_0 : i32, i32
  }
  func.func @transform_3(%arg0: i32) -> (i32, i32, i32) {
    %c0_i32 = arith.constant 0 : i32
    %c0_i32_0 = arith.constant 0 : i32
    %c0_i32_1 = arith.constant 0 : i32
    return %arg0, %c0_i32, %c0_i32_0 : i32, i32, i32
  }
}

module attributes {stable_mosaic.version = 11 : i64} {
  func.func @_conv_relu_pool_kernel(%arg0: i32, %arg1: memref<1x4x432x32xbf16, #tpu.memory_space<vmem>>, %arg2: memref<32x432xbf16, #tpu.memory_space<vmem>>, %arg3: memref<32x1xf32, #tpu.memory_space<vmem>>, %arg4: memref<1x32x32xf32, #tpu.memory_space<vmem>>) attributes {dimension_semantics = [#tpu.dimension_semantics<parallel>], iteration_bounds = array<i64: 2>, scalar_prefetch = 0 : i64, scratch_operands = 0 : i64, tpu.core_type = #tpu.core_type<tc>, window_params = [{transform_indices = @transform_0, window_bounds = array<i64: 1, 4, 432, 32>}, {pipeline_mode = #tpu.pipeline_mode<synchronous>, transform_indices = @transform_1, window_bounds = array<i64: 32, 432>}, {pipeline_mode = #tpu.pipeline_mode<synchronous>, transform_indices = @transform_2, window_bounds = array<i64: 32, 1>}, {transform_indices = @transform_3, window_bounds = array<i64: 1, 32, 32>}]} {
    %c0 = arith.constant 0 : index
    %c0_0 = arith.constant 0 : index
    %0 = vector.load %arg2[%c0, %c0_0] : memref<32x432xbf16, #tpu.memory_space<vmem>>, vector<32x432xbf16>
    %c0_1 = arith.constant 0 : index
    %c0_2 = arith.constant 0 : index
    %1 = vector.load %arg3[%c0_1, %c0_2] : memref<32x1xf32, #tpu.memory_space<vmem>>, vector<32x1xf32>
    %c0_3 = arith.constant 0 : index
    %c0_4 = arith.constant 0 : index
    %c0_5 = arith.constant 0 : index
    %c0_6 = arith.constant 0 : index
    %2 = vector.load %arg1[%c0_3, %c0_4, %c0_5, %c0_6] : memref<1x4x432x32xbf16, #tpu.memory_space<vmem>>, vector<1x1x432x32xbf16>
    %3 = vector.shape_cast %2 : vector<1x1x432x32xbf16> to vector<432x32xbf16>
    %cst = arith.constant dense<0.000000e+00> : vector<32x32xf32>
    %4 = tpu.matmul %0, %3, %cst {dimension_numbers = #tpu.dot_dimension_numbers<[1], [0], [0], [1], [0, 0, 1, 1], [], []>} : vector<32x432xbf16>, vector<432x32xbf16>, vector<32x32xf32> -> vector<32x32xf32>
    %5 = vector.broadcast %1 : vector<32x1xf32> to vector<32x32xf32>
    %6 = arith.addf %4, %5 : vector<32x32xf32>
    %cst_7 = arith.constant 0.000000e+00 : f32
    %7 = vector.broadcast %cst_7 : f32 to vector<32x32xf32>
    %8 = arith.maximumf %6, %7 : vector<32x32xf32>
    %c0_8 = arith.constant 0 : index
    %c1 = arith.constant 1 : index
    %c0_9 = arith.constant 0 : index
    %c0_10 = arith.constant 0 : index
    %9 = vector.load %arg1[%c0_8, %c1, %c0_9, %c0_10] : memref<1x4x432x32xbf16, #tpu.memory_space<vmem>>, vector<1x1x432x32xbf16>
    %10 = vector.shape_cast %9 : vector<1x1x432x32xbf16> to vector<432x32xbf16>
    %cst_11 = arith.constant dense<0.000000e+00> : vector<32x32xf32>
    %11 = tpu.matmul %0, %10, %cst_11 {dimension_numbers = #tpu.dot_dimension_numbers<[1], [0], [0], [1], [0, 0, 1, 1], [], []>} : vector<32x432xbf16>, vector<432x32xbf16>, vector<32x32xf32> -> vector<32x32xf32>
    %12 = vector.broadcast %1 : vector<32x1xf32> to vector<32x32xf32>
    %13 = arith.addf %11, %12 : vector<32x32xf32>
    %cst_12 = arith.constant 0.000000e+00 : f32
    %14 = vector.broadcast %cst_12 : f32 to vector<32x32xf32>
    %15 = arith.maximumf %13, %14 : vector<32x32xf32>
    %16 = arith.maximumf %8, %15 : vector<32x32xf32>
    %c0_13 = arith.constant 0 : index
    %c2 = arith.constant 2 : index
    %c0_14 = arith.constant 0 : index
    %c0_15 = arith.constant 0 : index
    %17 = vector.load %arg1[%c0_13, %c2, %c0_14, %c0_15] : memref<1x4x432x32xbf16, #tpu.memory_space<vmem>>, vector<1x1x432x32xbf16>
    %18 = vector.shape_cast %17 : vector<1x1x432x32xbf16> to vector<432x32xbf16>
    %cst_16 = arith.constant dense<0.000000e+00> : vector<32x32xf32>
    %19 = tpu.matmul %0, %18, %cst_16 {dimension_numbers = #tpu.dot_dimension_numbers<[1], [0], [0], [1], [0, 0, 1, 1], [], []>} : vector<32x432xbf16>, vector<432x32xbf16>, vector<32x32xf32> -> vector<32x32xf32>
    %20 = vector.broadcast %1 : vector<32x1xf32> to vector<32x32xf32>
    %21 = arith.addf %19, %20 : vector<32x32xf32>
    %cst_17 = arith.constant 0.000000e+00 : f32
    %22 = vector.broadcast %cst_17 : f32 to vector<32x32xf32>
    %23 = arith.maximumf %21, %22 : vector<32x32xf32>
    %24 = arith.maximumf %16, %23 : vector<32x32xf32>
    %c0_18 = arith.constant 0 : index
    %c3 = arith.constant 3 : index
    %c0_19 = arith.constant 0 : index
    %c0_20 = arith.constant 0 : index
    %25 = vector.load %arg1[%c0_18, %c3, %c0_19, %c0_20] : memref<1x4x432x32xbf16, #tpu.memory_space<vmem>>, vector<1x1x432x32xbf16>
    %26 = vector.shape_cast %25 : vector<1x1x432x32xbf16> to vector<432x32xbf16>
    %cst_21 = arith.constant dense<0.000000e+00> : vector<32x32xf32>
    %27 = tpu.matmul %0, %26, %cst_21 {dimension_numbers = #tpu.dot_dimension_numbers<[1], [0], [0], [1], [0, 0, 1, 1], [], []>} : vector<32x432xbf16>, vector<432x32xbf16>, vector<32x32xf32> -> vector<32x32xf32>
    %28 = vector.broadcast %1 : vector<32x1xf32> to vector<32x32xf32>
    %29 = arith.addf %27, %28 : vector<32x32xf32>
    %cst_22 = arith.constant 0.000000e+00 : f32
    %30 = vector.broadcast %cst_22 : f32 to vector<32x32xf32>
    %31 = arith.maximumf %29, %30 : vector<32x32xf32>
    %32 = arith.maximumf %24, %31 : vector<32x32xf32>
    %c0_23 = arith.constant 0 : index
    %c0_24 = arith.constant 0 : index
    %c0_25 = arith.constant 0 : index
    %33 = vector.load %arg4[%c0_23, %c0_24, %c0_25] : memref<1x32x32xf32, #tpu.memory_space<vmem>>, vector<1x32x32xf32>
    %34 = vector.shape_cast %33 : vector<1x32x32xf32> to vector<32x32xf32>
    %35 = vector.shape_cast %32 : vector<32x32xf32> to vector<1x32x32xf32>
    tpu.vector_store %arg4[%c0_23, %c0_24, %c0_25], %35 {strides = array<i32>} : memref<1x32x32xf32, #tpu.memory_space<vmem>>, vector<1x32x32xf32>,
    return
  }
  func.func @transform_0(%arg0: i32) -> (i32, i32, i32, i32) {
    %c0_i32 = arith.constant 0 : i32
    %c0_i32_0 = arith.constant 0 : i32
    %c0_i32_1 = arith.constant 0 : i32
    %c0_i32_2 = arith.constant 0 : i32
    return %arg0, %c0_i32, %c0_i32_0, %c0_i32_1 : i32, i32, i32, i32
  }
  func.func @transform_1(%arg0: i32) -> (i32, i32) {
    %c0_i32 = arith.constant 0 : i32
    %c0_i32_0 = arith.constant 0 : i32
    %c0_i32_1 = arith.constant 0 : i32
    return %c0_i32, %c0_i32_0 : i32, i32
  }
  func.func @transform_2(%arg0: i32) -> (i32, i32) {
    %c0_i32 = arith.constant 0 : i32
    %c0_i32_0 = arith.constant 0 : i32
    %c0_i32_1 = arith.constant 0 : i32
    return %c0_i32, %c0_i32_0 : i32, i32
  }
  func.func @transform_3(%arg0: i32) -> (i32, i32, i32) {
    %c0_i32 = arith.constant 0 : i32
    %c0_i32_0 = arith.constant 0 : i32
    %c0_i32_1 = arith.constant 0 : i32
    return %arg0, %c0_i32, %c0_i32_0 : i32, i32, i32
  }
}

</mosaic_0001>

<llo_original>
// kernel: conv3d_encoder.3
$region0: #{conv3d_encoder.3}
  #allocation0 [shape = 'u32[]', space=smem, size = 0x4, offset = 0x4, fixed_abs, tag = 'smem constant byte address 0x4 - core index']
  #allocation1 [shape = 'u32[144,128]{1,0:T(1,128)}', space=vmem, size = 0x12000, scoped, tag = 'internal scratch']
  %s0 = inlined_call_operand.vmem [shape: bf16[2,4,32,512], index: 0, kind: input, shape index: {}]
  %s1 = inlined_call_operand.vmem [shape: bf16[8,32], index: 1, kind: input, shape index: {}]
  %s2 = inlined_call_operand.vmem [shape: f32[8,1], index: 2, kind: input, shape index: {}]
  %s3 = inlined_call_operand.vmem [shape: bf16[2,8,512], index: 3, kind: output, shape index: {}]
  %s4 = sld [smem:[#allocation0]]
  $region45: #{conv3d_encoder.3} parent=0
    _
  %s6 = ssub.s32 1, %s4
  %s7 = scalar_select 0, %s6, %s4
  loop: start=0, step=1, limit=4
  $region2: #{conv3d_encoder.3} parent=0 // loop_pre_header
    _
  $region3: #{conv3d_encoder.3} parent=0 // loop_header
    %s9 = sphi 0, %s13
    %p10 = scmp.ge.s32.totalorder %s9, 4
    %s19 = sphi 0, %s21
    %s22 = sphi 0, %s19
    %s23 = sphi 0, %s22
    %s39 = sphi 0, %s23
    %s43 = sphi 0, %s43
    %s45 = sphi 0, %s43
    %s46 = sphi 0, %s45
    %s60 = sphi 0, %s46
    %s64 = sphi 0, %s64
    %s66 = sphi 0, %s64
    %s67 = sphi 0, %s66
    %s81 = sphi 0, %s67
    %s87 = sphi 0, %s89
    %s90 = sphi 0, %s87
    %s91 = sphi 0, %s90
    %s107 = sphi 0, %s91
  $region4: #{conv3d_encoder.3} parent=0 // loop_header_branch
    %12 = sbr.rel (%p10) target = $region8
  $region5: #{conv3d_encoder.3} parent=0 // loop_body
    %s14 = ssub.s32 %s9, 1
    %s15 = ssub.s32 %s9, 2
    %s16 = sadd.s32 %s9, 1
    %s17 = ssub.s32 %s9, %s16
    %p18 = scmp.eq.s32.totalorder %s17, 0
    %s20 = sadd.s32 %s19, 1
    %s21 = scalar_select %p18, %s19, %s20
    %p24 = pneg %p18
    %p25 = scmp.eq.s32.totalorder %s9, 1
    %p26 = por %p24, %p25
    %p27 = scmp.ne.s32.totalorder %s19, %s22
    %p28 = scmp.eq.s32.totalorder %s9, 0
    %p29 = por %p27, %p28
    %p30 = scmp.ne.s32.totalorder %s19, %s22
    %p31 = scmp.eq.s32.totalorder %s14, 1
    %p32 = por %p30, %p31
    %p33 = scmp.ne.s32.totalorder %s22, %s23
    %p34 = scmp.eq.s32.totalorder %s14, 0
    %p35 = por %p33, %p34
    %p36 = scmp.ne.s32.totalorder %s22, %s23
    %p37 = scmp.eq.s32.totalorder %s15, 1
    %p38 = por %p36, %p37
    %p40 = scmp.ne.s32.totalorder %s23, %s39
    %p41 = scmp.eq.s32.totalorder %s15, 0
    %p42 = por %p40, %p41
    %s44 = sadd.s32 %s43, 1
    %p47 = scmp.eq.s32.totalorder %s9, 1
    %p48 = scmp.ne.s32.totalorder %s43, %s45
    %p49 = scmp.eq.s32.totalorder %s9, 0
    %p50 = por %p48, %p49
    %p51 = scmp.ne.s32.totalorder %s43, %s45
    %p52 = scmp.eq.s32.totalorder %s14, 1
    %p53 = por %p51, %p52
    %p54 = scmp.ne.s32.totalorder %s45, %s46
    %p55 = scmp.eq.s32.totalorder %s14, 0
    %p56 = por %p54, %p55
    %p57 = scmp.ne.s32.totalorder %s45, %s46
    %p58 = scmp.eq.s32.totalorder %s15, 1
    %p59 = por %p57, %p58
    %p61 = scmp.ne.s32.totalorder %s46, %s60
    %p62 = scmp.eq.s32.totalorder %s15, 0
    %p63 = por %p61, %p62
    %s65 = sadd.s32 %s64, 1
    %p68 = scmp.eq.s32.totalorder %s9, 1
    %p69 = scmp.ne.s32.totalorder %s64, %s66
    %p70 = scmp.eq.s32.totalorder %s9, 0
    %p71 = por %p69, %p70
    %p72 = scmp.ne.s32.totalorder %s64, %s66
    %p73 = scmp.eq.s32.totalorder %s14, 1
    %p74 = por %p72, %p73
    %p75 = scmp.ne.s32.totalorder %s66, %s67
    %p76 = scmp.eq.s32.totalorder %s14, 0
    %p77 = por %p75, %p76
    %p78 = scmp.ne.s32.totalorder %s66, %s67
    %p79 = scmp.eq.s32.totalorder %s15, 1
    %p80 = por %p78, %p79
    %p82 = scmp.ne.s32.totalorder %s67, %s81
    %p83 = scmp.eq.s32.totalorder %s15, 0
    %p84 = por %p82, %p83
    %s85 = ssub.s32 %s9, %s16
    %p86 = scmp.eq.s32.totalorder %s85, 0
    %s88 = sadd.s32 %s87, 1
    %s89 = scalar_select %p86, %s87, %s88
    %p92 = pneg %p86
    %p93 = scmp.eq.s32.totalorder %s9, 1
    %p94 = por %p92, %p93
    %p95 = scmp.ne.s32.totalorder %s87, %s90
    %p96 = scmp.eq.s32.totalorder %s9, 0
    %p97 = por %p95, %p96
    %p98 = scmp.ne.s32.totalorder %s87, %s90
    %p99 = scmp.eq.s32.totalorder %s14, 1
    %p100 = por %p98, %p99
    %p101 = scmp.ne.s32.totalorder %s90, %s91
    %p102 = scmp.eq.s32.totalorder %s14, 0
    %p103 = por %p101, %p102
    %p104 = scmp.ne.s32.totalorder %s90, %s91
    %p105 = scmp.eq.s32.totalorder %s15, 1
    %p106 = por %p104, %p105
    %p108 = scmp.ne.s32.totalorder %s91, %s107
    %p109 = scmp.eq.s32.totalorder %s15, 0
    %p110 = por %p108, %p109
    %p111 = scmp.le.s32.totalorder 1, %s9
    %p112 = scmp.lt.s32.totalorder %s9, 3
    %p113 = pnand %p111, %p112
    %p114 = pneg %p113
    // Predicated region
    $region9: #{conv3d_encoder.3} parent=5 // pred_check
      _
    $region10: #{conv3d_encoder.3} parent=5 // pred_check_branch
      %116 = sbr.rel (%p113) target = $region12
    $region11: #{conv3d_encoder.3} parent=5 // pred_region
      %s117 = ssub.s32 %s9, 1
      // Predicated region
      $region13: #{conv3d_encoder.3} parent=11 // pred_check
        %p118 = pneg %p56
      $region14: #{conv3d_encoder.3} parent=11 // pred_check_branch
        %120 = sbr.rel (%p118) target = $region16
      $region15: #{conv3d_encoder.3} parent=11 // pred_region
        _
      $region16: #{conv3d_encoder.3} parent=11 // pred_fallthru
        _
      // Predicated region
      $region17: #{conv3d_encoder.3} parent=11 // pred_check
        %p121 = pneg %p77
      $region18: #{conv3d_encoder.3} parent=11 // pred_check_branch
        %123 = sbr.rel (%p121) target = $region20
      $region19: #{conv3d_encoder.3} parent=11 // pred_region
        _
      $region20: #{conv3d_encoder.3} parent=11 // pred_fallthru
        _
    $region12: #{conv3d_encoder.3} parent=5 // pred_fallthru
      _
    %p124 = scmp.lt.s32.totalorder %s9, 2
    // Predicated region
    $region21: #{conv3d_encoder.3} parent=5 // pred_check
      %p125 = pneg %p124
    $region22: #{conv3d_encoder.3} parent=5 // pred_check_branch
      %127 = sbr.rel (%p125) target = $region24
    $region23: #{conv3d_encoder.3} parent=5 // pred_region
      // Predicated region
      $region25: #{conv3d_encoder.3} parent=23 // pred_check
        %p128 = pneg %p29
      $region26: #{conv3d_encoder.3} parent=23 // pred_check_branch
        %130 = sbr.rel (%p128) target = $region28
      $region27: #{conv3d_encoder.3} parent=23 // pred_region
        %p131 = scmp.lt.s32.totalorder %s9, 1
        %s132 = scalar_select %p131, %s9, 1
        %s133 = smul.addr %s132, 64
        %s134 = smul.addr %s133, 4
        %s135 = scalar_lea.vmem %s0, %s134
      $region28: #{conv3d_encoder.3} parent=23 // pred_fallthru
        _
    $region24: #{conv3d_encoder.3} parent=5 // pred_fallthru
      _
    %p136 = scmp.le.s32.totalorder 1, %s9
    %p137 = scmp.lt.s32.totalorder %s9, 3
    %p138 = pnand %p136, %p137
    %p139 = pneg %p138
    // Predicated region
    $region29: #{conv3d_encoder.3} parent=5 // pred_check
      _
    $region30: #{conv3d_encoder.3} parent=5 // pred_check_branch
      %141 = sbr.rel (%p138) target = $region32
    $region31: #{conv3d_encoder.3} parent=5 // pred_region
      %s142 = ssub.s32 %s9, 1
      %p143 = scmp.lt.s32.totalorder %s14, 1
      %s144 = scalar_select %p143, %s14, 1
      %s145 = smul.addr %s144, 64
      %s146 = smul.addr %s145, 4
      %s147 = scalar_lea.vmem %s0, %s146
      %p148 = pneg %p35
      %p149 = pneg %p32
      %p150 = pneg %p56
      %p151 = pneg %p53
      %p152 = pneg %p77
      %p153 = pneg %p74
      %p154 = pneg %p103
      %p155 = pneg %p100
      %p156 = scmp.lt.s32.totalorder %s14, 1
      %s157 = scalar_select %p156, %s14, 1
      %s158 = smul.addr %s157, 4
      %s159 = smul.addr %s158, 4
      %s160 = scalar_lea.vmem %s3, %s159
      %p161 = scmp.lt.s32.totalorder %s14, 1
      %s162 = scalar_select %p161, %s14, 1
      %s163 = smul.addr %s162, 64
      %s164 = smul.addr %s163, 4
      %s165 = scalar_lea.vmem %s0, %s164
      %p166 = scmp.lt.s32.totalorder %s14, 1
      %s167 = scalar_select %p166, %s14, 1
      %s168 = smul.addr %s167, 4
      %s169 = smul.addr %s168, 4
      %s170 = scalar_lea.vmem %s3, %s169
      %v172 = vld [vmem:[%s1] sm:$0xf]
      %v173 = vld [vmem:[%s2] sm:$0xff]
      %v174 = vld [vmem:[%s165] sm:$0xff]
      %v175 = vld [vmem:[%s165 + $0x8] sm:$0xff]
      %v176 = vld [vmem:[%s165 + $0x10] sm:$0xff]
      %v177 = vld [vmem:[%s165 + $0x18] sm:$0xff]
      %v178 = vld [vmem:[%s165 + $0x20] sm:$0xff]
      %v179 = vld [vmem:[%s165 + $0x28] sm:$0xff]
      %v180 = vld [vmem:[%s165 + $0x30] sm:$0xff]
      %v181 = vld [vmem:[%s165 + $0x38] sm:$0xff]
      %183 = vset.pattern.permute.xlu0 0
      %184 = vperm.xlu0 %183, %v173
      %v185 = vpop.permute.xlu0 %184
      %v195 = vunpack.c.l.b16 %v174
      %v196 = vunpack.c.h.b16 %v174
      %v197 = vunpack.c.l.b16 %v175
      %v198 = vunpack.c.h.b16 %v175
      %v199 = vunpack.c.l.b16 %v176
      %v200 = vunpack.c.h.b16 %v176
      %v201 = vunpack.c.l.b16 %v177
      %v202 = vunpack.c.h.b16 %v177
      %v203 = vunpack.c.l.b16 %v178
      %v204 = vunpack.c.h.b16 %v178
      %v205 = vunpack.c.l.b16 %v179
      %v206 = vunpack.c.h.b16 %v179
      %v207 = vunpack.c.l.b16 %v180
      %v208 = vunpack.c.h.b16 %v180
      %v209 = vunpack.c.l.b16 %v181
      %v210 = vunpack.c.h.b16 %v181
      %v211 = vpack.c.b16 %v199, %v195
      %v212 = vpack.c.b16 %v200, %v196
      %v213 = vpack.c.b16 %v201, %v197
      %v214 = vpack.c.b16 %v202, %v198
      %v215 = vpack.c.b16 %v207, %v203
      %v216 = vpack.c.b16 %v208, %v204
      %v217 = vpack.c.b16 %v209, %v205
      %v218 = vpack.c.b16 %v210, %v206
      %vm227 = vcmask 261120
      %v229 = vsel %vm227, %v172, 0
      %231 = vmatprep.subr.bf16.mxu0 %v212
      %232 = vmatpush1.bf16.msra.mxu0 %v211
      %233 = vmatprep.subr.bf16.mxu0 %v216
      %234 = vmatpush1.bf16.msra.mxu0 %v215
      %235 = vmatprep.subr.bf16.mxu0 0
      %236 = vmatpush1.bf16.msra.mxu0 0
      %237 = vmatprep.subr.bf16.mxu0 0
      %238 = vmatpush1.bf16.msra.mxu0 0
      %239 = vmatprep.subr.bf16.mxu0 0
      %240 = vmatpush1.bf16.msra.mxu0 0
      %241 = vmatprep.subr.bf16.mxu0 0
      %242 = vmatpush1.bf16.msra.mxu0 0
      %243 = vmatprep.subr.bf16.mxu0 0
      %244 = vmatpush1.bf16.msra.mxu0 0
      %245 = vmatprep.subr.bf16.mxu0 0
      %246 = vmatpush1.bf16.msra.mxu0 0
      %247 = vmatprep.subr.bf16.mxu0 0
      %248 = vmatpush1.bf16.msra.mxu0 0
      %249 = vmatprep.subr.bf16.mxu0 0
      %250 = vmatpush1.bf16.msra.mxu0 0
      %251 = vmatprep.subr.bf16.mxu0 0
      %252 = vmatpush1.bf16.msra.mxu0 0
      %253 = vmatprep.subr.bf16.mxu0 0
      %254 = vmatpush1.bf16.msra.mxu0 0
      %255 = vmatprep.subr.bf16.mxu0 0
      %256 = vmatpush1.bf16.msra.mxu0 0
      %257 = vmatprep.subr.bf16.mxu0 0
      %258 = vmatpush1.bf16.msra.mxu0 0
      %259 = vmatprep.subr.bf16.mxu0 0
      %260 = vmatpush1.bf16.msra.mxu0 0
      %261 = vmatprep.subr.bf16.mxu0 0
      %262 = vmatpush1.bf16.msra.mxu0 0
      %263 = vmatprep.mubr.bf16.mxu0 0
      %264 = vmatmul.mubr.bf16.gmra.mrb[0].mxu0 %v229
      %v265 = vpop.f32.mrb[0].mxu0
      %v266 = vadd.f32 %v185, %v265
      %v267 = vpop.f32.mrb[0].mxu0
      %v268 = vadd.f32 %v185, %v267
      %v269 = vpop.f32.mrb[0].mxu0
      %v270 = vpop.f32.mrb[0].mxu0
      %271 = vdwg.mxu0
      %272 = vmatprep.subr.bf16.mxu0 %v214
      %273 = vmatpush1.bf16.msra.mxu0 %v213
      %274 = vmatprep.subr.bf16.mxu0 %v218
      %275 = vmatpush1.bf16.msra.mxu0 %v217
      %276 = vmatprep.subr.bf16.mxu0 0
      %277 = vmatpush1.bf16.msra.mxu0 0
      %278 = vmatprep.subr.bf16.mxu0 0
      %279 = vmatpush1.bf16.msra.mxu0 0
      %280 = vmatprep.subr.bf16.mxu0 0
      %281 = vmatpush1.bf16.msra.mxu0 0
      %282 = vmatprep.subr.bf16.mxu0 0
      %283 = vmatpush1.bf16.msra.mxu0 0
      %284 = vmatprep.subr.bf16.mxu0 0
      %285 = vmatpush1.bf16.msra.mxu0 0
      %286 = vmatprep.subr.bf16.mxu0 0
      %287 = vmatpush1.bf16.msra.mxu0 0
      %288 = vmatprep.subr.bf16.mxu0 0
      %289 = vmatpush1.bf16.msra.mxu0 0
      %290 = vmatprep.subr.bf16.mxu0 0
      %291 = vmatpush1.bf16.msra.mxu0 0
      %292 = vmatprep.subr.bf16.mxu0 0
      %293 = vmatpush1.bf16.msra.mxu0 0
      %294 = vmatprep.subr.bf16.mxu0 0
      %295 = vmatpush1.bf16.msra.mxu0 0
      %296 = vmatprep.subr.bf16.mxu0 0
      %297 = vmatpush1.bf16.msra.mxu0 0
      %298 = vmatprep.subr.bf16.mxu0 0
      %299 = vmatpush1.bf16.msra.mxu0 0
      %300 = vmatprep.subr.bf16.mxu0 0
      %301 = vmatpush1.bf16.msra.mxu0 0
      %302 = vmatprep.subr.bf16.mxu0 0
      %303 = vmatpush1.bf16.msra.mxu0 0
      %304 = vmatprep.mubr.bf16.mxu0 0
      %305 = vmatmul.mubr.bf16.gmra.mrb[0].mxu0 %v229
      %v306 = vpop.f32.mrb[0].mxu0
      %v307 = vadd.f32 %v185, %v306
      %v308 = vpop.f32.mrb[0].mxu0
      %v309 = vadd.f32 %v185, %v308
      %v310 = vpop.f32.mrb[0].mxu0
      %v311 = vpop.f32.mrb[0].mxu0
      %312 = vdwg.mxu0
      %v313 = vmax.f32 %v266, 0.0
      %v314 = vmax.f32 %v268, 0.0
      %v315 = vmax.f32 %v307, 0.0
      %v316 = vmax.f32 %v309, 0.0
      %s317 = scalar_lea.vmem %s165, 64
      %v318 = vld [vmem:[%s317] sm:$0xff]
      %v319 = vld [vmem:[%s317 + $0x8] sm:$0xff]
      %v320 = vld [vmem:[%s317 + $0x10] sm:$0xff]
      %v321 = vld [vmem:[%s317 + $0x18] sm:$0xff]
      %v322 = vld [vmem:[%s317 + $0x20] sm:$0xff]
      %v323 = vld [vmem:[%s317 + $0x28] sm:$0xff]
      %v324 = vld [vmem:[%s317 + $0x30] sm:$0xff]
      %v325 = vld [vmem:[%s317 + $0x38] sm:$0xff]
      %v334 = vunpack.c.l.b16 %v318
      %v335 = vunpack.c.h.b16 %v318
      %v336 = vunpack.c.l.b16 %v319
      %v337 = vunpack.c.h.b16 %v319
      %v338 = vunpack.c.l.b16 %v320
      %v339 = vunpack.c.h.b16 %v320
      %v340 = vunpack.c.l.b16 %v321
      %v341 = vunpack.c.h.b16 %v321
      %v342 = vunpack.c.l.b16 %v322
      %v343 = vunpack.c.h.b16 %v322
      %v344 = vunpack.c.l.b16 %v323
      %v345 = vunpack.c.h.b16 %v323
      %v346 = vunpack.c.l.b16 %v324
      %v347 = vunpack.c.h.b16 %v324
      %v348 = vunpack.c.l.b16 %v325
      %v349 = vunpack.c.h.b16 %v325
      %v350 = vpack.c.b16 %v338, %v334
      %v351 = vpack.c.b16 %v339, %v335
      %v352 = vpack.c.b16 %v340, %v336
      %v353 = vpack.c.b16 %v341, %v337
      %v354 = vpack.c.b16 %v346, %v342
      %v355 = vpack.c.b16 %v347, %v343
      %v356 = vpack.c.b16 %v348, %v344
      %v357 = vpack.c.b16 %v349, %v345
      %366 = vmatprep.subr.bf16.mxu0 %v351
      %367 = vmatpush1.bf16.msra.mxu0 %v350
      %368 = vmatprep.subr.bf16.mxu0 %v355
      %369 = vmatpush1.bf16.msra.mxu0 %v354
      %370 = vmatprep.subr.bf16.mxu0 0
      %371 = vmatpush1.bf16.msra.mxu0 0
      %372 = vmatprep.subr.bf16.mxu0 0
      %373 = vmatpush1.bf16.msra.mxu0 0
      %374 = vmatprep.subr.bf16.mxu0 0
      %375 = vmatpush1.bf16.msra.mxu0 0
      %376 = vmatprep.subr.bf16.mxu0 0
      %377 = vmatpush1.bf16.msra.mxu0 0
      %378 = vmatprep.subr.bf16.mxu0 0
      %379 = vmatpush1.bf16.msra.mxu0 0
      %380 = vmatprep.subr.bf16.mxu0 0
      %381 = vmatpush1.bf16.msra.mxu0 0
      %382 = vmatprep.subr.bf16.mxu0 0
      %383 = vmatpush1.bf16.msra.mxu0 0
      %384 = vmatprep.subr.bf16.mxu0 0
      %385 = vmatpush1.bf16.msra.mxu0 0
      %386 = vmatprep.subr.bf16.mxu0 0
      %387 = vmatpush1.bf16.msra.mxu0 0
      %388 = vmatprep.subr.bf16.mxu0 0
      %389 = vmatpush1.bf16.msra.mxu0 0
      %390 = vmatprep.subr.bf16.mxu0 0
      %391 = vmatpush1.bf16.msra.mxu0 0
      %392 = vmatprep.subr.bf16.mxu0 0
      %393 = vmatpush1.bf16.msra.mxu0 0
      %394 = vmatprep.subr.bf16.mxu0 0
      %395 = vmatpush1.bf16.msra.mxu0 0
      %396 = vmatprep.subr.bf16.mxu0 0
      %397 = vmatpush1.bf16.msra.mxu0 0
      %398 = vmatprep.mubr.bf16.mxu0 0
      %399 = vmatmul.mubr.bf16.gmra.mrb[0].mxu0 %v229
      %v400 = vpop.f32.mrb[0].mxu0
      %v401 = vadd.f32 %v185, %v400
      %v402 = vpop.f32.mrb[0].mxu0
      %v403 = vadd.f32 %v185, %v402
      %v404 = vpop.f32.mrb[0].mxu0
      %v405 = vpop.f32.mrb[0].mxu0
      %406 = vdwg.mxu0
      %407 = vmatprep.subr.bf16.mxu0 %v353
      %408 = vmatpush1.bf16.msra.mxu0 %v352
      %409 = vmatprep.subr.bf16.mxu0 %v357
      %410 = vmatpush1.bf16.msra.mxu0 %v356
      %411 = vmatprep.subr.bf16.mxu0 0
      %412 = vmatpush1.bf16.msra.mxu0 0
      %413 = vmatprep.subr.bf16.mxu0 0
      %414 = vmatpush1.bf16.msra.mxu0 0
      %415 = vmatprep.subr.bf16.mxu0 0
      %416 = vmatpush1.bf16.msra.mxu0 0
      %417 = vmatprep.subr.bf16.mxu0 0
      %418 = vmatpush1.bf16.msra.mxu0 0
      %419 = vmatprep.subr.bf16.mxu0 0
      %420 = vmatpush1.bf16.msra.mxu0 0
      %421 = vmatprep.subr.bf16.mxu0 0
      %422 = vmatpush1.bf16.msra.mxu0 0
      %423 = vmatprep.subr.bf16.mxu0 0
      %424 = vmatpush1.bf16.msra.mxu0 0
      %425 = vmatprep.subr.bf16.mxu0 0
      %426 = vmatpush1.bf16.msra.mxu0 0
      %427 = vmatprep.subr.bf16.mxu0 0
      %428 = vmatpush1.bf16.msra.mxu0 0
      %429 = vmatprep.subr.bf16.mxu0 0
      %430 = vmatpush1.bf16.msra.mxu0 0
      %431 = vmatprep.subr.bf16.mxu0 0
      %432 = vmatpush1.bf16.msra.mxu0 0
      %433 = vmatprep.subr.bf16.mxu0 0
      %434 = vmatpush1.bf16.msra.mxu0 0
      %435 = vmatprep.subr.bf16.mxu0 0
      %436 = vmatpush1.bf16.msra.mxu0 0
      %437 = vmatprep.subr.bf16.mxu0 0
      %438 = vmatpush1.bf16.msra.mxu0 0
      %439 = vmatprep.mubr.bf16.mxu0 0
      %440 = vmatmul.mubr.bf16.gmra.mrb[0].mxu0 %v229
      %v441 = vpop.f32.mrb[0].mxu0
      %v442 = vadd.f32 %v185, %v441
      %v443 = vpop.f32.mrb[0].mxu0
      %v444 = vadd.f32 %v185, %v443
      %v445 = vpop.f32.mrb[0].mxu0
      %v446 = vpop.f32.mrb[0].mxu0
      %447 = vdwg.mxu0
      %v448 = vmax.f32 %v401, 0.0
      %v449 = vmax.f32 %v403, 0.0
      %v450 = vmax.f32 %v442, 0.0
      %v451 = vmax.f32 %v444, 0.0
      %v452 = vmax.f32 %v313, %v448
      %v453 = vmax.f32 %v314, %v449
      %v454 = vmax.f32 %v315, %v450
      %v455 = vmax.f32 %v316, %v451
      %s456 = scalar_lea.vmem %s165, 128
      %v457 = vld [vmem:[%s456] sm:$0xff]
      %v458 = vld [vmem:[%s456 + $0x8] sm:$0xff]
      %v459 = vld [vmem:[%s456 + $0x10] sm:$0xff]
      %v460 = vld [vmem:[%s456 + $0x18] sm:$0xff]
      %v461 = vld [vmem:[%s456 + $0x20] sm:$0xff]
      %v462 = vld [vmem:[%s456 + $0x28] sm:$0xff]
      %v463 = vld [vmem:[%s456 + $0x30] sm:$0xff]
      %v464 = vld [vmem:[%s456 + $0x38] sm:$0xff]
      %v473 = vunpack.c.l.b16 %v457
      %v474 = vunpack.c.h.b16 %v457
      %v475 = vunpack.c.l.b16 %v458
      %v476 = vunpack.c.h.b16 %v458
      %v477 = vunpack.c.l.b16 %v459
      %v478 = vunpack.c.h.b16 %v459
      %v479 = vunpack.c.l.b16 %v460
      %v480 = vunpack.c.h.b16 %v460
      %v481 = vunpack.c.l.b16 %v461
      %v482 = vunpack.c.h.b16 %v461
      %v483 = vunpack.c.l.b16 %v462
      %v484 = vunpack.c.h.b16 %v462
      %v485 = vunpack.c.l.b16 %v463
      %v486 = vunpack.c.h.b16 %v463
      %v487 = vunpack.c.l.b16 %v464
      %v488 = vunpack.c.h.b16 %v464
      %v489 = vpack.c.b16 %v477, %v473
      %v490 = vpack.c.b16 %v478, %v474
      %v491 = vpack.c.b16 %v479, %v475
      %v492 = vpack.c.b16 %v480, %v476
      %v493 = vpack.c.b16 %v485, %v481
      %v494 = vpack.c.b16 %v486, %v482
      %v495 = vpack.c.b16 %v487, %v483
      %v496 = vpack.c.b16 %v488, %v484
      %505 = vmatprep.subr.bf16.mxu0 %v490
      %506 = vmatpush1.bf16.msra.mxu0 %v489
      %507 = vmatprep.subr.bf16.mxu0 %v494
      %508 = vmatpush1.bf16.msra.mxu0 %v493
      %509 = vmatprep.subr.bf16.mxu0 0
      %510 = vmatpush1.bf16.msra.mxu0 0
      %511 = vmatprep.subr.bf16.mxu0 0
      %512 = vmatpush1.bf16.msra.mxu0 0
      %513 = vmatprep.subr.bf16.mxu0 0
      %514 = vmatpush1.bf16.msra.mxu0 0
      %515 = vmatprep.subr.bf16.mxu0 0
      %516 = vmatpush1.bf16.msra.mxu0 0
      %517 = vmatprep.subr.bf16.mxu0 0
      %518 = vmatpush1.bf16.msra.mxu0 0
      %519 = vmatprep.subr.bf16.mxu0 0
      %520 = vmatpush1.bf16.msra.mxu0 0
      %521 = vmatprep.subr.bf16.mxu0 0
      %522 = vmatpush1.bf16.msra.mxu0 0
      %523 = vmatprep.subr.bf16.mxu0 0
      %524 = vmatpush1.bf16.msra.mxu0 0
      %525 = vmatprep.subr.bf16.mxu0 0
      %526 = vmatpush1.bf16.msra.mxu0 0
      %527 = vmatprep.subr.bf16.mxu0 0
      %528 = vmatpush1.bf16.msra.mxu0 0
      %529 = vmatprep.subr.bf16.mxu0 0
      %530 = vmatpush1.bf16.msra.mxu0 0
      %531 = vmatprep.subr.bf16.mxu0 0
      %532 = vmatpush1.bf16.msra.mxu0 0
      %533 = vmatprep.subr.bf16.mxu0 0
      %534 = vmatpush1.bf16.msra.mxu0 0
      %535 = vmatprep.subr.bf16.mxu0 0
      %536 = vmatpush1.bf16.msra.mxu0 0
      %537 = vmatprep.mubr.bf16.mxu0 0
      %538 = vmatmul.mubr.bf16.gmra.mrb[0].mxu0 %v229
      %v539 = vpop.f32.mrb[0].mxu0
      %v540 = vadd.f32 %v185, %v539
      %v541 = vpop.f32.mrb[0].mxu0
      %v542 = vadd.f32 %v185, %v541
      %v543 = vpop.f32.mrb[0].mxu0
      %v544 = vpop.f32.mrb[0].mxu0
      %545 = vdwg.mxu0
      %546 = vmatprep.subr.bf16.mxu0 %v492
      %547 = vmatpush1.bf16.msra.mxu0 %v491
      %548 = vmatprep.subr.bf16.mxu0 %v496
      %549 = vmatpush1.bf16.msra.mxu0 %v495
      %550 = vmatprep.subr.bf16.mxu0 0
      %551 = vmatpush1.bf16.msra.mxu0 0
      %552 = vmatprep.subr.bf16.mxu0 0
      %553 = vmatpush1.bf16.msra.mxu0 0
      %554 = vmatprep.subr.bf16.mxu0 0
      %555 = vmatpush1.bf16.msra.mxu0 0
      %556 = vmatprep.subr.bf16.mxu0 0
      %557 = vmatpush1.bf16.msra.mxu0 0
      %558 = vmatprep.subr.bf16.mxu0 0
      %559 = vmatpush1.bf16.msra.mxu0 0
      %560 = vmatprep.subr.bf16.mxu0 0
      %561 = vmatpush1.bf16.msra.mxu0 0
      %562 = vmatprep.subr.bf16.mxu0 0
      %563 = vmatpush1.bf16.msra.mxu0 0
      %564 = vmatprep.subr.bf16.mxu0 0
      %565 = vmatpush1.bf16.msra.mxu0 0
      %566 = vmatprep.subr.bf16.mxu0 0
      %567 = vmatpush1.bf16.msra.mxu0 0
      %568 = vmatprep.subr.bf16.mxu0 0
      %569 = vmatpush1.bf16.msra.mxu0 0
      %570 = vmatprep.subr.bf16.mxu0 0
      %571 = vmatpush1.bf16.msra.mxu0 0
      %572 = vmatprep.subr.bf16.mxu0 0
      %573 = vmatpush1.bf16.msra.mxu0 0
      %574 = vmatprep.subr.bf16.mxu0 0
      %575 = vmatpush1.bf16.msra.mxu0 0
      %576 = vmatprep.subr.bf16.mxu0 0
      %577 = vmatpush1.bf16.msra.mxu0 0
      %578 = vmatprep.mubr.bf16.mxu0 0
      %579 = vmatmul.mubr.bf16.gmra.mrb[0].mxu0 %v229
      %v580 = vpop.f32.mrb[0].mxu0
      %v581 = vadd.f32 %v185, %v580
      %v582 = vpop.f32.mrb[0].mxu0
      %v583 = vadd.f32 %v185, %v582
      %v584 = vpop.f32.mrb[0].mxu0
      %v585 = vpop.f32.mrb[0].mxu0
      %586 = vdwg.mxu0
      %v587 = vmax.f32 %v540, 0.0
      %v588 = vmax.f32 %v542, 0.0
      %v589 = vmax.f32 %v581, 0.0
      %v590 = vmax.f32 %v583, 0.0
      %v591 = vmax.f32 %v452, %v587
      %v592 = vmax.f32 %v453, %v588
      %v593 = vmax.f32 %v454, %v589
      %v594 = vmax.f32 %v455, %v590
      %s595 = scalar_lea.vmem %s165, 192
      %v596 = vld [vmem:[%s595] sm:$0xff]
      %v597 = vld [vmem:[%s595 + $0x8] sm:$0xff]
      %v598 = vld [vmem:[%s595 + $0x10] sm:$0xff]
      %v599 = vld [vmem:[%s595 + $0x18] sm:$0xff]
      %v600 = vld [vmem:[%s595 + $0x20] sm:$0xff]
      %v601 = vld [vmem:[%s595 + $0x28] sm:$0xff]
      %v602 = vld [vmem:[%s595 + $0x30] sm:$0xff]
      %v603 = vld [vmem:[%s595 + $0x38] sm:$0xff]
      %v612 = vunpack.c.l.b16 %v596
      %v613 = vunpack.c.h.b16 %v596
      %v614 = vunpack.c.l.b16 %v597
      %v615 = vunpack.c.h.b16 %v597
      %v616 = vunpack.c.l.b16 %v598
      %v617 = vunpack.c.h.b16 %v598
      %v618 = vunpack.c.l.b16 %v599
      %v619 = vunpack.c.h.b16 %v599
      %v620 = vunpack.c.l.b16 %v600
      %v621 = vunpack.c.h.b16 %v600
      %v622 = vunpack.c.l.b16 %v601
      %v623 = vunpack.c.h.b16 %v601
      %v624 = vunpack.c.l.b16 %v602
      %v625 = vunpack.c.h.b16 %v602
      %v626 = vunpack.c.l.b16 %v603
      %v627 = vunpack.c.h.b16 %v603
      %v628 = vpack.c.b16 %v616, %v612
      %v629 = vpack.c.b16 %v617, %v613
      %v630 = vpack.c.b16 %v618, %v614
      %v631 = vpack.c.b16 %v619, %v615
      %v632 = vpack.c.b16 %v624, %v620
      %v633 = vpack.c.b16 %v625, %v621
      %v634 = vpack.c.b16 %v626, %v622
      %v635 = vpack.c.b16 %v627, %v623
      %644 = vmatprep.subr.bf16.mxu0 %v629
      %645 = vmatpush1.bf16.msra.mxu0 %v628
      %646 = vmatprep.subr.bf16.mxu0 %v633
      %647 = vmatpush1.bf16.msra.mxu0 %v632
      %648 = vmatprep.subr.bf16.mxu0 0
      %649 = vmatpush1.bf16.msra.mxu0 0
      %650 = vmatprep.subr.bf16.mxu0 0
      %651 = vmatpush1.bf16.msra.mxu0 0
      %652 = vmatprep.subr.bf16.mxu0 0
      %653 = vmatpush1.bf16.msra.mxu0 0
      %654 = vmatprep.subr.bf16.mxu0 0
      %655 = vmatpush1.bf16.msra.mxu0 0
      %656 = vmatprep.subr.bf16.mxu0 0
      %657 = vmatpush1.bf16.msra.mxu0 0
      %658 = vmatprep.subr.bf16.mxu0 0
      %659 = vmatpush1.bf16.msra.mxu0 0
      %660 = vmatprep.subr.bf16.mxu0 0
      %661 = vmatpush1.bf16.msra.mxu0 0
      %662 = vmatprep.subr.bf16.mxu0 0
      %663 = vmatpush1.bf16.msra.mxu0 0
      %664 = vmatprep.subr.bf16.mxu0 0
      %665 = vmatpush1.bf16.msra.mxu0 0
      %666 = vmatprep.subr.bf16.mxu0 0
      %667 = vmatpush1.bf16.msra.mxu0 0
      %668 = vmatprep.subr.bf16.mxu0 0
      %669 = vmatpush1.bf16.msra.mxu0 0
      %670 = vmatprep.subr.bf16.mxu0 0
      %671 = vmatpush1.bf16.msra.mxu0 0
      %672 = vmatprep.subr.bf16.mxu0 0
      %673 = vmatpush1.bf16.msra.mxu0 0
      %674 = vmatprep.subr.bf16.mxu0 0
      %675 = vmatpush1.bf16.msra.mxu0 0
      %676 = vmatprep.mubr.bf16.mxu0 0
      %677 = vmatmul.mubr.bf16.gmra.mrb[0].mxu0 %v229
      %v678 = vpop.f32.mrb[0].mxu0
      %v679 = vadd.f32 %v185, %v678
      %v680 = vpop.f32.mrb[0].mxu0
      %v681 = vadd.f32 %v185, %v680
      %v682 = vpop.f32.mrb[0].mxu0
      %v683 = vpop.f32.mrb[0].mxu0
      %684 = vdwg.mxu0
      %685 = vmatprep.subr.bf16.mxu0 %v631
      %686 = vmatpush1.bf16.msra.mxu0 %v630
      %687 = vmatprep.subr.bf16.mxu0 %v635
      %688 = vmatpush1.bf16.msra.mxu0 %v634
      %689 = vmatprep.subr.bf16.mxu0 0
      %690 = vmatpush1.bf16.msra.mxu0 0
      %691 = vmatprep.subr.bf16.mxu0 0
      %692 = vmatpush1.bf16.msra.mxu0 0
      %693 = vmatprep.subr.bf16.mxu0 0
      %694 = vmatpush1.bf16.msra.mxu0 0
      %695 = vmatprep.subr.bf16.mxu0 0
      %696 = vmatpush1.bf16.msra.mxu0 0
      %697 = vmatprep.subr.bf16.mxu0 0
      %698 = vmatpush1.bf16.msra.mxu0 0
      %699 = vmatprep.subr.bf16.mxu0 0
      %700 = vmatpush1.bf16.msra.mxu0 0
      %701 = vmatprep.subr.bf16.mxu0 0
      %702 = vmatpush1.bf16.msra.mxu0 0
      %703 = vmatprep.subr.bf16.mxu0 0
      %704 = vmatpush1.bf16.msra.mxu0 0
      %705 = vmatprep.subr.bf16.mxu0 0
      %706 = vmatpush1.bf16.msra.mxu0 0
      %707 = vmatprep.subr.bf16.mxu0 0
      %708 = vmatpush1.bf16.msra.mxu0 0
      %709 = vmatprep.subr.bf16.mxu0 0
      %710 = vmatpush1.bf16.msra.mxu0 0
      %711 = vmatprep.subr.bf16.mxu0 0
      %712 = vmatpush1.bf16.msra.mxu0 0
      %713 = vmatprep.subr.bf16.mxu0 0
      %714 = vmatpush1.bf16.msra.mxu0 0
      %715 = vmatprep.subr.bf16.mxu0 0
      %716 = vmatpush1.bf16.msra.mxu0 0
      %717 = vmatprep.mubr.bf16.mxu0 0
      %718 = vmatmul.mubr.bf16.gmra.mrb[0].mxu0 %v229
      %v719 = vpop.f32.mrb[0].mxu0
      %v720 = vadd.f32 %v185, %v719
      %v721 = vpop.f32.mrb[0].mxu0
      %v722 = vadd.f32 %v185, %v721
      %v723 = vpop.f32.mrb[0].mxu0
      %v724 = vpop.f32.mrb[0].mxu0
      %725 = vdwg.mxu0
      %v726 = vmax.f32 %v679, 0.0
      %v727 = vmax.f32 %v681, 0.0
      %v728 = vmax.f32 %v720, 0.0
      %v729 = vmax.f32 %v722, 0.0
      %v730 = vmax.f32 %v591, %v726
      %v731 = vmax.f32 %v592, %v727
      %v732 = vmax.f32 %v593, %v728
      %v733 = vmax.f32 %v594, %v729
      %v734 = vpack.c.bf16 %v730, %v730
      %v735 = vpack.c.bf16 %v731, %v731
      %v736 = vpack.c.bf16 %v732, %v732
      %v737 = vpack.c.bf16 %v733, %v733
      %v742 = vunpack.c.l.b16 %v734
      %v743 = vunpack.c.l.b16 %v735
      %v744 = vunpack.c.l.b16 %v736
      %v745 = vunpack.c.l.b16 %v737
      %v746 = vpack.c.b16 %v743, %v742
      %v747 = vpack.c.b16 %v745, %v744
      %750 = vst [vmem:[%s170] sm:$0xff] %v746
      %751 = vst [vmem:[%s170 + $0x8] sm:$0xff] %v747
      %p752 = scmp.lt.s32.totalorder %s14, 1
      %s753 = scalar_select %p752, %s14, 1
      %s754 = smul.addr %s753, 4
      %s755 = smul.addr %s754, 4
      %s756 = scalar_lea.vmem %s3, %s755
      // Predicated region
      $region33: #{conv3d_encoder.3} parent=31 // pred_check
        %p757 = pneg %p100
      $region34: #{conv3d_encoder.3} parent=31 // pred_check_branch
        %759 = sbr.rel (%p757) target = $region36
      $region35: #{conv3d_encoder.3} parent=31 // pred_region
        _
      $region36: #{conv3d_encoder.3} parent=31 // pred_fallthru
        _
    $region32: #{conv3d_encoder.3} parent=5 // pred_fallthru
      _
    %p760 = scmp.le.s32.totalorder 2, %s9
    // Predicated region
    $region37: #{conv3d_encoder.3} parent=5 // pred_check
      %p761 = pneg %p760
    $region38: #{conv3d_encoder.3} parent=5 // pred_check_branch
      %763 = sbr.rel (%p761) target = $region40
    $region39: #{conv3d_encoder.3} parent=5 // pred_region
      %s764 = ssub.s32 %s9, 2
      // Predicated region
      $region41: #{conv3d_encoder.3} parent=39 // pred_check
        %p765 = pneg %p106
      $region42: #{conv3d_encoder.3} parent=39 // pred_check_branch
        %767 = sbr.rel (%p765) target = $region44
      $region43: #{conv3d_encoder.3} parent=39 // pred_region
        %p768 = scmp.lt.s32.totalorder %s15, 1
        %s769 = scalar_select %p768, %s15, 1
        %s770 = smul.addr %s769, 4
        %s771 = smul.addr %s770, 4
        %s772 = scalar_lea.vmem %s3, %s771
      $region44: #{conv3d_encoder.3} parent=39 // pred_fallthru
        _
    $region40: #{conv3d_encoder.3} parent=5 // pred_fallthru
      _
  $region6: #{conv3d_encoder.3} parent=0 // loop_footer
    %s13 = sadd.s32 1, %s9
  $region7: #{conv3d_encoder.3} parent=0 // loop_footer_branch
    %8 = sbr.rel target = $region3
  $region8: #{conv3d_encoder.3} parent=0 // loop_exit
    _

// kernel: conv3d_encoder.4
$region0: #{conv3d_encoder.4}
  #allocation0 [shape = 'u32[]', space=smem, size = 0x4, offset = 0x4, fixed_abs, tag = 'smem constant byte address 0x4 - core index']
  #allocation1 [shape = 'u32[144,128]{1,0:T(1,128)}', space=vmem, size = 0x12000, scoped, tag = 'internal scratch']
  %s0 = inlined_call_operand.vmem [shape: bf16[2,4,216,200], index: 0, kind: input, shape index: {}]
  %s1 = inlined_call_operand.vmem [shape: bf16[16,216], index: 1, kind: input, shape index: {}]
  %s2 = inlined_call_operand.vmem [shape: f32[16,1], index: 2, kind: input, shape index: {}]
  %s3 = inlined_call_operand.vmem [shape: bf16[2,16,200], index: 3, kind: output, shape index: {}]
  %s4 = sld [smem:[#allocation0]]
  $region45: #{conv3d_encoder.4} parent=0
    _
  %s6 = ssub.s32 1, %s4
  %s7 = scalar_select 0, %s6, %s4
  loop: start=0, step=1, limit=4
  $region2: #{conv3d_encoder.4} parent=0 // loop_pre_header
    _
  $region3: #{conv3d_encoder.4} parent=0 // loop_header
    %s9 = sphi 0, %s13
    %p10 = scmp.ge.s32.totalorder %s9, 4
    %s19 = sphi 0, %s21
    %s22 = sphi 0, %s19
    %s23 = sphi 0, %s22
    %s39 = sphi 0, %s23
    %s43 = sphi 0, %s43
    %s45 = sphi 0, %s43
    %s46 = sphi 0, %s45
    %s60 = sphi 0, %s46
    %s64 = sphi 0, %s64
    %s66 = sphi 0, %s64
    %s67 = sphi 0, %s66
    %s81 = sphi 0, %s67
    %s87 = sphi 0, %s89
    %s90 = sphi 0, %s87
    %s91 = sphi 0, %s90
    %s107 = sphi 0, %s91
  $region4: #{conv3d_encoder.4} parent=0 // loop_header_branch
    %12 = sbr.rel (%p10) target = $region8
  $region5: #{conv3d_encoder.4} parent=0 // loop_body
    %s14 = ssub.s32 %s9, 1
    %s15 = ssub.s32 %s9, 2
    %s16 = sadd.s32 %s9, 1
    %s17 = ssub.s32 %s9, %s16
    %p18 = scmp.eq.s32.totalorder %s17, 0
    %s20 = sadd.s32 %s19, 1
    %s21 = scalar_select %p18, %s19, %s20
    %p24 = pneg %p18
    %p25 = scmp.eq.s32.totalorder %s9, 1
    %p26 = por %p24, %p25
    %p27 = scmp.ne.s32.totalorder %s19, %s22
    %p28 = scmp.eq.s32.totalorder %s9, 0
    %p29 = por %p27, %p28
    %p30 = scmp.ne.s32.totalorder %s19, %s22
    %p31 = scmp.eq.s32.totalorder %s14, 1
    %p32 = por %p30, %p31
    %p33 = scmp.ne.s32.totalorder %s22, %s23
    %p34 = scmp.eq.s32.totalorder %s14, 0
    %p35 = por %p33, %p34
    %p36 = scmp.ne.s32.totalorder %s22, %s23
    %p37 = scmp.eq.s32.totalorder %s15, 1
    %p38 = por %p36, %p37
    %p40 = scmp.ne.s32.totalorder %s23, %s39
    %p41 = scmp.eq.s32.totalorder %s15, 0
    %p42 = por %p40, %p41
    %s44 = sadd.s32 %s43, 1
    %p47 = scmp.eq.s32.totalorder %s9, 1
    %p48 = scmp.ne.s32.totalorder %s43, %s45
    %p49 = scmp.eq.s32.totalorder %s9, 0
    %p50 = por %p48, %p49
    %p51 = scmp.ne.s32.totalorder %s43, %s45
    %p52 = scmp.eq.s32.totalorder %s14, 1
    %p53 = por %p51, %p52
    %p54 = scmp.ne.s32.totalorder %s45, %s46
    %p55 = scmp.eq.s32.totalorder %s14, 0
    %p56 = por %p54, %p55
    %p57 = scmp.ne.s32.totalorder %s45, %s46
    %p58 = scmp.eq.s32.totalorder %s15, 1
    %p59 = por %p57, %p58
    %p61 = scmp.ne.s32.totalorder %s46, %s60
    %p62 = scmp.eq.s32.totalorder %s15, 0
    %p63 = por %p61, %p62
    %s65 = sadd.s32 %s64, 1
    %p68 = scmp.eq.s32.totalorder %s9, 1
    %p69 = scmp.ne.s32.totalorder %s64, %s66
    %p70 = scmp.eq.s32.totalorder %s9, 0
    %p71 = por %p69, %p70
    %p72 = scmp.ne.s32.totalorder %s64, %s66
    %p73 = scmp.eq.s32.totalorder %s14, 1
    %p74 = por %p72, %p73
    %p75 = scmp.ne.s32.totalorder %s66, %s67
    %p76 = scmp.eq.s32.totalorder %s14, 0
    %p77 = por %p75, %p76
    %p78 = scmp.ne.s32.totalorder %s66, %s67
    %p79 = scmp.eq.s32.totalorder %s15, 1
    %p80 = por %p78, %p79
    %p82 = scmp.ne.s32.totalorder %s67, %s81
    %p83 = scmp.eq.s32.totalorder %s15, 0
    %p84 = por %p82, %p83
    %s85 = ssub.s32 %s9, %s16
    %p86 = scmp.eq.s32.totalorder %s85, 0
    %s88 = sadd.s32 %s87, 1
    %s89 = scalar_select %p86, %s87, %s88
    %p92 = pneg %p86
    %p93 = scmp.eq.s32.totalorder %s9, 1
    %p94 = por %p92, %p93
    %p95 = scmp.ne.s32.totalorder %s87, %s90
    %p96 = scmp.eq.s32.totalorder %s9, 0
    %p97 = por %p95, %p96
    %p98 = scmp.ne.s32.totalorder %s87, %s90
    %p99 = scmp.eq.s32.totalorder %s14, 1
    %p100 = por %p98, %p99
    %p101 = scmp.ne.s32.totalorder %s90, %s91
    %p102 = scmp.eq.s32.totalorder %s14, 0
    %p103 = por %p101, %p102
    %p104 = scmp.ne.s32.totalorder %s90, %s91
    %p105 = scmp.eq.s32.totalorder %s15, 1
    %p106 = por %p104, %p105
    %p108 = scmp.ne.s32.totalorder %s91, %s107
    %p109 = scmp.eq.s32.totalorder %s15, 0
    %p110 = por %p108, %p109
    %p111 = scmp.le.s32.totalorder 1, %s9
    %p112 = scmp.lt.s32.totalorder %s9, 3
    %p113 = pnand %p111, %p112
    %p114 = pneg %p113
    // Predicated region
    $region9: #{conv3d_encoder.4} parent=5 // pred_check
      _
    $region10: #{conv3d_encoder.4} parent=5 // pred_check_branch
      %116 = sbr.rel (%p113) target = $region12
    $region11: #{conv3d_encoder.4} parent=5 // pred_region
      %s117 = ssub.s32 %s9, 1
      // Predicated region
      $region13: #{conv3d_encoder.4} parent=11 // pred_check
        %p118 = pneg %p56
      $region14: #{conv3d_encoder.4} parent=11 // pred_check_branch
        %120 = sbr.rel (%p118) target = $region16
      $region15: #{conv3d_encoder.4} parent=11 // pred_region
        _
      $region16: #{conv3d_encoder.4} parent=11 // pred_fallthru
        _
      // Predicated region
      $region17: #{conv3d_encoder.4} parent=11 // pred_check
        %p121 = pneg %p77
      $region18: #{conv3d_encoder.4} parent=11 // pred_check_branch
        %123 = sbr.rel (%p121) target = $region20
      $region19: #{conv3d_encoder.4} parent=11 // pred_region
        _
      $region20: #{conv3d_encoder.4} parent=11 // pred_fallthru
        _
    $region12: #{conv3d_encoder.4} parent=5 // pred_fallthru
      _
    %p124 = scmp.lt.s32.totalorder %s9, 2
    // Predicated region
    $region21: #{conv3d_encoder.4} parent=5 // pred_check
      %p125 = pneg %p124
    $region22: #{conv3d_encoder.4} parent=5 // pred_check_branch
      %127 = sbr.rel (%p125) target = $region24
    $region23: #{conv3d_encoder.4} parent=5 // pred_region
      // Predicated region
      $region25: #{conv3d_encoder.4} parent=23 // pred_check
        %p128 = pneg %p29
      $region26: #{conv3d_encoder.4} parent=23 // pred_check_branch
        %130 = sbr.rel (%p128) target = $region28
      $region27: #{conv3d_encoder.4} parent=23 // pred_region
        %p131 = scmp.lt.s32.totalorder %s9, 1
        %s132 = scalar_select %p131, %s9, 1
        %s133 = smul.addr %s132, 216
        %s134 = smul.addr %s133, 4
        %s135 = scalar_lea.vmem %s0, %s134
      $region28: #{conv3d_encoder.4} parent=23 // pred_fallthru
        _
    $region24: #{conv3d_encoder.4} parent=5 // pred_fallthru
      _
    %p136 = scmp.le.s32.totalorder 1, %s9
    %p137 = scmp.lt.s32.totalorder %s9, 3
    %p138 = pnand %p136, %p137
    %p139 = pneg %p138
    // Predicated region
    $region29: #{conv3d_encoder.4} parent=5 // pred_check
      _
    $region30: #{conv3d_encoder.4} parent=5 // pred_check_branch
      %141 = sbr.rel (%p138) target = $region32
    $region31: #{conv3d_encoder.4} parent=5 // pred_region
      %s142 = ssub.s32 %s9, 1
      %p143 = scmp.lt.s32.totalorder %s14, 1
      %s144 = scalar_select %p143, %s14, 1
      %s145 = smul.addr %s144, 216
      %s146 = smul.addr %s145, 4
      %s147 = scalar_lea.vmem %s0, %s146
      %p148 = pneg %p35
      %p149 = pneg %p32
      %p150 = pneg %p56
      %p151 = pneg %p53
      %p152 = pneg %p77
      %p153 = pneg %p74
      %p154 = pneg %p103
      %p155 = pneg %p100
      %p156 = scmp.lt.s32.totalorder %s14, 1
      %s157 = scalar_select %p156, %s14, 1
      %s158 = smul.addr %s157, 4
      %s159 = smul.addr %s158, 4
      %s160 = scalar_lea.vmem %s3, %s159
      %p161 = scmp.lt.s32.totalorder %s14, 1
      %s162 = scalar_select %p161, %s14, 1
      %s163 = smul.addr %s162, 216
      %s164 = smul.addr %s163, 4
      %s165 = scalar_lea.vmem %s0, %s164
      %p166 = scmp.lt.s32.totalorder %s14, 1
      %s167 = scalar_select %p166, %s14, 1
      %s168 = smul.addr %s167, 4
      %s169 = smul.addr %s168, 4
      %s170 = scalar_lea.vmem %s3, %s169
      %v172 = vld [vmem:[%s1] sm:$0xff]
      %v173 = vld [vmem:[%s1 + $0x8] sm:$0xff]
      %v174 = vld [vmem:[%s2] sm:$0xff]
      %v175 = vld [vmem:[%s2 + $0x8] sm:$0xff]
      %v176 = vld [vmem:[%s165] sm:$0xff]
      %v177 = vld [vmem:[%s165 + $0x8] sm:$0xff]
      %v178 = vld [vmem:[%s165 + $0x10] sm:$0xff]
      %v179 = vld [vmem:[%s165 + $0x18] sm:$0xff]
      %v180 = vld [vmem:[%s165 + $0x20] sm:$0xff]
      %v181 = vld [vmem:[%s165 + $0x28] sm:$0xff]
      %v182 = vld [vmem:[%s165 + $0x30] sm:$0xff]
      %v183 = vld [vmem:[%s165 + $0x38] sm:$0xff]
      %v184 = vld [vmem:[%s165 + $0x40] sm:$0xff]
      %v185 = vld [vmem:[%s165 + $0x48] sm:$0xff]
      %v186 = vld [vmem:[%s165 + $0x50] sm:$0xff]
      %v187 = vld [vmem:[%s165 + $0x58] sm:$0xff]
      %v188 = vld [vmem:[%s165 + $0x60] sm:$0xff]
      %v189 = vld [vmem:[%s165 + $0x68] sm:$0xff]
      %v190 = vld [vmem:[%s165 + $0x70] sm:$0xff]
      %v191 = vld [vmem:[%s165 + $0x78] sm:$0xff]
      %v192 = vld [vmem:[%s165 + $0x80] sm:$0xff]
      %v193 = vld [vmem:[%s165 + $0x88] sm:$0xff]
      %v194 = vld [vmem:[%s165 + $0x90] sm:$0xff]
      %v195 = vld [vmem:[%s165 + $0x98] sm:$0xff]
      %v196 = vld [vmem:[%s165 + $0xa0] sm:$0xff]
      %v197 = vld [vmem:[%s165 + $0xa8] sm:$0xff]
      %v198 = vld [vmem:[%s165 + $0xb0] sm:$0xff]
      %v199 = vld [vmem:[%s165 + $0xb8] sm:$0xff]
      %v200 = vld [vmem:[%s165 + $0xc0] sm:$0xff]
      %v201 = vld [vmem:[%s165 + $0xc8] sm:$0xff]
      %v202 = vld [vmem:[%s165 + $0xd0] sm:$0xff]
      %204 = vset.pattern.permute.xlu0 0
      %205 = vperm.xlu0 %204, %v174
      %v206 = vpop.permute.xlu0 %205
      %209 = vset.pattern.permute.xlu0 0
      %210 = vperm.xlu0 %209, %v175
      %v211 = vpop.permute.xlu0 %210
      %v215 = vunpack.c.l.b16 %v172
      %v216 = vunpack.c.h.b16 %v172
      %v217 = vunpack.c.l.b16 %v173
      %v218 = vunpack.c.h.b16 %v173
      %v219 = vpack.c.b16 %v217, %v215
      %v220 = vpack.c.b16 %v218, %v216
      %v249 = vunpack.c.l.b16 %v176
      %v250 = vunpack.c.h.b16 %v176
      %v251 = vunpack.c.l.b16 %v177
      %v252 = vunpack.c.h.b16 %v177
      %v253 = vunpack.c.l.b16 %v178
      %v254 = vunpack.c.h.b16 %v178
      %v255 = vunpack.c.l.b16 %v179
      %v256 = vunpack.c.h.b16 %v179
      %v257 = vunpack.c.l.b16 %v180
      %v258 = vunpack.c.h.b16 %v180
      %v259 = vunpack.c.l.b16 %v181
      %v260 = vunpack.c.h.b16 %v181
      %v261 = vunpack.c.l.b16 %v182
      %v262 = vunpack.c.h.b16 %v182
      %v263 = vunpack.c.l.b16 %v183
      %v264 = vunpack.c.h.b16 %v183
      %v265 = vunpack.c.l.b16 %v184
      %v266 = vunpack.c.h.b16 %v184
      %v267 = vunpack.c.l.b16 %v185
      %v268 = vunpack.c.h.b16 %v185
      %v269 = vunpack.c.l.b16 %v186
      %v270 = vunpack.c.h.b16 %v186
      %v271 = vunpack.c.l.b16 %v187
      %v272 = vunpack.c.h.b16 %v187
      %v273 = vunpack.c.l.b16 %v188
      %v274 = vunpack.c.h.b16 %v188
      %v275 = vunpack.c.l.b16 %v189
      %v276 = vunpack.c.h.b16 %v189
      %v277 = vunpack.c.l.b16 %v190
      %v278 = vunpack.c.h.b16 %v190
      %v279 = vunpack.c.l.b16 %v191
      %v280 = vunpack.c.h.b16 %v191
      %v281 = vunpack.c.l.b16 %v192
      %v282 = vunpack.c.h.b16 %v192
      %v283 = vunpack.c.l.b16 %v193
      %v284 = vunpack.c.h.b16 %v193
      %v285 = vunpack.c.l.b16 %v194
      %v286 = vunpack.c.h.b16 %v194
      %v287 = vunpack.c.l.b16 %v195
      %v288 = vunpack.c.h.b16 %v195
      %v289 = vunpack.c.l.b16 %v196
      %v290 = vunpack.c.h.b16 %v196
      %v291 = vunpack.c.l.b16 %v197
      %v292 = vunpack.c.h.b16 %v197
      %v293 = vunpack.c.l.b16 %v198
      %v294 = vunpack.c.h.b16 %v198
      %v295 = vunpack.c.l.b16 %v199
      %v296 = vunpack.c.h.b16 %v199
      %v297 = vunpack.c.l.b16 %v200
      %v298 = vunpack.c.h.b16 %v200
      %v299 = vunpack.c.l.b16 %v201
      %v300 = vunpack.c.h.b16 %v201
      %v301 = vunpack.c.l.b16 %v202
      %v302 = vunpack.c.h.b16 %v202
      %v303 = vpack.c.b16 %v251, %v249
      %v304 = vpack.c.b16 %v252, %v250
      %v305 = vpack.c.b16 %v255, %v253
      %v306 = vpack.c.b16 %v256, %v254
      %v307 = vpack.c.b16 %v259, %v257
      %v308 = vpack.c.b16 %v260, %v258
      %v309 = vpack.c.b16 %v263, %v261
      %v310 = vpack.c.b16 %v264, %v262
      %v311 = vpack.c.b16 %v267, %v265
      %v312 = vpack.c.b16 %v268, %v266
      %v313 = vpack.c.b16 %v271, %v269
      %v314 = vpack.c.b16 %v272, %v270
      %v315 = vpack.c.b16 %v275, %v273
      %v316 = vpack.c.b16 %v276, %v274
      %v317 = vpack.c.b16 %v279, %v277
      %v318 = vpack.c.b16 %v280, %v278
      %v319 = vpack.c.b16 %v283, %v281
      %v320 = vpack.c.b16 %v284, %v282
      %v321 = vpack.c.b16 %v287, %v285
      %v322 = vpack.c.b16 %v288, %v286
      %v323 = vpack.c.b16 %v291, %v289
      %v324 = vpack.c.b16 %v292, %v290
      %v325 = vpack.c.b16 %v295, %v293
      %v326 = vpack.c.b16 %v296, %v294
      %v327 = vpack.c.b16 %v299, %v297
      %v328 = vpack.c.b16 %v300, %v298
      %v329 = vpack.c.b16 %v301, %v301
      %v330 = vpack.c.b16 %v302, %v302
      %vm357 = vcmask 719872
      %v359 = vsel %vm357, %v220, 0
      %vm361 = vcmask 1043456
      %v363 = vsel %vm361, %v329, 0
      %v366 = vsel %vm361, %v330, 0
      %368 = vmatprep.subr.bf16.mxu0 %v304
      %369 = vmatpush1.bf16.msra.mxu0 %v303
      %370 = vmatprep.subr.bf16.mxu0 %v306
      %371 = vmatpush1.bf16.msra.mxu0 %v305
      %372 = vmatprep.subr.bf16.mxu0 %v308
      %373 = vmatpush1.bf16.msra.mxu0 %v307
      %374 = vmatprep.subr.bf16.mxu0 %v310
      %375 = vmatpush1.bf16.msra.mxu0 %v309
      %376 = vmatprep.subr.bf16.mxu0 %v312
      %377 = vmatpush1.bf16.msra.mxu0 %v311
      %378 = vmatprep.subr.bf16.mxu0 %v314
      %379 = vmatpush1.bf16.msra.mxu0 %v313
      %380 = vmatprep.subr.bf16.mxu0 %v316
      %381 = vmatpush1.bf16.msra.mxu0 %v315
      %382 = vmatprep.subr.bf16.mxu0 %v318
      %383 = vmatpush1.bf16.msra.mxu0 %v317
      %384 = vmatprep.subr.bf16.mxu0 %v320
      %385 = vmatpush1.bf16.msra.mxu0 %v319
      %386 = vmatprep.subr.bf16.mxu0 %v322
      %387 = vmatpush1.bf16.msra.mxu0 %v321
      %388 = vmatprep.subr.bf16.mxu0 %v324
      %389 = vmatpush1.bf16.msra.mxu0 %v323
      %390 = vmatprep.subr.bf16.mxu0 %v326
      %391 = vmatpush1.bf16.msra.mxu0 %v325
      %392 = vmatprep.subr.bf16.mxu0 %v328
      %393 = vmatpush1.bf16.msra.mxu0 %v327
      %394 = vmatprep.subr.bf16.mxu0 %v366
      %395 = vmatpush1.bf16.msra.mxu0 %v363
      %396 = vmatprep.subr.bf16.mxu0 0
      %397 = vmatpush1.bf16.msra.mxu0 0
      %398 = vmatprep.subr.bf16.mxu0 0
      %399 = vmatpush1.bf16.msra.mxu0 0
      %400 = vmatprep.mubr.bf16.mxu0 %v359
      %401 = vmatmul.mubr.bf16.gmra.mrb[0].mxu0 %v219
      %v402 = vpop.f32.mrb[0].mxu0
      %v403 = vadd.f32 %v206, %v402
      %v404 = vpop.f32.mrb[0].mxu0
      %v405 = vadd.f32 %v206, %v404
      %v406 = vpop.f32.mrb[0].mxu0
      %v407 = vadd.f32 %v211, %v406
      %v408 = vpop.f32.mrb[0].mxu0
      %v409 = vadd.f32 %v211, %v408
      %410 = vdwg.mxu0
      %v411 = vmax.f32 %v403, 0.0
      %v412 = vmax.f32 %v405, 0.0
      %v413 = vmax.f32 %v407, 0.0
      %v414 = vmax.f32 %v409, 0.0
      %s415 = scalar_lea.vmem %s165, 216
      %v416 = vld [vmem:[%s415] sm:$0xff]
      %v417 = vld [vmem:[%s415 + $0x8] sm:$0xff]
      %v418 = vld [vmem:[%s415 + $0x10] sm:$0xff]
      %v419 = vld [vmem:[%s415 + $0x18] sm:$0xff]
      %v420 = vld [vmem:[%s415 + $0x20] sm:$0xff]
      %v421 = vld [vmem:[%s415 + $0x28] sm:$0xff]
      %v422 = vld [vmem:[%s415 + $0x30] sm:$0xff]
      %v423 = vld [vmem:[%s415 + $0x38] sm:$0xff]
      %v424 = vld [vmem:[%s415 + $0x40] sm:$0xff]
      %v425 = vld [vmem:[%s415 + $0x48] sm:$0xff]
      %v426 = vld [vmem:[%s415 + $0x50] sm:$0xff]
      %v427 = vld [vmem:[%s415 + $0x58] sm:$0xff]
      %v428 = vld [vmem:[%s415 + $0x60] sm:$0xff]
      %v429 = vld [vmem:[%s415 + $0x68] sm:$0xff]
      %v430 = vld [vmem:[%s415 + $0x70] sm:$0xff]
      %v431 = vld [vmem:[%s415 + $0x78] sm:$0xff]
      %v432 = vld [vmem:[%s415 + $0x80] sm:$0xff]
      %v433 = vld [vmem:[%s415 + $0x88] sm:$0xff]
      %v434 = vld [vmem:[%s415 + $0x90] sm:$0xff]
      %v435 = vld [vmem:[%s415 + $0x98] sm:$0xff]
      %v436 = vld [vmem:[%s415 + $0xa0] sm:$0xff]
      %v437 = vld [vmem:[%s415 + $0xa8] sm:$0xff]
      %v438 = vld [vmem:[%s415 + $0xb0] sm:$0xff]
      %v439 = vld [vmem:[%s415 + $0xb8] sm:$0xff]
      %v440 = vld [vmem:[%s415 + $0xc0] sm:$0xff]
      %v441 = vld [vmem:[%s415 + $0xc8] sm:$0xff]
      %v442 = vld [vmem:[%s415 + $0xd0] sm:$0xff]
      %v470 = vunpack.c.l.b16 %v416
      %v471 = vunpack.c.h.b16 %v416
      %v472 = vunpack.c.l.b16 %v417
      %v473 = vunpack.c.h.b16 %v417
      %v474 = vunpack.c.l.b16 %v418
      %v475 = vunpack.c.h.b16 %v418
      %v476 = vunpack.c.l.b16 %v419
      %v477 = vunpack.c.h.b16 %v419
      %v478 = vunpack.c.l.b16 %v420
      %v479 = vunpack.c.h.b16 %v420
      %v480 = vunpack.c.l.b16 %v421
      %v481 = vunpack.c.h.b16 %v421
      %v482 = vunpack.c.l.b16 %v422
      %v483 = vunpack.c.h.b16 %v422
      %v484 = vunpack.c.l.b16 %v423
      %v485 = vunpack.c.h.b16 %v423
      %v486 = vunpack.c.l.b16 %v424
      %v487 = vunpack.c.h.b16 %v424
      %v488 = vunpack.c.l.b16 %v425
      %v489 = vunpack.c.h.b16 %v425
      %v490 = vunpack.c.l.b16 %v426
      %v491 = vunpack.c.h.b16 %v426
      %v492 = vunpack.c.l.b16 %v427
      %v493 = vunpack.c.h.b16 %v427
      %v494 = vunpack.c.l.b16 %v428
      %v495 = vunpack.c.h.b16 %v428
      %v496 = vunpack.c.l.b16 %v429
      %v497 = vunpack.c.h.b16 %v429
      %v498 = vunpack.c.l.b16 %v430
      %v499 = vunpack.c.h.b16 %v430
      %v500 = vunpack.c.l.b16 %v431
      %v501 = vunpack.c.h.b16 %v431
      %v502 = vunpack.c.l.b16 %v432
      %v503 = vunpack.c.h.b16 %v432
      %v504 = vunpack.c.l.b16 %v433
      %v505 = vunpack.c.h.b16 %v433
      %v506 = vunpack.c.l.b16 %v434
      %v507 = vunpack.c.h.b16 %v434
      %v508 = vunpack.c.l.b16 %v435
      %v509 = vunpack.c.h.b16 %v435
      %v510 = vunpack.c.l.b16 %v436
      %v511 = vunpack.c.h.b16 %v436
      %v512 = vunpack.c.l.b16 %v437
      %v513 = vunpack.c.h.b16 %v437
      %v514 = vunpack.c.l.b16 %v438
      %v515 = vunpack.c.h.b16 %v438
      %v516 = vunpack.c.l.b16 %v439
      %v517 = vunpack.c.h.b16 %v439
      %v518 = vunpack.c.l.b16 %v440
      %v519 = vunpack.c.h.b16 %v440
      %v520 = vunpack.c.l.b16 %v441
      %v521 = vunpack.c.h.b16 %v441
      %v522 = vunpack.c.l.b16 %v442
      %v523 = vunpack.c.h.b16 %v442
      %v524 = vpack.c.b16 %v472, %v470
      %v525 = vpack.c.b16 %v473, %v471
      %v526 = vpack.c.b16 %v476, %v474
      %v527 = vpack.c.b16 %v477, %v475
      %v528 = vpack.c.b16 %v480, %v478
      %v529 = vpack.c.b16 %v481, %v479
      %v530 = vpack.c.b16 %v484, %v482
      %v531 = vpack.c.b16 %v485, %v483
      %v532 = vpack.c.b16 %v488, %v486
      %v533 = vpack.c.b16 %v489, %v487
      %v534 = vpack.c.b16 %v492, %v490
      %v535 = vpack.c.b16 %v493, %v491
      %v536 = vpack.c.b16 %v496, %v494
      %v537 = vpack.c.b16 %v497, %v495
      %v538 = vpack.c.b16 %v500, %v498
      %v539 = vpack.c.b16 %v501, %v499
      %v540 = vpack.c.b16 %v504, %v502
      %v541 = vpack.c.b16 %v505, %v503
      %v542 = vpack.c.b16 %v508, %v506
      %v543 = vpack.c.b16 %v509, %v507
      %v544 = vpack.c.b16 %v512, %v510
      %v545 = vpack.c.b16 %v513, %v511
      %v546 = vpack.c.b16 %v516, %v514
      %v547 = vpack.c.b16 %v517, %v515
      %v548 = vpack.c.b16 %v520, %v518
      %v549 = vpack.c.b16 %v521, %v519
      %v550 = vpack.c.b16 %v522, %v522
      %v551 = vpack.c.b16 %v523, %v523
      %v579 = vsel %vm361, %v550, 0
      %v582 = vsel %vm361, %v551, 0
      %584 = vmatprep.subr.bf16.mxu0 %v525
      %585 = vmatpush1.bf16.msra.mxu0 %v524
      %586 = vmatprep.subr.bf16.mxu0 %v527
      %587 = vmatpush1.bf16.msra.mxu0 %v526
      %588 = vmatprep.subr.bf16.mxu0 %v529
      %589 = vmatpush1.bf16.msra.mxu0 %v528
      %590 = vmatprep.subr.bf16.mxu0 %v531
      %591 = vmatpush1.bf16.msra.mxu0 %v530
      %592 = vmatprep.subr.bf16.mxu0 %v533
      %593 = vmatpush1.bf16.msra.mxu0 %v532
      %594 = vmatprep.subr.bf16.mxu0 %v535
      %595 = vmatpush1.bf16.msra.mxu0 %v534
      %596 = vmatprep.subr.bf16.mxu0 %v537
      %597 = vmatpush1.bf16.msra.mxu0 %v536
      %598 = vmatprep.subr.bf16.mxu0 %v539
      %599 = vmatpush1.bf16.msra.mxu0 %v538
      %600 = vmatprep.subr.bf16.mxu0 %v541
      %601 = vmatpush1.bf16.msra.mxu0 %v540
      %602 = vmatprep.subr.bf16.mxu0 %v543
      %603 = vmatpush1.bf16.msra.mxu0 %v542
      %604 = vmatprep.subr.bf16.mxu0 %v545
      %605 = vmatpush1.bf16.msra.mxu0 %v544
      %606 = vmatprep.subr.bf16.mxu0 %v547
      %607 = vmatpush1.bf16.msra.mxu0 %v546
      %608 = vmatprep.subr.bf16.mxu0 %v549
      %609 = vmatpush1.bf16.msra.mxu0 %v548
      %610 = vmatprep.subr.bf16.mxu0 %v582
      %611 = vmatpush1.bf16.msra.mxu0 %v579
      %612 = vmatprep.subr.bf16.mxu0 0
      %613 = vmatpush1.bf16.msra.mxu0 0
      %614 = vmatprep.subr.bf16.mxu0 0
      %615 = vmatpush1.bf16.msra.mxu0 0
      %616 = vmatprep.mubr.bf16.mxu0 %v359
      %617 = vmatmul.mubr.bf16.gmra.mrb[0].mxu0 %v219
      %v618 = vpop.f32.mrb[0].mxu0
      %v619 = vadd.f32 %v206, %v618
      %v620 = vpop.f32.mrb[0].mxu0
      %v621 = vadd.f32 %v206, %v620
      %v622 = vpop.f32.mrb[0].mxu0
      %v623 = vadd.f32 %v211, %v622
      %v624 = vpop.f32.mrb[0].mxu0
      %v625 = vadd.f32 %v211, %v624
      %626 = vdwg.mxu0
      %v627 = vmax.f32 %v619, 0.0
      %v628 = vmax.f32 %v621, 0.0
      %v629 = vmax.f32 %v623, 0.0
      %v630 = vmax.f32 %v625, 0.0
      %v631 = vmax.f32 %v411, %v627
      %v632 = vmax.f32 %v412, %v628
      %v633 = vmax.f32 %v413, %v629
      %v634 = vmax.f32 %v414, %v630
      %s635 = scalar_lea.vmem %s165, 432
      %v636 = vld [vmem:[%s635] sm:$0xff]
      %v637 = vld [vmem:[%s635 + $0x8] sm:$0xff]
      %v638 = vld [vmem:[%s635 + $0x10] sm:$0xff]
      %v639 = vld [vmem:[%s635 + $0x18] sm:$0xff]
      %v640 = vld [vmem:[%s635 + $0x20] sm:$0xff]
      %v641 = vld [vmem:[%s635 + $0x28] sm:$0xff]
      %v642 = vld [vmem:[%s635 + $0x30] sm:$0xff]
      %v643 = vld [vmem:[%s635 + $0x38] sm:$0xff]
      %v644 = vld [vmem:[%s635 + $0x40] sm:$0xff]
      %v645 = vld [vmem:[%s635 + $0x48] sm:$0xff]
      %v646 = vld [vmem:[%s635 + $0x50] sm:$0xff]
      %v647 = vld [vmem:[%s635 + $0x58] sm:$0xff]
      %v648 = vld [vmem:[%s635 + $0x60] sm:$0xff]
      %v649 = vld [vmem:[%s635 + $0x68] sm:$0xff]
      %v650 = vld [vmem:[%s635 + $0x70] sm:$0xff]
      %v651 = vld [vmem:[%s635 + $0x78] sm:$0xff]
      %v652 = vld [vmem:[%s635 + $0x80] sm:$0xff]
      %v653 = vld [vmem:[%s635 + $0x88] sm:$0xff]
      %v654 = vld [vmem:[%s635 + $0x90] sm:$0xff]
      %v655 = vld [vmem:[%s635 + $0x98] sm:$0xff]
      %v656 = vld [vmem:[%s635 + $0xa0] sm:$0xff]
      %v657 = vld [vmem:[%s635 + $0xa8] sm:$0xff]
      %v658 = vld [vmem:[%s635 + $0xb0] sm:$0xff]
      %v659 = vld [vmem:[%s635 + $0xb8] sm:$0xff]
      %v660 = vld [vmem:[%s635 + $0xc0] sm:$0xff]
      %v661 = vld [vmem:[%s635 + $0xc8] sm:$0xff]
      %v662 = vld [vmem:[%s635 + $0xd0] sm:$0xff]
      %v690 = vunpack.c.l.b16 %v636
      %v691 = vunpack.c.h.b16 %v636
      %v692 = vunpack.c.l.b16 %v637
      %v693 = vunpack.c.h.b16 %v637
      %v694 = vunpack.c.l.b16 %v638
      %v695 = vunpack.c.h.b16 %v638
      %v696 = vunpack.c.l.b16 %v639
      %v697 = vunpack.c.h.b16 %v639
      %v698 = vunpack.c.l.b16 %v640
      %v699 = vunpack.c.h.b16 %v640
      %v700 = vunpack.c.l.b16 %v641
      %v701 = vunpack.c.h.b16 %v641
      %v702 = vunpack.c.l.b16 %v642
      %v703 = vunpack.c.h.b16 %v642
      %v704 = vunpack.c.l.b16 %v643
      %v705 = vunpack.c.h.b16 %v643
      %v706 = vunpack.c.l.b16 %v644
      %v707 = vunpack.c.h.b16 %v644
      %v708 = vunpack.c.l.b16 %v645
      %v709 = vunpack.c.h.b16 %v645
      %v710 = vunpack.c.l.b16 %v646
      %v711 = vunpack.c.h.b16 %v646
      %v712 = vunpack.c.l.b16 %v647
      %v713 = vunpack.c.h.b16 %v647
      %v714 = vunpack.c.l.b16 %v648
      %v715 = vunpack.c.h.b16 %v648
      %v716 = vunpack.c.l.b16 %v649
      %v717 = vunpack.c.h.b16 %v649
      %v718 = vunpack.c.l.b16 %v650
      %v719 = vunpack.c.h.b16 %v650
      %v720 = vunpack.c.l.b16 %v651
      %v721 = vunpack.c.h.b16 %v651
      %v722 = vunpack.c.l.b16 %v652
      %v723 = vunpack.c.h.b16 %v652
      %v724 = vunpack.c.l.b16 %v653
      %v725 = vunpack.c.h.b16 %v653
      %v726 = vunpack.c.l.b16 %v654
      %v727 = vunpack.c.h.b16 %v654
      %v728 = vunpack.c.l.b16 %v655
      %v729 = vunpack.c.h.b16 %v655
      %v730 = vunpack.c.l.b16 %v656
      %v731 = vunpack.c.h.b16 %v656
      %v732 = vunpack.c.l.b16 %v657
      %v733 = vunpack.c.h.b16 %v657
      %v734 = vunpack.c.l.b16 %v658
      %v735 = vunpack.c.h.b16 %v658
      %v736 = vunpack.c.l.b16 %v659
      %v737 = vunpack.c.h.b16 %v659
      %v738 = vunpack.c.l.b16 %v660
      %v739 = vunpack.c.h.b16 %v660
      %v740 = vunpack.c.l.b16 %v661
      %v741 = vunpack.c.h.b16 %v661
      %v742 = vunpack.c.l.b16 %v662
      %v743 = vunpack.c.h.b16 %v662
      %v744 = vpack.c.b16 %v692, %v690
      %v745 = vpack.c.b16 %v693, %v691
      %v746 = vpack.c.b16 %v696, %v694
      %v747 = vpack.c.b16 %v697, %v695
      %v748 = vpack.c.b16 %v700, %v698
      %v749 = vpack.c.b16 %v701, %v699
      %v750 = vpack.c.b16 %v704, %v702
      %v751 = vpack.c.b16 %v705, %v703
      %v752 = vpack.c.b16 %v708, %v706
      %v753 = vpack.c.b16 %v709, %v707
      %v754 = vpack.c.b16 %v712, %v710
      %v755 = vpack.c.b16 %v713, %v711
      %v756 = vpack.c.b16 %v716, %v714
      %v757 = vpack.c.b16 %v717, %v715
      %v758 = vpack.c.b16 %v720, %v718
      %v759 = vpack.c.b16 %v721, %v719
      %v760 = vpack.c.b16 %v724, %v722
      %v761 = vpack.c.b16 %v725, %v723
      %v762 = vpack.c.b16 %v728, %v726
      %v763 = vpack.c.b16 %v729, %v727
      %v764 = vpack.c.b16 %v732, %v730
      %v765 = vpack.c.b16 %v733, %v731
      %v766 = vpack.c.b16 %v736, %v734
      %v767 = vpack.c.b16 %v737, %v735
      %v768 = vpack.c.b16 %v740, %v738
      %v769 = vpack.c.b16 %v741, %v739
      %v770 = vpack.c.b16 %v742, %v742
      %v771 = vpack.c.b16 %v743, %v743
      %v799 = vsel %vm361, %v770, 0
      %v802 = vsel %vm361, %v771, 0
      %804 = vmatprep.subr.bf16.mxu0 %v745
      %805 = vmatpush1.bf16.msra.mxu0 %v744
      %806 = vmatprep.subr.bf16.mxu0 %v747
      %807 = vmatpush1.bf16.msra.mxu0 %v746
      %808 = vmatprep.subr.bf16.mxu0 %v749
      %809 = vmatpush1.bf16.msra.mxu0 %v748
      %810 = vmatprep.subr.bf16.mxu0 %v751
      %811 = vmatpush1.bf16.msra.mxu0 %v750
      %812 = vmatprep.subr.bf16.mxu0 %v753
      %813 = vmatpush1.bf16.msra.mxu0 %v752
      %814 = vmatprep.subr.bf16.mxu0 %v755
      %815 = vmatpush1.bf16.msra.mxu0 %v754
      %816 = vmatprep.subr.bf16.mxu0 %v757
      %817 = vmatpush1.bf16.msra.mxu0 %v756
      %818 = vmatprep.subr.bf16.mxu0 %v759
      %819 = vmatpush1.bf16.msra.mxu0 %v758
      %820 = vmatprep.subr.bf16.mxu0 %v761
      %821 = vmatpush1.bf16.msra.mxu0 %v760
      %822 = vmatprep.subr.bf16.mxu0 %v763
      %823 = vmatpush1.bf16.msra.mxu0 %v762
      %824 = vmatprep.subr.bf16.mxu0 %v765
      %825 = vmatpush1.bf16.msra.mxu0 %v764
      %826 = vmatprep.subr.bf16.mxu0 %v767
      %827 = vmatpush1.bf16.msra.mxu0 %v766
      %828 = vmatprep.subr.bf16.mxu0 %v769
      %829 = vmatpush1.bf16.msra.mxu0 %v768
      %830 = vmatprep.subr.bf16.mxu0 %v802
      %831 = vmatpush1.bf16.msra.mxu0 %v799
      %832 = vmatprep.subr.bf16.mxu0 0
      %833 = vmatpush1.bf16.msra.mxu0 0
      %834 = vmatprep.subr.bf16.mxu0 0
      %835 = vmatpush1.bf16.msra.mxu0 0
      %836 = vmatprep.mubr.bf16.mxu0 %v359
      %837 = vmatmul.mubr.bf16.gmra.mrb[0].mxu0 %v219
      %v838 = vpop.f32.mrb[0].mxu0
      %v839 = vadd.f32 %v206, %v838
      %v840 = vpop.f32.mrb[0].mxu0
      %v841 = vadd.f32 %v206, %v840
      %v842 = vpop.f32.mrb[0].mxu0
      %v843 = vadd.f32 %v211, %v842
      %v844 = vpop.f32.mrb[0].mxu0
      %v845 = vadd.f32 %v211, %v844
      %846 = vdwg.mxu0
      %v847 = vmax.f32 %v839, 0.0
      %v848 = vmax.f32 %v841, 0.0
      %v849 = vmax.f32 %v843, 0.0
      %v850 = vmax.f32 %v845, 0.0
      %v851 = vmax.f32 %v631, %v847
      %v852 = vmax.f32 %v632, %v848
      %v853 = vmax.f32 %v633, %v849
      %v854 = vmax.f32 %v634, %v850
      %s855 = scalar_lea.vmem %s165, 648
      %v856 = vld [vmem:[%s855] sm:$0xff]
      %v857 = vld [vmem:[%s855 + $0x8] sm:$0xff]
      %v858 = vld [vmem:[%s855 + $0x10] sm:$0xff]
      %v859 = vld [vmem:[%s855 + $0x18] sm:$0xff]
      %v860 = vld [vmem:[%s855 + $0x20] sm:$0xff]
      %v861 = vld [vmem:[%s855 + $0x28] sm:$0xff]
      %v862 = vld [vmem:[%s855 + $0x30] sm:$0xff]
      %v863 = vld [vmem:[%s855 + $0x38] sm:$0xff]
      %v864 = vld [vmem:[%s855 + $0x40] sm:$0xff]
      %v865 = vld [vmem:[%s855 + $0x48] sm:$0xff]
      %v866 = vld [vmem:[%s855 + $0x50] sm:$0xff]
      %v867 = vld [vmem:[%s855 + $0x58] sm:$0xff]
      %v868 = vld [vmem:[%s855 + $0x60] sm:$0xff]
      %v869 = vld [vmem:[%s855 + $0x68] sm:$0xff]
      %v870 = vld [vmem:[%s855 + $0x70] sm:$0xff]
      %v871 = vld [vmem:[%s855 + $0x78] sm:$0xff]
      %v872 = vld [vmem:[%s855 + $0x80] sm:$0xff]
      %v873 = vld [vmem:[%s855 + $0x88] sm:$0xff]
      %v874 = vld [vmem:[%s855 + $0x90] sm:$0xff]
      %v875 = vld [vmem:[%s855 + $0x98] sm:$0xff]
      %v876 = vld [vmem:[%s855 + $0xa0] sm:$0xff]
      %v877 = vld [vmem:[%s855 + $0xa8] sm:$0xff]
      %v878 = vld [vmem:[%s855 + $0xb0] sm:$0xff]
      %v879 = vld [vmem:[%s855 + $0xb8] sm:$0xff]
      %v880 = vld [vmem:[%s855 + $0xc0] sm:$0xff]
      %v881 = vld [vmem:[%s855 + $0xc8] sm:$0xff]
      %v882 = vld [vmem:[%s855 + $0xd0] sm:$0xff]
      %v910 = vunpack.c.l.b16 %v856
      %v911 = vunpack.c.h.b16 %v856
      %v912 = vunpack.c.l.b16 %v857
      %v913 = vunpack.c.h.b16 %v857
      %v914 = vunpack.c.l.b16 %v858
      %v915 = vunpack.c.h.b16 %v858
      %v916 = vunpack.c.l.b16 %v859
      %v917 = vunpack.c.h.b16 %v859
      %v918 = vunpack.c.l.b16 %v860
      %v919 = vunpack.c.h.b16 %v860
      %v920 = vunpack.c.l.b16 %v861
      %v921 = vunpack.c.h.b16 %v861
      %v922 = vunpack.c.l.b16 %v862
      %v923 = vunpack.c.h.b16 %v862
      %v924 = vunpack.c.l.b16 %v863
      %v925 = vunpack.c.h.b16 %v863
      %v926 = vunpack.c.l.b16 %v864
      %v927 = vunpack.c.h.b16 %v864
      %v928 = vunpack.c.l.b16 %v865
      %v929 = vunpack.c.h.b16 %v865
      %v930 = vunpack.c.l.b16 %v866
      %v931 = vunpack.c.h.b16 %v866
      %v932 = vunpack.c.l.b16 %v867
      %v933 = vunpack.c.h.b16 %v867
      %v934 = vunpack.c.l.b16 %v868
      %v935 = vunpack.c.h.b16 %v868
      %v936 = vunpack.c.l.b16 %v869
      %v937 = vunpack.c.h.b16 %v869
      %v938 = vunpack.c.l.b16 %v870
      %v939 = vunpack.c.h.b16 %v870
      %v940 = vunpack.c.l.b16 %v871
      %v941 = vunpack.c.h.b16 %v871
      %v942 = vunpack.c.l.b16 %v872
      %v943 = vunpack.c.h.b16 %v872
      %v944 = vunpack.c.l.b16 %v873
      %v945 = vunpack.c.h.b16 %v873
      %v946 = vunpack.c.l.b16 %v874
      %v947 = vunpack.c.h.b16 %v874
      %v948 = vunpack.c.l.b16 %v875
      %v949 = vunpack.c.h.b16 %v875
      %v950 = vunpack.c.l.b16 %v876
      %v951 = vunpack.c.h.b16 %v876
      %v952 = vunpack.c.l.b16 %v877
      %v953 = vunpack.c.h.b16 %v877
      %v954 = vunpack.c.l.b16 %v878
      %v955 = vunpack.c.h.b16 %v878
      %v956 = vunpack.c.l.b16 %v879
      %v957 = vunpack.c.h.b16 %v879
      %v958 = vunpack.c.l.b16 %v880
      %v959 = vunpack.c.h.b16 %v880
      %v960 = vunpack.c.l.b16 %v881
      %v961 = vunpack.c.h.b16 %v881
      %v962 = vunpack.c.l.b16 %v882
      %v963 = vunpack.c.h.b16 %v882
      %v964 = vpack.c.b16 %v912, %v910
      %v965 = vpack.c.b16 %v913, %v911
      %v966 = vpack.c.b16 %v916, %v914
      %v967 = vpack.c.b16 %v917, %v915
      %v968 = vpack.c.b16 %v920, %v918
      %v969 = vpack.c.b16 %v921, %v919
      %v970 = vpack.c.b16 %v924, %v922
      %v971 = vpack.c.b16 %v925, %v923
      %v972 = vpack.c.b16 %v928, %v926
      %v973 = vpack.c.b16 %v929, %v927
      %v974 = vpack.c.b16 %v932, %v930
      %v975 = vpack.c.b16 %v933, %v931
      %v976 = vpack.c.b16 %v936, %v934
      %v977 = vpack.c.b16 %v937, %v935
      %v978 = vpack.c.b16 %v940, %v938
      %v979 = vpack.c.b16 %v941, %v939
      %v980 = vpack.c.b16 %v944, %v942
      %v981 = vpack.c.b16 %v945, %v943
      %v982 = vpack.c.b16 %v948, %v946
      %v983 = vpack.c.b16 %v949, %v947
      %v984 = vpack.c.b16 %v952, %v950
      %v985 = vpack.c.b16 %v953, %v951
      %v986 = vpack.c.b16 %v956, %v954
      %v987 = vpack.c.b16 %v957, %v955
      %v988 = vpack.c.b16 %v960, %v958
      %v989 = vpack.c.b16 %v961, %v959
      %v990 = vpack.c.b16 %v962, %v962
      %v991 = vpack.c.b16 %v963, %v963
      %v1019 = vsel %vm361, %v990, 0
      %v1022 = vsel %vm361, %v991, 0
      %1024 = vmatprep.subr.bf16.mxu0 %v965
      %1025 = vmatpush1.bf16.msra.mxu0 %v964
      %1026 = vmatprep.subr.bf16.mxu0 %v967
      %1027 = vmatpush1.bf16.msra.mxu0 %v966
      %1028 = vmatprep.subr.bf16.mxu0 %v969
      %1029 = vmatpush1.bf16.msra.mxu0 %v968
      %1030 = vmatprep.subr.bf16.mxu0 %v971
      %1031 = vmatpush1.bf16.msra.mxu0 %v970
      %1032 = vmatprep.subr.bf16.mxu0 %v973
      %1033 = vmatpush1.bf16.msra.mxu0 %v972
      %1034 = vmatprep.subr.bf16.mxu0 %v975
      %1035 = vmatpush1.bf16.msra.mxu0 %v974
      %1036 = vmatprep.subr.bf16.mxu0 %v977
      %1037 = vmatpush1.bf16.msra.mxu0 %v976
      %1038 = vmatprep.subr.bf16.mxu0 %v979
      %1039 = vmatpush1.bf16.msra.mxu0 %v978
      %1040 = vmatprep.subr.bf16.mxu0 %v981
      %1041 = vmatpush1.bf16.msra.mxu0 %v980
      %1042 = vmatprep.subr.bf16.mxu0 %v983
      %1043 = vmatpush1.bf16.msra.mxu0 %v982
      %1044 = vmatprep.subr.bf16.mxu0 %v985
      %1045 = vmatpush1.bf16.msra.mxu0 %v984
      %1046 = vmatprep.subr.bf16.mxu0 %v987
      %1047 = vmatpush1.bf16.msra.mxu0 %v986
      %1048 = vmatprep.subr.bf16.mxu0 %v989
      %1049 = vmatpush1.bf16.msra.mxu0 %v988
      %1050 = vmatprep.subr.bf16.mxu0 %v1022
      %1051 = vmatpush1.bf16.msra.mxu0 %v1019
      %1052 = vmatprep.subr.bf16.mxu0 0
      %1053 = vmatpush1.bf16.msra.mxu0 0
      %1054 = vmatprep.subr.bf16.mxu0 0
      %1055 = vmatpush1.bf16.msra.mxu0 0
      %1056 = vmatprep.mubr.bf16.mxu0 %v359
      %1057 = vmatmul.mubr.bf16.gmra.mrb[0].mxu0 %v219
      %v1058 = vpop.f32.mrb[0].mxu0
      %v1059 = vadd.f32 %v206, %v1058
      %v1060 = vpop.f32.mrb[0].mxu0
      %v1061 = vadd.f32 %v206, %v1060
      %v1062 = vpop.f32.mrb[0].mxu0
      %v1063 = vadd.f32 %v211, %v1062
      %v1064 = vpop.f32.mrb[0].mxu0
      %v1065 = vadd.f32 %v211, %v1064
      %1066 = vdwg.mxu0
      %v1067 = vmax.f32 %v1059, 0.0
      %v1068 = vmax.f32 %v1061, 0.0
      %v1069 = vmax.f32 %v1063, 0.0
      %v1070 = vmax.f32 %v1065, 0.0
      %v1071 = vmax.f32 %v851, %v1067
      %v1072 = vmax.f32 %v852, %v1068
      %v1073 = vmax.f32 %v853, %v1069
      %v1074 = vmax.f32 %v854, %v1070
      %v1075 = vpack.c.bf16 %v1073, %v1071
      %v1076 = vpack.c.bf16 %v1074, %v1072
      %v1079 = vunpack.c.l.b16 %v1075
      %v1080 = vunpack.c.l.b16 %v1076
      %v1081 = vunpack.c.h.b16 %v1075
      %v1082 = vunpack.c.h.b16 %v1076
      %v1083 = vpack.c.b16 %v1080, %v1079
      %v1084 = vpack.c.b16 %v1082, %v1081
      %vm1087 = vcmask 588804
      %vm1088 = vmor %vm1087, %vm361
      %1089 = vst.msk [vmem:[%s170] sm:$0xff] %vm1088, %v1083
      %1090 = vst.msk [vmem:[%s170 + $0x8] sm:$0xff] %vm1088, %v1084
      %p1091 = scmp.lt.s32.totalorder %s14, 1
      %s1092 = scalar_select %p1091, %s14, 1
      %s1093 = smul.addr %s1092, 4
      %s1094 = smul.addr %s1093, 4
      %s1095 = scalar_lea.vmem %s3, %s1094
      // Predicated region
      $region33: #{conv3d_encoder.4} parent=31 // pred_check
        %p1096 = pneg %p100
      $region34: #{conv3d_encoder.4} parent=31 // pred_check_branch
        %1098 = sbr.rel (%p1096) target = $region36
      $region35: #{conv3d_encoder.4} parent=31 // pred_region
        _
      $region36: #{conv3d_encoder.4} parent=31 // pred_fallthru
        _
    $region32: #{conv3d_encoder.4} parent=5 // pred_fallthru
      _
    %p1099 = scmp.le.s32.totalorder 2, %s9
    // Predicated region
    $region37: #{conv3d_encoder.4} parent=5 // pred_check
      %p1100 = pneg %p1099
    $region38: #{conv3d_encoder.4} parent=5 // pred_check_branch
      %1102 = sbr.rel (%p1100) target = $region40
    $region39: #{conv3d_encoder.4} parent=5 // pred_region
      %s1103 = ssub.s32 %s9, 2
      // Predicated region
      $region41: #{conv3d_encoder.4} parent=39 // pred_check
        %p1104 = pneg %p106
      $region42: #{conv3d_encoder.4} parent=39 // pred_check_branch
        %1106 = sbr.rel (%p1104) target = $region44
      $region43: #{conv3d_encoder.4} parent=39 // pred_region
        %p1107 = scmp.lt.s32.totalorder %s15, 1
        %s1108 = scalar_select %p1107, %s15, 1
        %s1109 = smul.addr %s1108, 4
        %s1110 = smul.addr %s1109, 4
        %s1111 = scalar_lea.vmem %s3, %s1110
      $region44: #{conv3d_encoder.4} parent=39 // pred_fallthru
        _
    $region40: #{conv3d_encoder.4} parent=5 // pred_fallthru
      _
  $region6: #{conv3d_encoder.4} parent=0 // loop_footer
    %s13 = sadd.s32 1, %s9
  $region7: #{conv3d_encoder.4} parent=0 // loop_footer_branch
    %8 = sbr.rel target = $region3
  $region8: #{conv3d_encoder.4} parent=0 // loop_exit
    _

// kernel: conv3d_encoder.5
$region0: #{conv3d_encoder.5}
  #allocation0 [shape = 'u32[]', space=smem, size = 0x4, offset = 0x4, fixed_abs, tag = 'smem constant byte address 0x4 - core index']
  #allocation1 [shape = 'u32[144,128]{1,0:T(1,128)}', space=vmem, size = 0x12000, scoped, tag = 'internal scratch']
  %s0 = inlined_call_operand.vmem [shape: bf16[2,4,432,32], index: 0, kind: input, shape index: {}]
  %s1 = inlined_call_operand.vmem [shape: bf16[32,432], index: 1, kind: input, shape index: {}]
  %s2 = inlined_call_operand.vmem [shape: f32[32,1], index: 2, kind: input, shape index: {}]
  %s3 = inlined_call_operand.vmem [shape: f32[2,32,32], index: 3, kind: output, shape index: {}]
  %s4 = sld [smem:[#allocation0]]
  $region45: #{conv3d_encoder.5} parent=0
    _
  %s6 = ssub.s32 1, %s4
  %s7 = scalar_select 0, %s6, %s4
  loop: start=0, step=1, limit=4
  $region2: #{conv3d_encoder.5} parent=0 // loop_pre_header
    _
  $region3: #{conv3d_encoder.5} parent=0 // loop_header
    %s9 = sphi 0, %s13
    %p10 = scmp.ge.s32.totalorder %s9, 4
    %s19 = sphi 0, %s21
    %s22 = sphi 0, %s19
    %s23 = sphi 0, %s22
    %s39 = sphi 0, %s23
    %s43 = sphi 0, %s43
    %s45 = sphi 0, %s43
    %s46 = sphi 0, %s45
    %s60 = sphi 0, %s46
    %s64 = sphi 0, %s64
    %s66 = sphi 0, %s64
    %s67 = sphi 0, %s66
    %s81 = sphi 0, %s67
    %s87 = sphi 0, %s89
    %s90 = sphi 0, %s87
    %s91 = sphi 0, %s90
    %s107 = sphi 0, %s91
  $region4: #{conv3d_encoder.5} parent=0 // loop_header_branch
    %12 = sbr.rel (%p10) target = $region8
  $region5: #{conv3d_encoder.5} parent=0 // loop_body
    %s14 = ssub.s32 %s9, 1
    %s15 = ssub.s32 %s9, 2
    %s16 = sadd.s32 %s9, 1
    %s17 = ssub.s32 %s9, %s16
    %p18 = scmp.eq.s32.totalorder %s17, 0
    %s20 = sadd.s32 %s19, 1
    %s21 = scalar_select %p18, %s19, %s20
    %p24 = pneg %p18
    %p25 = scmp.eq.s32.totalorder %s9, 1
    %p26 = por %p24, %p25
    %p27 = scmp.ne.s32.totalorder %s19, %s22
    %p28 = scmp.eq.s32.totalorder %s9, 0
    %p29 = por %p27, %p28
    %p30 = scmp.ne.s32.totalorder %s19, %s22
    %p31 = scmp.eq.s32.totalorder %s14, 1
    %p32 = por %p30, %p31
    %p33 = scmp.ne.s32.totalorder %s22, %s23
    %p34 = scmp.eq.s32.totalorder %s14, 0
    %p35 = por %p33, %p34
    %p36 = scmp.ne.s32.totalorder %s22, %s23
    %p37 = scmp.eq.s32.totalorder %s15, 1
    %p38 = por %p36, %p37
    %p40 = scmp.ne.s32.totalorder %s23, %s39
    %p41 = scmp.eq.s32.totalorder %s15, 0
    %p42 = por %p40, %p41
    %s44 = sadd.s32 %s43, 1
    %p47 = scmp.eq.s32.totalorder %s9, 1
    %p48 = scmp.ne.s32.totalorder %s43, %s45
    %p49 = scmp.eq.s32.totalorder %s9, 0
    %p50 = por %p48, %p49
    %p51 = scmp.ne.s32.totalorder %s43, %s45
    %p52 = scmp.eq.s32.totalorder %s14, 1
    %p53 = por %p51, %p52
    %p54 = scmp.ne.s32.totalorder %s45, %s46
    %p55 = scmp.eq.s32.totalorder %s14, 0
    %p56 = por %p54, %p55
    %p57 = scmp.ne.s32.totalorder %s45, %s46
    %p58 = scmp.eq.s32.totalorder %s15, 1
    %p59 = por %p57, %p58
    %p61 = scmp.ne.s32.totalorder %s46, %s60
    %p62 = scmp.eq.s32.totalorder %s15, 0
    %p63 = por %p61, %p62
    %s65 = sadd.s32 %s64, 1
    %p68 = scmp.eq.s32.totalorder %s9, 1
    %p69 = scmp.ne.s32.totalorder %s64, %s66
    %p70 = scmp.eq.s32.totalorder %s9, 0
    %p71 = por %p69, %p70
    %p72 = scmp.ne.s32.totalorder %s64, %s66
    %p73 = scmp.eq.s32.totalorder %s14, 1
    %p74 = por %p72, %p73
    %p75 = scmp.ne.s32.totalorder %s66, %s67
    %p76 = scmp.eq.s32.totalorder %s14, 0
    %p77 = por %p75, %p76
    %p78 = scmp.ne.s32.totalorder %s66, %s67
    %p79 = scmp.eq.s32.totalorder %s15, 1
    %p80 = por %p78, %p79
    %p82 = scmp.ne.s32.totalorder %s67, %s81
    %p83 = scmp.eq.s32.totalorder %s15, 0
    %p84 = por %p82, %p83
    %s85 = ssub.s32 %s9, %s16
    %p86 = scmp.eq.s32.totalorder %s85, 0
    %s88 = sadd.s32 %s87, 1
    %s89 = scalar_select %p86, %s87, %s88
    %p92 = pneg %p86
    %p93 = scmp.eq.s32.totalorder %s9, 1
    %p94 = por %p92, %p93
    %p95 = scmp.ne.s32.totalorder %s87, %s90
    %p96 = scmp.eq.s32.totalorder %s9, 0
    %p97 = por %p95, %p96
    %p98 = scmp.ne.s32.totalorder %s87, %s90
    %p99 = scmp.eq.s32.totalorder %s14, 1
    %p100 = por %p98, %p99
    %p101 = scmp.ne.s32.totalorder %s90, %s91
    %p102 = scmp.eq.s32.totalorder %s14, 0
    %p103 = por %p101, %p102
    %p104 = scmp.ne.s32.totalorder %s90, %s91
    %p105 = scmp.eq.s32.totalorder %s15, 1
    %p106 = por %p104, %p105
    %p108 = scmp.ne.s32.totalorder %s91, %s107
    %p109 = scmp.eq.s32.totalorder %s15, 0
    %p110 = por %p108, %p109
    %p111 = scmp.le.s32.totalorder 1, %s9
    %p112 = scmp.lt.s32.totalorder %s9, 3
    %p113 = pnand %p111, %p112
    %p114 = pneg %p113
    // Predicated region
    $region9: #{conv3d_encoder.5} parent=5 // pred_check
      _
    $region10: #{conv3d_encoder.5} parent=5 // pred_check_branch
      %116 = sbr.rel (%p113) target = $region12
    $region11: #{conv3d_encoder.5} parent=5 // pred_region
      %s117 = ssub.s32 %s9, 1
      // Predicated region
      $region13: #{conv3d_encoder.5} parent=11 // pred_check
        %p118 = pneg %p56
      $region14: #{conv3d_encoder.5} parent=11 // pred_check_branch
        %120 = sbr.rel (%p118) target = $region16
      $region15: #{conv3d_encoder.5} parent=11 // pred_region
        _
      $region16: #{conv3d_encoder.5} parent=11 // pred_fallthru
        _
      // Predicated region
      $region17: #{conv3d_encoder.5} parent=11 // pred_check
        %p121 = pneg %p77
      $region18: #{conv3d_encoder.5} parent=11 // pred_check_branch
        %123 = sbr.rel (%p121) target = $region20
      $region19: #{conv3d_encoder.5} parent=11 // pred_region
        _
      $region20: #{conv3d_encoder.5} parent=11 // pred_fallthru
        _
    $region12: #{conv3d_encoder.5} parent=5 // pred_fallthru
      _
    %p124 = scmp.lt.s32.totalorder %s9, 2
    // Predicated region
    $region21: #{conv3d_encoder.5} parent=5 // pred_check
      %p125 = pneg %p124
    $region22: #{conv3d_encoder.5} parent=5 // pred_check_branch
      %127 = sbr.rel (%p125) target = $region24
    $region23: #{conv3d_encoder.5} parent=5 // pred_region
      // Predicated region
      $region25: #{conv3d_encoder.5} parent=23 // pred_check
        %p128 = pneg %p29
      $region26: #{conv3d_encoder.5} parent=23 // pred_check_branch
        %130 = sbr.rel (%p128) target = $region28
      $region27: #{conv3d_encoder.5} parent=23 // pred_region
        %p131 = scmp.lt.s32.totalorder %s9, 1
        %s132 = scalar_select %p131, %s9, 1
        %s133 = smul.addr %s132, 216
        %s134 = smul.addr %s133, 4
        %s135 = scalar_lea.vmem %s0, %s134
      $region28: #{conv3d_encoder.5} parent=23 // pred_fallthru
        _
    $region24: #{conv3d_encoder.5} parent=5 // pred_fallthru
      _
    %p136 = scmp.le.s32.totalorder 1, %s9
    %p137 = scmp.lt.s32.totalorder %s9, 3
    %p138 = pnand %p136, %p137
    %p139 = pneg %p138
    // Predicated region
    $region29: #{conv3d_encoder.5} parent=5 // pred_check
      _
    $region30: #{conv3d_encoder.5} parent=5 // pred_check_branch
      %141 = sbr.rel (%p138) target = $region32
    $region31: #{conv3d_encoder.5} parent=5 // pred_region
      %s142 = ssub.s32 %s9, 1
      %p143 = scmp.lt.s32.totalorder %s14, 1
      %s144 = scalar_select %p143, %s14, 1
      %s145 = smul.addr %s144, 216
      %s146 = smul.addr %s145, 4
      %s147 = scalar_lea.vmem %s0, %s146
      %p148 = pneg %p35
      %p149 = pneg %p32
      %p150 = pneg %p56
      %p151 = pneg %p53
      %p152 = pneg %p77
      %p153 = pneg %p74
      %p154 = pneg %p103
      %p155 = pneg %p100
      %p156 = scmp.lt.s32.totalorder %s14, 1
      %s157 = scalar_select %p156, %s14, 1
      %s158 = smul.addr %s157, 4
      %s159 = smul.addr %s158, 8
      %s160 = scalar_lea.vmem %s3, %s159
      %p161 = scmp.lt.s32.totalorder %s14, 1
      %s162 = scalar_select %p161, %s14, 1
      %s163 = smul.addr %s162, 216
      %s164 = smul.addr %s163, 4
      %s165 = scalar_lea.vmem %s0, %s164
      %p166 = scmp.lt.s32.totalorder %s14, 1
      %s167 = scalar_select %p166, %s14, 1
      %s168 = smul.addr %s167, 4
      %s169 = smul.addr %s168, 8
      %s170 = scalar_lea.vmem %s3, %s169
      %v172 = vld [vmem:[%s1] sm:$0xff]
      %v173 = vld [vmem:[%s1 + $0x8] sm:$0xff]
      %v174 = vld [vmem:[%s1 + $0x10] sm:$0xff]
      %v175 = vld [vmem:[%s1 + $0x18] sm:$0xff]
      %v176 = vld [vmem:[%s1 + $0x20] sm:$0xff]
      %v177 = vld [vmem:[%s1 + $0x28] sm:$0xff]
      %v178 = vld [vmem:[%s1 + $0x30] sm:$0xff]
      %v179 = vld [vmem:[%s1 + $0x38] sm:$0xff]
      %v180 = vld [vmem:[%s2] sm:$0xff]
      %v181 = vld [vmem:[%s2 + $0x8] sm:$0xff]
      %v182 = vld [vmem:[%s2 + $0x10] sm:$0xff]
      %v183 = vld [vmem:[%s2 + $0x18] sm:$0xff]
      %v184 = vld [vmem:[%s165] sm:$0xf]
      %v185 = vld [vmem:[%s165 + $0x4] sm:$0xf]
      %v186 = vld [vmem:[%s165 + $0x8] sm:$0xf]
      %v187 = vld [vmem:[%s165 + $0xc] sm:$0xf]
      %v188 = vld [vmem:[%s165 + $0x10] sm:$0xf]
      %v189 = vld [vmem:[%s165 + $0x14] sm:$0xf]
      %v190 = vld [vmem:[%s165 + $0x18] sm:$0xf]
      %v191 = vld [vmem:[%s165 + $0x1c] sm:$0xf]
      %v192 = vld [vmem:[%s165 + $0x20] sm:$0xf]
      %v193 = vld [vmem:[%s165 + $0x24] sm:$0xf]
      %v194 = vld [vmem:[%s165 + $0x28] sm:$0xf]
      %v195 = vld [vmem:[%s165 + $0x2c] sm:$0xf]
      %v196 = vld [vmem:[%s165 + $0x30] sm:$0xf]
      %v197 = vld [vmem:[%s165 + $0x34] sm:$0xf]
      %v198 = vld [vmem:[%s165 + $0x38] sm:$0xf]
      %v199 = vld [vmem:[%s165 + $0x3c] sm:$0xf]
      %v200 = vld [vmem:[%s165 + $0x40] sm:$0xf]
      %v201 = vld [vmem:[%s165 + $0x44] sm:$0xf]
      %v202 = vld [vmem:[%s165 + $0x48] sm:$0xf]
      %v203 = vld [vmem:[%s165 + $0x4c] sm:$0xf]
      %v204 = vld [vmem:[%s165 + $0x50] sm:$0xf]
      %v205 = vld [vmem:[%s165 + $0x54] sm:$0xf]
      %v206 = vld [vmem:[%s165 + $0x58] sm:$0xf]
      %v207 = vld [vmem:[%s165 + $0x5c] sm:$0xf]
      %v208 = vld [vmem:[%s165 + $0x60] sm:$0xf]
      %v209 = vld [vmem:[%s165 + $0x64] sm:$0xf]
      %v210 = vld [vmem:[%s165 + $0x68] sm:$0xf]
      %v211 = vld [vmem:[%s165 + $0x6c] sm:$0xf]
      %v212 = vld [vmem:[%s165 + $0x70] sm:$0xf]
      %v213 = vld [vmem:[%s165 + $0x74] sm:$0xf]
      %v214 = vld [vmem:[%s165 + $0x78] sm:$0xf]
      %v215 = vld [vmem:[%s165 + $0x7c] sm:$0xf]
      %v216 = vld [vmem:[%s165 + $0x80] sm:$0xf]
      %v217 = vld [vmem:[%s165 + $0x84] sm:$0xf]
      %v218 = vld [vmem:[%s165 + $0x88] sm:$0xf]
      %v219 = vld [vmem:[%s165 + $0x8c] sm:$0xf]
      %v220 = vld [vmem:[%s165 + $0x90] sm:$0xf]
      %v221 = vld [vmem:[%s165 + $0x94] sm:$0xf]
      %v222 = vld [vmem:[%s165 + $0x98] sm:$0xf]
      %v223 = vld [vmem:[%s165 + $0x9c] sm:$0xf]
      %v224 = vld [vmem:[%s165 + $0xa0] sm:$0xf]
      %v225 = vld [vmem:[%s165 + $0xa4] sm:$0xf]
      %v226 = vld [vmem:[%s165 + $0xa8] sm:$0xf]
      %v227 = vld [vmem:[%s165 + $0xac] sm:$0xf]
      %v228 = vld [vmem:[%s165 + $0xb0] sm:$0xf]
      %v229 = vld [vmem:[%s165 + $0xb4] sm:$0xf]
      %v230 = vld [vmem:[%s165 + $0xb8] sm:$0xf]
      %v231 = vld [vmem:[%s165 + $0xbc] sm:$0xf]
      %v232 = vld [vmem:[%s165 + $0xc0] sm:$0xf]
      %v233 = vld [vmem:[%s165 + $0xc4] sm:$0xf]
      %v234 = vld [vmem:[%s165 + $0xc8] sm:$0xf]
      %v235 = vld [vmem:[%s165 + $0xcc] sm:$0xf]
      %v236 = vld [vmem:[%s165 + $0xd0] sm:$0xf]
      %v237 = vld [vmem:[%s165 + $0xd4] sm:$0xf]
      %239 = vset.pattern.permute.xlu0 0
      %240 = vperm.xlu0 %239, %v180
      %v241 = vpop.permute.xlu0 %240
      %244 = vset.pattern.permute.xlu0 0
      %245 = vperm.xlu0 %244, %v181
      %v246 = vpop.permute.xlu0 %245
      %249 = vset.pattern.permute.xlu0 0
      %250 = vperm.xlu0 %249, %v182
      %v251 = vpop.permute.xlu0 %250
      %254 = vset.pattern.permute.xlu0 0
      %255 = vperm.xlu0 %254, %v183
      %v256 = vpop.permute.xlu0 %255
      %v266 = vunpack.c.l.b16 %v172
      %v267 = vunpack.c.h.b16 %v172
      %v268 = vunpack.c.l.b16 %v173
      %v269 = vunpack.c.h.b16 %v173
      %v270 = vunpack.c.l.b16 %v174
      %v271 = vunpack.c.h.b16 %v174
      %v272 = vunpack.c.l.b16 %v175
      %v273 = vunpack.c.h.b16 %v175
      %v274 = vunpack.c.l.b16 %v176
      %v275 = vunpack.c.h.b16 %v176
      %v276 = vunpack.c.l.b16 %v177
      %v277 = vunpack.c.h.b16 %v177
      %v278 = vunpack.c.l.b16 %v178
      %v279 = vunpack.c.h.b16 %v178
      %v280 = vunpack.c.l.b16 %v179
      %v281 = vunpack.c.h.b16 %v179
      %v282 = vpack.c.b16 %v270, %v266
      %v283 = vpack.c.b16 %v271, %v267
      %v284 = vpack.c.b16 %v272, %v268
      %v285 = vpack.c.b16 %v273, %v269
      %v286 = vpack.c.b16 %v278, %v274
      %v287 = vpack.c.b16 %v279, %v275
      %v288 = vpack.c.b16 %v280, %v276
      %v289 = vpack.c.b16 %v281, %v277
      %v350 = vunpack.c.l.b16 %v184
      %v351 = vunpack.c.l.b16 %v185
      %v352 = vunpack.c.l.b16 %v186
      %v353 = vunpack.c.l.b16 %v187
      %v354 = vunpack.c.l.b16 %v188
      %v355 = vunpack.c.l.b16 %v189
      %v356 = vunpack.c.l.b16 %v190
      %v357 = vunpack.c.l.b16 %v191
      %v358 = vunpack.c.l.b16 %v192
      %v359 = vunpack.c.l.b16 %v193
      %v360 = vunpack.c.l.b16 %v194
      %v361 = vunpack.c.l.b16 %v195
      %v362 = vunpack.c.l.b16 %v196
      %v363 = vunpack.c.l.b16 %v197
      %v364 = vunpack.c.l.b16 %v198
      %v365 = vunpack.c.l.b16 %v199
      %v366 = vunpack.c.l.b16 %v200
      %v367 = vunpack.c.l.b16 %v201
      %v368 = vunpack.c.l.b16 %v202
      %v369 = vunpack.c.l.b16 %v203
      %v370 = vunpack.c.l.b16 %v204
      %v371 = vunpack.c.l.b16 %v205
      %v372 = vunpack.c.l.b16 %v206
      %v373 = vunpack.c.l.b16 %v207
      %v374 = vunpack.c.l.b16 %v208
      %v375 = vunpack.c.l.b16 %v209
      %v376 = vunpack.c.l.b16 %v210
      %v377 = vunpack.c.l.b16 %v211
      %v378 = vunpack.c.l.b16 %v212
      %v379 = vunpack.c.l.b16 %v213
      %v380 = vunpack.c.l.b16 %v214
      %v381 = vunpack.c.l.b16 %v215
      %v382 = vunpack.c.l.b16 %v216
      %v383 = vunpack.c.l.b16 %v217
      %v384 = vunpack.c.l.b16 %v218
      %v385 = vunpack.c.l.b16 %v219
      %v386 = vunpack.c.l.b16 %v220
      %v387 = vunpack.c.l.b16 %v221
      %v388 = vunpack.c.l.b16 %v222
      %v389 = vunpack.c.l.b16 %v223
      %v390 = vunpack.c.l.b16 %v224
      %v391 = vunpack.c.l.b16 %v225
      %v392 = vunpack.c.l.b16 %v226
      %v393 = vunpack.c.l.b16 %v227
      %v394 = vunpack.c.l.b16 %v228
      %v395 = vunpack.c.l.b16 %v229
      %v396 = vunpack.c.l.b16 %v230
      %v397 = vunpack.c.l.b16 %v231
      %v398 = vunpack.c.l.b16 %v232
      %v399 = vunpack.c.l.b16 %v233
      %v400 = vunpack.c.l.b16 %v234
      %v401 = vunpack.c.l.b16 %v235
      %v402 = vunpack.c.l.b16 %v236
      %v403 = vunpack.c.l.b16 %v237
      %v404 = vpack.c.b16 %v351, %v350
      %v405 = vpack.c.b16 %v353, %v352
      %v406 = vpack.c.b16 %v355, %v354
      %v407 = vpack.c.b16 %v357, %v356
      %v408 = vpack.c.b16 %v359, %v358
      %v409 = vpack.c.b16 %v361, %v360
      %v410 = vpack.c.b16 %v363, %v362
      %v411 = vpack.c.b16 %v365, %v364
      %v412 = vpack.c.b16 %v367, %v366
      %v413 = vpack.c.b16 %v369, %v368
      %v414 = vpack.c.b16 %v371, %v370
      %v415 = vpack.c.b16 %v373, %v372
      %v416 = vpack.c.b16 %v375, %v374
      %v417 = vpack.c.b16 %v377, %v376
      %v418 = vpack.c.b16 %v379, %v378
      %v419 = vpack.c.b16 %v381, %v380
      %v420 = vpack.c.b16 %v383, %v382
      %v421 = vpack.c.b16 %v385, %v384
      %v422 = vpack.c.b16 %v387, %v386
      %v423 = vpack.c.b16 %v389, %v388
      %v424 = vpack.c.b16 %v391, %v390
      %v425 = vpack.c.b16 %v393, %v392
      %v426 = vpack.c.b16 %v395, %v394
      %v427 = vpack.c.b16 %v397, %v396
      %v428 = vpack.c.b16 %v399, %v398
      %v429 = vpack.c.b16 %v401, %v400
      %v430 = vpack.c.b16 %v403, %v402
      %vm458 = vcmask 392192
      %v460 = vsel %vm458, %v285, 0
      %v463 = vsel %vm458, %v289, 0
      %465 = vmatprep.subr.bf16.mxu0 0
      %466 = vmatpush1.bf16.msra.mxu0 %v404
      %467 = vmatprep.subr.bf16.mxu0 0
      %468 = vmatpush1.bf16.msra.mxu0 %v405
      %469 = vmatprep.subr.bf16.mxu0 0
      %470 = vmatpush1.bf16.msra.mxu0 %v406
      %471 = vmatprep.subr.bf16.mxu0 0
      %472 = vmatpush1.bf16.msra.mxu0 %v407
      %473 = vmatprep.subr.bf16.mxu0 0
      %474 = vmatpush1.bf16.msra.mxu0 %v408
      %475 = vmatprep.subr.bf16.mxu0 0
      %476 = vmatpush1.bf16.msra.mxu0 %v409
      %477 = vmatprep.subr.bf16.mxu0 0
      %478 = vmatpush1.bf16.msra.mxu0 %v410
      %479 = vmatprep.subr.bf16.mxu0 0
      %480 = vmatpush1.bf16.msra.mxu0 %v411
      %481 = vmatprep.subr.bf16.mxu0 0
      %482 = vmatpush1.bf16.msra.mxu0 %v412
      %483 = vmatprep.subr.bf16.mxu0 0
      %484 = vmatpush1.bf16.msra.mxu0 %v413
      %485 = vmatprep.subr.bf16.mxu0 0
      %486 = vmatpush1.bf16.msra.mxu0 %v414
      %487 = vmatprep.subr.bf16.mxu0 0
      %488 = vmatpush1.bf16.msra.mxu0 %v415
      %489 = vmatprep.subr.bf16.mxu0 0
      %490 = vmatpush1.bf16.msra.mxu0 %v416
      %491 = vmatprep.subr.bf16.mxu0 0
      %492 = vmatpush1.bf16.msra.mxu0 %v417
      %493 = vmatprep.subr.bf16.mxu0 0
      %494 = vmatpush1.bf16.msra.mxu0 %v418
      %495 = vmatprep.subr.bf16.mxu0 0
      %496 = vmatpush1.bf16.msra.mxu0 %v419
      %497 = vmatprep.mubr.bf16.mxu0 %v283
      %498 = vmatmul.mubr.bf16.gmra.mrb[0].mxu0 %v282
      %v499 = vpop.f32.mrb[0].mxu0
      %v500 = vadd.f32 %v241, %v499
      %v501 = vpop.f32.mrb[0].mxu0
      %v502 = vpop.f32.mrb[0].mxu0
      %v503 = vadd.f32 %v246, %v502
      %v504 = vpop.f32.mrb[0].mxu0
      %505 = vmatprep.mubr.bf16.mxu0 %v287
      %506 = vmatmul.mubr.bf16.gmra.mrb[0].mxu0 %v286
      %v507 = vpop.f32.mrb[0].mxu0
      %v508 = vadd.f32 %v251, %v507
      %v509 = vpop.f32.mrb[0].mxu0
      %v510 = vpop.f32.mrb[0].mxu0
      %v511 = vadd.f32 %v256, %v510
      %v512 = vpop.f32.mrb[0].mxu0
      %513 = vdwg.mxu0
      %514 = vmatprep.subr.bf16.mxu0 0
      %515 = vmatpush1.bf16.msra.mxu0 %v420
      %516 = vmatprep.subr.bf16.mxu0 0
      %517 = vmatpush1.bf16.msra.mxu0 %v421
      %518 = vmatprep.subr.bf16.mxu0 0
      %519 = vmatpush1.bf16.msra.mxu0 %v422
      %520 = vmatprep.subr.bf16.mxu0 0
      %521 = vmatpush1.bf16.msra.mxu0 %v423
      %522 = vmatprep.subr.bf16.mxu0 0
      %523 = vmatpush1.bf16.msra.mxu0 %v424
      %524 = vmatprep.subr.bf16.mxu0 0
      %525 = vmatpush1.bf16.msra.mxu0 %v425
      %526 = vmatprep.subr.bf16.mxu0 0
      %527 = vmatpush1.bf16.msra.mxu0 %v426
      %528 = vmatprep.subr.bf16.mxu0 0
      %529 = vmatpush1.bf16.msra.mxu0 %v427
      %530 = vmatprep.subr.bf16.mxu0 0
      %531 = vmatpush1.bf16.msra.mxu0 %v428
      %532 = vmatprep.subr.bf16.mxu0 0
      %533 = vmatpush1.bf16.msra.mxu0 %v429
      %534 = vmatprep.subr.bf16.mxu0 0
      %535 = vmatpush1.bf16.msra.mxu0 %v430
      %536 = vmatprep.subr.bf16.mxu0 0
      %537 = vmatpush1.bf16.msra.mxu0 0
      %538 = vmatprep.subr.bf16.mxu0 0
      %539 = vmatpush1.bf16.msra.mxu0 0
      %540 = vmatprep.subr.bf16.mxu0 0
      %541 = vmatpush1.bf16.msra.mxu0 0
      %542 = vmatprep.subr.bf16.mxu0 0
      %543 = vmatpush1.bf16.msra.mxu0 0
      %544 = vmatprep.subr.bf16.mxu0 0
      %545 = vmatpush1.bf16.msra.mxu0 0
      %546 = vmatprep.mubr.bf16.mxu0 %v460
      %547 = vmatmul.mubr.bf16.gmra.mrb[0].mxu0 %v284
      %v548 = vpop.f32.mrb[0].mxu0
      %v549 = vadd.f32 %v500, %v548
      %v550 = vpop.f32.mrb[0].mxu0
      %v551 = vpop.f32.mrb[0].mxu0
      %v552 = vadd.f32 %v503, %v551
      %v553 = vpop.f32.mrb[0].mxu0
      %554 = vmatprep.mubr.bf16.mxu0 %v463
      %555 = vmatmul.mubr.bf16.gmra.mrb[0].mxu0 %v288
      %v556 = vpop.f32.mrb[0].mxu0
      %v557 = vadd.f32 %v508, %v556
      %v558 = vpop.f32.mrb[0].mxu0
      %v559 = vpop.f32.mrb[0].mxu0
      %v560 = vadd.f32 %v511, %v559
      %v561 = vpop.f32.mrb[0].mxu0
      %562 = vdwg.mxu0
      %v563 = vmax.f32 %v549, 0.0
      %v564 = vmax.f32 %v552, 0.0
      %v565 = vmax.f32 %v557, 0.0
      %v566 = vmax.f32 %v560, 0.0
      %s567 = scalar_lea.vmem %s165, 216
      %v568 = vld [vmem:[%s567] sm:$0xf]
      %v569 = vld [vmem:[%s567 + $0x4] sm:$0xf]
      %v570 = vld [vmem:[%s567 + $0x8] sm:$0xf]
      %v571 = vld [vmem:[%s567 + $0xc] sm:$0xf]
      %v572 = vld [vmem:[%s567 + $0x10] sm:$0xf]
      %v573 = vld [vmem:[%s567 + $0x14] sm:$0xf]
      %v574 = vld [vmem:[%s567 + $0x18] sm:$0xf]
      %v575 = vld [vmem:[%s567 + $0x1c] sm:$0xf]
      %v576 = vld [vmem:[%s567 + $0x20] sm:$0xf]
      %v577 = vld [vmem:[%s567 + $0x24] sm:$0xf]
      %v578 = vld [vmem:[%s567 + $0x28] sm:$0xf]
      %v579 = vld [vmem:[%s567 + $0x2c] sm:$0xf]
      %v580 = vld [vmem:[%s567 + $0x30] sm:$0xf]
      %v581 = vld [vmem:[%s567 + $0x34] sm:$0xf]
      %v582 = vld [vmem:[%s567 + $0x38] sm:$0xf]
      %v583 = vld [vmem:[%s567 + $0x3c] sm:$0xf]
      %v584 = vld [vmem:[%s567 + $0x40] sm:$0xf]
      %v585 = vld [vmem:[%s567 + $0x44] sm:$0xf]
      %v586 = vld [vmem:[%s567 + $0x48] sm:$0xf]
      %v587 = vld [vmem:[%s567 + $0x4c] sm:$0xf]
      %v588 = vld [vmem:[%s567 + $0x50] sm:$0xf]
      %v589 = vld [vmem:[%s567 + $0x54] sm:$0xf]
      %v590 = vld [vmem:[%s567 + $0x58] sm:$0xf]
      %v591 = vld [vmem:[%s567 + $0x5c] sm:$0xf]
      %v592 = vld [vmem:[%s567 + $0x60] sm:$0xf]
      %v593 = vld [vmem:[%s567 + $0x64] sm:$0xf]
      %v594 = vld [vmem:[%s567 + $0x68] sm:$0xf]
      %v595 = vld [vmem:[%s567 + $0x6c] sm:$0xf]
      %v596 = vld [vmem:[%s567 + $0x70] sm:$0xf]
      %v597 = vld [vmem:[%s567 + $0x74] sm:$0xf]
      %v598 = vld [vmem:[%s567 + $0x78] sm:$0xf]
      %v599 = vld [vmem:[%s567 + $0x7c] sm:$0xf]
      %v600 = vld [vmem:[%s567 + $0x80] sm:$0xf]
      %v601 = vld [vmem:[%s567 + $0x84] sm:$0xf]
      %v602 = vld [vmem:[%s567 + $0x88] sm:$0xf]
      %v603 = vld [vmem:[%s567 + $0x8c] sm:$0xf]
      %v604 = vld [vmem:[%s567 + $0x90] sm:$0xf]
      %v605 = vld [vmem:[%s567 + $0x94] sm:$0xf]
      %v606 = vld [vmem:[%s567 + $0x98] sm:$0xf]
      %v607 = vld [vmem:[%s567 + $0x9c] sm:$0xf]
      %v608 = vld [vmem:[%s567 + $0xa0] sm:$0xf]
      %v609 = vld [vmem:[%s567 + $0xa4] sm:$0xf]
      %v610 = vld [vmem:[%s567 + $0xa8] sm:$0xf]
      %v611 = vld [vmem:[%s567 + $0xac] sm:$0xf]
      %v612 = vld [vmem:[%s567 + $0xb0] sm:$0xf]
      %v613 = vld [vmem:[%s567 + $0xb4] sm:$0xf]
      %v614 = vld [vmem:[%s567 + $0xb8] sm:$0xf]
      %v615 = vld [vmem:[%s567 + $0xbc] sm:$0xf]
      %v616 = vld [vmem:[%s567 + $0xc0] sm:$0xf]
      %v617 = vld [vmem:[%s567 + $0xc4] sm:$0xf]
      %v618 = vld [vmem:[%s567 + $0xc8] sm:$0xf]
      %v619 = vld [vmem:[%s567 + $0xcc] sm:$0xf]
      %v620 = vld [vmem:[%s567 + $0xd0] sm:$0xf]
      %v621 = vld [vmem:[%s567 + $0xd4] sm:$0xf]
      %v676 = vunpack.c.l.b16 %v568
      %v677 = vunpack.c.l.b16 %v569
      %v678 = vunpack.c.l.b16 %v570
      %v679 = vunpack.c.l.b16 %v571
      %v680 = vunpack.c.l.b16 %v572
      %v681 = vunpack.c.l.b16 %v573
      %v682 = vunpack.c.l.b16 %v574
      %v683 = vunpack.c.l.b16 %v575
      %v684 = vunpack.c.l.b16 %v576
      %v685 = vunpack.c.l.b16 %v577
      %v686 = vunpack.c.l.b16 %v578
      %v687 = vunpack.c.l.b16 %v579
      %v688 = vunpack.c.l.b16 %v580
      %v689 = vunpack.c.l.b16 %v581
      %v690 = vunpack.c.l.b16 %v582
      %v691 = vunpack.c.l.b16 %v583
      %v692 = vunpack.c.l.b16 %v584
      %v693 = vunpack.c.l.b16 %v585
      %v694 = vunpack.c.l.b16 %v586
      %v695 = vunpack.c.l.b16 %v587
      %v696 = vunpack.c.l.b16 %v588
      %v697 = vunpack.c.l.b16 %v589
      %v698 = vunpack.c.l.b16 %v590
      %v699 = vunpack.c.l.b16 %v591
      %v700 = vunpack.c.l.b16 %v592
      %v701 = vunpack.c.l.b16 %v593
      %v702 = vunpack.c.l.b16 %v594
      %v703 = vunpack.c.l.b16 %v595
      %v704 = vunpack.c.l.b16 %v596
      %v705 = vunpack.c.l.b16 %v597
      %v706 = vunpack.c.l.b16 %v598
      %v707 = vunpack.c.l.b16 %v599
      %v708 = vunpack.c.l.b16 %v600
      %v709 = vunpack.c.l.b16 %v601
      %v710 = vunpack.c.l.b16 %v602
      %v711 = vunpack.c.l.b16 %v603
      %v712 = vunpack.c.l.b16 %v604
      %v713 = vunpack.c.l.b16 %v605
      %v714 = vunpack.c.l.b16 %v606
      %v715 = vunpack.c.l.b16 %v607
      %v716 = vunpack.c.l.b16 %v608
      %v717 = vunpack.c.l.b16 %v609
      %v718 = vunpack.c.l.b16 %v610
      %v719 = vunpack.c.l.b16 %v611
      %v720 = vunpack.c.l.b16 %v612
      %v721 = vunpack.c.l.b16 %v613
      %v722 = vunpack.c.l.b16 %v614
      %v723 = vunpack.c.l.b16 %v615
      %v724 = vunpack.c.l.b16 %v616
      %v725 = vunpack.c.l.b16 %v617
      %v726 = vunpack.c.l.b16 %v618
      %v727 = vunpack.c.l.b16 %v619
      %v728 = vunpack.c.l.b16 %v620
      %v729 = vunpack.c.l.b16 %v621
      %v730 = vpack.c.b16 %v677, %v676
      %v731 = vpack.c.b16 %v679, %v678
      %v732 = vpack.c.b16 %v681, %v680
      %v733 = vpack.c.b16 %v683, %v682
      %v734 = vpack.c.b16 %v685, %v684
      %v735 = vpack.c.b16 %v687, %v686
      %v736 = vpack.c.b16 %v689, %v688
      %v737 = vpack.c.b16 %v691, %v690
      %v738 = vpack.c.b16 %v693, %v692
      %v739 = vpack.c.b16 %v695, %v694
      %v740 = vpack.c.b16 %v697, %v696
      %v741 = vpack.c.b16 %v699, %v698
      %v742 = vpack.c.b16 %v701, %v700
      %v743 = vpack.c.b16 %v703, %v702
      %v744 = vpack.c.b16 %v705, %v704
      %v745 = vpack.c.b16 %v707, %v706
      %v746 = vpack.c.b16 %v709, %v708
      %v747 = vpack.c.b16 %v711, %v710
      %v748 = vpack.c.b16 %v713, %v712
      %v749 = vpack.c.b16 %v715, %v714
      %v750 = vpack.c.b16 %v717, %v716
      %v751 = vpack.c.b16 %v719, %v718
      %v752 = vpack.c.b16 %v721, %v720
      %v753 = vpack.c.b16 %v723, %v722
      %v754 = vpack.c.b16 %v725, %v724
      %v755 = vpack.c.b16 %v727, %v726
      %v756 = vpack.c.b16 %v729, %v728
      %784 = vmatprep.subr.bf16.mxu0 0
      %785 = vmatpush1.bf16.msra.mxu0 %v730
      %786 = vmatprep.subr.bf16.mxu0 0
      %787 = vmatpush1.bf16.msra.mxu0 %v731
      %788 = vmatprep.subr.bf16.mxu0 0
      %789 = vmatpush1.bf16.msra.mxu0 %v732
      %790 = vmatprep.subr.bf16.mxu0 0
      %791 = vmatpush1.bf16.msra.mxu0 %v733
      %792 = vmatprep.subr.bf16.mxu0 0
      %793 = vmatpush1.bf16.msra.mxu0 %v734
      %794 = vmatprep.subr.bf16.mxu0 0
      %795 = vmatpush1.bf16.msra.mxu0 %v735
      %796 = vmatprep.subr.bf16.mxu0 0
      %797 = vmatpush1.bf16.msra.mxu0 %v736
      %798 = vmatprep.subr.bf16.mxu0 0
      %799 = vmatpush1.bf16.msra.mxu0 %v737
      %800 = vmatprep.subr.bf16.mxu0 0
      %801 = vmatpush1.bf16.msra.mxu0 %v738
      %802 = vmatprep.subr.bf16.mxu0 0
      %803 = vmatpush1.bf16.msra.mxu0 %v739
      %804 = vmatprep.subr.bf16.mxu0 0
      %805 = vmatpush1.bf16.msra.mxu0 %v740
      %806 = vmatprep.subr.bf16.mxu0 0
      %807 = vmatpush1.bf16.msra.mxu0 %v741
      %808 = vmatprep.subr.bf16.mxu0 0
      %809 = vmatpush1.bf16.msra.mxu0 %v742
      %810 = vmatprep.subr.bf16.mxu0 0
      %811 = vmatpush1.bf16.msra.mxu0 %v743
      %812 = vmatprep.subr.bf16.mxu0 0
      %813 = vmatpush1.bf16.msra.mxu0 %v744
      %814 = vmatprep.subr.bf16.mxu0 0
      %815 = vmatpush1.bf16.msra.mxu0 %v745
      %816 = vmatprep.mubr.bf16.mxu0 %v283
      %817 = vmatmul.mubr.bf16.gmra.mrb[0].mxu0 %v282
      %v818 = vpop.f32.mrb[0].mxu0
      %v819 = vadd.f32 %v241, %v818
      %v820 = vpop.f32.mrb[0].mxu0
      %v821 = vpop.f32.mrb[0].mxu0
      %v822 = vadd.f32 %v246, %v821
      %v823 = vpop.f32.mrb[0].mxu0
      %824 = vmatprep.mubr.bf16.mxu0 %v287
      %825 = vmatmul.mubr.bf16.gmra.mrb[0].mxu0 %v286
      %v826 = vpop.f32.mrb[0].mxu0
      %v827 = vadd.f32 %v251, %v826
      %v828 = vpop.f32.mrb[0].mxu0
      %v829 = vpop.f32.mrb[0].mxu0
      %v830 = vadd.f32 %v256, %v829
      %v831 = vpop.f32.mrb[0].mxu0
      %832 = vdwg.mxu0
      %833 = vmatprep.subr.bf16.mxu0 0
      %834 = vmatpush1.bf16.msra.mxu0 %v746
      %835 = vmatprep.subr.bf16.mxu0 0
      %836 = vmatpush1.bf16.msra.mxu0 %v747
      %837 = vmatprep.subr.bf16.mxu0 0
      %838 = vmatpush1.bf16.msra.mxu0 %v748
      %839 = vmatprep.subr.bf16.mxu0 0
      %840 = vmatpush1.bf16.msra.mxu0 %v749
      %841 = vmatprep.subr.bf16.mxu0 0
      %842 = vmatpush1.bf16.msra.mxu0 %v750
      %843 = vmatprep.subr.bf16.mxu0 0
      %844 = vmatpush1.bf16.msra.mxu0 %v751
      %845 = vmatprep.subr.bf16.mxu0 0
      %846 = vmatpush1.bf16.msra.mxu0 %v752
      %847 = vmatprep.subr.bf16.mxu0 0
      %848 = vmatpush1.bf16.msra.mxu0 %v753
      %849 = vmatprep.subr.bf16.mxu0 0
      %850 = vmatpush1.bf16.msra.mxu0 %v754
      %851 = vmatprep.subr.bf16.mxu0 0
      %852 = vmatpush1.bf16.msra.mxu0 %v755
      %853 = vmatprep.subr.bf16.mxu0 0
      %854 = vmatpush1.bf16.msra.mxu0 %v756
      %855 = vmatprep.subr.bf16.mxu0 0
      %856 = vmatpush1.bf16.msra.mxu0 0
      %857 = vmatprep.subr.bf16.mxu0 0
      %858 = vmatpush1.bf16.msra.mxu0 0
      %859 = vmatprep.subr.bf16.mxu0 0
      %860 = vmatpush1.bf16.msra.mxu0 0
      %861 = vmatprep.subr.bf16.mxu0 0
      %862 = vmatpush1.bf16.msra.mxu0 0
      %863 = vmatprep.subr.bf16.mxu0 0
      %864 = vmatpush1.bf16.msra.mxu0 0
      %865 = vmatprep.mubr.bf16.mxu0 %v460
      %866 = vmatmul.mubr.bf16.gmra.mrb[0].mxu0 %v284
      %v867 = vpop.f32.mrb[0].mxu0
      %v868 = vadd.f32 %v819, %v867
      %v869 = vpop.f32.mrb[0].mxu0
      %v870 = vpop.f32.mrb[0].mxu0
      %v871 = vadd.f32 %v822, %v870
      %v872 = vpop.f32.mrb[0].mxu0
      %873 = vmatprep.mubr.bf16.mxu0 %v463
      %874 = vmatmul.mubr.bf16.gmra.mrb[0].mxu0 %v288
      %v875 = vpop.f32.mrb[0].mxu0
      %v876 = vadd.f32 %v827, %v875
      %v877 = vpop.f32.mrb[0].mxu0
      %v878 = vpop.f32.mrb[0].mxu0
      %v879 = vadd.f32 %v830, %v878
      %v880 = vpop.f32.mrb[0].mxu0
      %881 = vdwg.mxu0
      %v882 = vmax.f32 %v868, 0.0
      %v883 = vmax.f32 %v871, 0.0
      %v884 = vmax.f32 %v876, 0.0
      %v885 = vmax.f32 %v879, 0.0
      %v886 = vmax.f32 %v563, %v882
      %v887 = vmax.f32 %v564, %v883
      %v888 = vmax.f32 %v565, %v884
      %v889 = vmax.f32 %v566, %v885
      %s890 = scalar_lea.vmem %s165, 432
      %v891 = vld [vmem:[%s890] sm:$0xf]
      %v892 = vld [vmem:[%s890 + $0x4] sm:$0xf]
      %v893 = vld [vmem:[%s890 + $0x8] sm:$0xf]
      %v894 = vld [vmem:[%s890 + $0xc] sm:$0xf]
      %v895 = vld [vmem:[%s890 + $0x10] sm:$0xf]
      %v896 = vld [vmem:[%s890 + $0x14] sm:$0xf]
      %v897 = vld [vmem:[%s890 + $0x18] sm:$0xf]
      %v898 = vld [vmem:[%s890 + $0x1c] sm:$0xf]
      %v899 = vld [vmem:[%s890 + $0x20] sm:$0xf]
      %v900 = vld [vmem:[%s890 + $0x24] sm:$0xf]
      %v901 = vld [vmem:[%s890 + $0x28] sm:$0xf]
      %v902 = vld [vmem:[%s890 + $0x2c] sm:$0xf]
      %v903 = vld [vmem:[%s890 + $0x30] sm:$0xf]
      %v904 = vld [vmem:[%s890 + $0x34] sm:$0xf]
      %v905 = vld [vmem:[%s890 + $0x38] sm:$0xf]
      %v906 = vld [vmem:[%s890 + $0x3c] sm:$0xf]
      %v907 = vld [vmem:[%s890 + $0x40] sm:$0xf]
      %v908 = vld [vmem:[%s890 + $0x44] sm:$0xf]
      %v909 = vld [vmem:[%s890 + $0x48] sm:$0xf]
      %v910 = vld [vmem:[%s890 + $0x4c] sm:$0xf]
      %v911 = vld [vmem:[%s890 + $0x50] sm:$0xf]
      %v912 = vld [vmem:[%s890 + $0x54] sm:$0xf]
      %v913 = vld [vmem:[%s890 + $0x58] sm:$0xf]
      %v914 = vld [vmem:[%s890 + $0x5c] sm:$0xf]
      %v915 = vld [vmem:[%s890 + $0x60] sm:$0xf]
      %v916 = vld [vmem:[%s890 + $0x64] sm:$0xf]
      %v917 = vld [vmem:[%s890 + $0x68] sm:$0xf]
      %v918 = vld [vmem:[%s890 + $0x6c] sm:$0xf]
      %v919 = vld [vmem:[%s890 + $0x70] sm:$0xf]
      %v920 = vld [vmem:[%s890 + $0x74] sm:$0xf]
      %v921 = vld [vmem:[%s890 + $0x78] sm:$0xf]
      %v922 = vld [vmem:[%s890 + $0x7c] sm:$0xf]
      %v923 = vld [vmem:[%s890 + $0x80] sm:$0xf]
      %v924 = vld [vmem:[%s890 + $0x84] sm:$0xf]
      %v925 = vld [vmem:[%s890 + $0x88] sm:$0xf]
      %v926 = vld [vmem:[%s890 + $0x8c] sm:$0xf]
      %v927 = vld [vmem:[%s890 + $0x90] sm:$0xf]
      %v928 = vld [vmem:[%s890 + $0x94] sm:$0xf]
      %v929 = vld [vmem:[%s890 + $0x98] sm:$0xf]
      %v930 = vld [vmem:[%s890 + $0x9c] sm:$0xf]
      %v931 = vld [vmem:[%s890 + $0xa0] sm:$0xf]
      %v932 = vld [vmem:[%s890 + $0xa4] sm:$0xf]
      %v933 = vld [vmem:[%s890 + $0xa8] sm:$0xf]
      %v934 = vld [vmem:[%s890 + $0xac] sm:$0xf]
      %v935 = vld [vmem:[%s890 + $0xb0] sm:$0xf]
      %v936 = vld [vmem:[%s890 + $0xb4] sm:$0xf]
      %v937 = vld [vmem:[%s890 + $0xb8] sm:$0xf]
      %v938 = vld [vmem:[%s890 + $0xbc] sm:$0xf]
      %v939 = vld [vmem:[%s890 + $0xc0] sm:$0xf]
      %v940 = vld [vmem:[%s890 + $0xc4] sm:$0xf]
      %v941 = vld [vmem:[%s890 + $0xc8] sm:$0xf]
      %v942 = vld [vmem:[%s890 + $0xcc] sm:$0xf]
      %v943 = vld [vmem:[%s890 + $0xd0] sm:$0xf]
      %v944 = vld [vmem:[%s890 + $0xd4] sm:$0xf]
      %v999 = vunpack.c.l.b16 %v891
      %v1000 = vunpack.c.l.b16 %v892
      %v1001 = vunpack.c.l.b16 %v893
      %v1002 = vunpack.c.l.b16 %v894
      %v1003 = vunpack.c.l.b16 %v895
      %v1004 = vunpack.c.l.b16 %v896
      %v1005 = vunpack.c.l.b16 %v897
      %v1006 = vunpack.c.l.b16 %v898
      %v1007 = vunpack.c.l.b16 %v899
      %v1008 = vunpack.c.l.b16 %v900
      %v1009 = vunpack.c.l.b16 %v901
      %v1010 = vunpack.c.l.b16 %v902
      %v1011 = vunpack.c.l.b16 %v903
      %v1012 = vunpack.c.l.b16 %v904
      %v1013 = vunpack.c.l.b16 %v905
      %v1014 = vunpack.c.l.b16 %v906
      %v1015 = vunpack.c.l.b16 %v907
      %v1016 = vunpack.c.l.b16 %v908
      %v1017 = vunpack.c.l.b16 %v909
      %v1018 = vunpack.c.l.b16 %v910
      %v1019 = vunpack.c.l.b16 %v911
      %v1020 = vunpack.c.l.b16 %v912
      %v1021 = vunpack.c.l.b16 %v913
      %v1022 = vunpack.c.l.b16 %v914
      %v1023 = vunpack.c.l.b16 %v915
      %v1024 = vunpack.c.l.b16 %v916
      %v1025 = vunpack.c.l.b16 %v917
      %v1026 = vunpack.c.l.b16 %v918
      %v1027 = vunpack.c.l.b16 %v919
      %v1028 = vunpack.c.l.b16 %v920
      %v1029 = vunpack.c.l.b16 %v921
      %v1030 = vunpack.c.l.b16 %v922
      %v1031 = vunpack.c.l.b16 %v923
      %v1032 = vunpack.c.l.b16 %v924
      %v1033 = vunpack.c.l.b16 %v925
      %v1034 = vunpack.c.l.b16 %v926
      %v1035 = vunpack.c.l.b16 %v927
      %v1036 = vunpack.c.l.b16 %v928
      %v1037 = vunpack.c.l.b16 %v929
      %v1038 = vunpack.c.l.b16 %v930
      %v1039 = vunpack.c.l.b16 %v931
      %v1040 = vunpack.c.l.b16 %v932
      %v1041 = vunpack.c.l.b16 %v933
      %v1042 = vunpack.c.l.b16 %v934
      %v1043 = vunpack.c.l.b16 %v935
      %v1044 = vunpack.c.l.b16 %v936
      %v1045 = vunpack.c.l.b16 %v937
      %v1046 = vunpack.c.l.b16 %v938
      %v1047 = vunpack.c.l.b16 %v939
      %v1048 = vunpack.c.l.b16 %v940
      %v1049 = vunpack.c.l.b16 %v941
      %v1050 = vunpack.c.l.b16 %v942
      %v1051 = vunpack.c.l.b16 %v943
      %v1052 = vunpack.c.l.b16 %v944
      %v1053 = vpack.c.b16 %v1000, %v999
      %v1054 = vpack.c.b16 %v1002, %v1001
      %v1055 = vpack.c.b16 %v1004, %v1003
      %v1056 = vpack.c.b16 %v1006, %v1005
      %v1057 = vpack.c.b16 %v1008, %v1007
      %v1058 = vpack.c.b16 %v1010, %v1009
      %v1059 = vpack.c.b16 %v1012, %v1011
      %v1060 = vpack.c.b16 %v1014, %v1013
      %v1061 = vpack.c.b16 %v1016, %v1015
      %v1062 = vpack.c.b16 %v1018, %v1017
      %v1063 = vpack.c.b16 %v1020, %v1019
      %v1064 = vpack.c.b16 %v1022, %v1021
      %v1065 = vpack.c.b16 %v1024, %v1023
      %v1066 = vpack.c.b16 %v1026, %v1025
      %v1067 = vpack.c.b16 %v1028, %v1027
      %v1068 = vpack.c.b16 %v1030, %v1029
      %v1069 = vpack.c.b16 %v1032, %v1031
      %v1070 = vpack.c.b16 %v1034, %v1033
      %v1071 = vpack.c.b16 %v1036, %v1035
      %v1072 = vpack.c.b16 %v1038, %v1037
      %v1073 = vpack.c.b16 %v1040, %v1039
      %v1074 = vpack.c.b16 %v1042, %v1041
      %v1075 = vpack.c.b16 %v1044, %v1043
      %v1076 = vpack.c.b16 %v1046, %v1045
      %v1077 = vpack.c.b16 %v1048, %v1047
      %v1078 = vpack.c.b16 %v1050, %v1049
      %v1079 = vpack.c.b16 %v1052, %v1051
      %1107 = vmatprep.subr.bf16.mxu0 0
      %1108 = vmatpush1.bf16.msra.mxu0 %v1053
      %1109 = vmatprep.subr.bf16.mxu0 0
      %1110 = vmatpush1.bf16.msra.mxu0 %v1054
      %1111 = vmatprep.subr.bf16.mxu0 0
      %1112 = vmatpush1.bf16.msra.mxu0 %v1055
      %1113 = vmatprep.subr.bf16.mxu0 0
      %1114 = vmatpush1.bf16.msra.mxu0 %v1056
      %1115 = vmatprep.subr.bf16.mxu0 0
      %1116 = vmatpush1.bf16.msra.mxu0 %v1057
      %1117 = vmatprep.subr.bf16.mxu0 0
      %1118 = vmatpush1.bf16.msra.mxu0 %v1058
      %1119 = vmatprep.subr.bf16.mxu0 0
      %1120 = vmatpush1.bf16.msra.mxu0 %v1059
      %1121 = vmatprep.subr.bf16.mxu0 0
      %1122 = vmatpush1.bf16.msra.mxu0 %v1060
      %1123 = vmatprep.subr.bf16.mxu0 0
      %1124 = vmatpush1.bf16.msra.mxu0 %v1061
      %1125 = vmatprep.subr.bf16.mxu0 0
      %1126 = vmatpush1.bf16.msra.mxu0 %v1062
      %1127 = vmatprep.subr.bf16.mxu0 0
      %1128 = vmatpush1.bf16.msra.mxu0 %v1063
      %1129 = vmatprep.subr.bf16.mxu0 0
      %1130 = vmatpush1.bf16.msra.mxu0 %v1064
      %1131 = vmatprep.subr.bf16.mxu0 0
      %1132 = vmatpush1.bf16.msra.mxu0 %v1065
      %1133 = vmatprep.subr.bf16.mxu0 0
      %1134 = vmatpush1.bf16.msra.mxu0 %v1066
      %1135 = vmatprep.subr.bf16.mxu0 0
      %1136 = vmatpush1.bf16.msra.mxu0 %v1067
      %1137 = vmatprep.subr.bf16.mxu0 0
      %1138 = vmatpush1.bf16.msra.mxu0 %v1068
      %1139 = vmatprep.mubr.bf16.mxu0 %v283
      %1140 = vmatmul.mubr.bf16.gmra.mrb[0].mxu0 %v282
      %v1141 = vpop.f32.mrb[0].mxu0
      %v1142 = vadd.f32 %v241, %v1141
      %v1143 = vpop.f32.mrb[0].mxu0
      %v1144 = vpop.f32.mrb[0].mxu0
      %v1145 = vadd.f32 %v246, %v1144
      %v1146 = vpop.f32.mrb[0].mxu0
      %1147 = vmatprep.mubr.bf16.mxu0 %v287
      %1148 = vmatmul.mubr.bf16.gmra.mrb[0].mxu0 %v286
      %v1149 = vpop.f32.mrb[0].mxu0
      %v1150 = vadd.f32 %v251, %v1149
      %v1151 = vpop.f32.mrb[0].mxu0
      %v1152 = vpop.f32.mrb[0].mxu0
      %v1153 = vadd.f32 %v256, %v1152
      %v1154 = vpop.f32.mrb[0].mxu0
      %1155 = vdwg.mxu0
      %1156 = vmatprep.subr.bf16.mxu0 0
      %1157 = vmatpush1.bf16.msra.mxu0 %v1069
      %1158 = vmatprep.subr.bf16.mxu0 0
      %1159 = vmatpush1.bf16.msra.mxu0 %v1070
      %1160 = vmatprep.subr.bf16.mxu0 0
      %1161 = vmatpush1.bf16.msra.mxu0 %v1071
      %1162 = vmatprep.subr.bf16.mxu0 0
      %1163 = vmatpush1.bf16.msra.mxu0 %v1072
      %1164 = vmatprep.subr.bf16.mxu0 0
      %1165 = vmatpush1.bf16.msra.mxu0 %v1073
      %1166 = vmatprep.subr.bf16.mxu0 0
      %1167 = vmatpush1.bf16.msra.mxu0 %v1074
      %1168 = vmatprep.subr.bf16.mxu0 0
      %1169 = vmatpush1.bf16.msra.mxu0 %v1075
      %1170 = vmatprep.subr.bf16.mxu0 0
      %1171 = vmatpush1.bf16.msra.mxu0 %v1076
      %1172 = vmatprep.subr.bf16.mxu0 0
      %1173 = vmatpush1.bf16.msra.mxu0 %v1077
      %1174 = vmatprep.subr.bf16.mxu0 0
      %1175 = vmatpush1.bf16.msra.mxu0 %v1078
      %1176 = vmatprep.subr.bf16.mxu0 0
      %1177 = vmatpush1.bf16.msra.mxu0 %v1079
      %1178 = vmatprep.subr.bf16.mxu0 0
      %1179 = vmatpush1.bf16.msra.mxu0 0
      %1180 = vmatprep.subr.bf16.mxu0 0
      %1181 = vmatpush1.bf16.msra.mxu0 0
      %1182 = vmatprep.subr.bf16.mxu0 0
      %1183 = vmatpush1.bf16.msra.mxu0 0
      %1184 = vmatprep.subr.bf16.mxu0 0
      %1185 = vmatpush1.bf16.msra.mxu0 0
      %1186 = vmatprep.subr.bf16.mxu0 0
      %1187 = vmatpush1.bf16.msra.mxu0 0
      %1188 = vmatprep.mubr.bf16.mxu0 %v460
      %1189 = vmatmul.mubr.bf16.gmra.mrb[0].mxu0 %v284
      %v1190 = vpop.f32.mrb[0].mxu0
      %v1191 = vadd.f32 %v1142, %v1190
      %v1192 = vpop.f32.mrb[0].mxu0
      %v1193 = vpop.f32.mrb[0].mxu0
      %v1194 = vadd.f32 %v1145, %v1193
      %v1195 = vpop.f32.mrb[0].mxu0
      %1196 = vmatprep.mubr.bf16.mxu0 %v463
      %1197 = vmatmul.mubr.bf16.gmra.mrb[0].mxu0 %v288
      %v1198 = vpop.f32.mrb[0].mxu0
      %v1199 = vadd.f32 %v1150, %v1198
      %v1200 = vpop.f32.mrb[0].mxu0
      %v1201 = vpop.f32.mrb[0].mxu0
      %v1202 = vadd.f32 %v1153, %v1201
      %v1203 = vpop.f32.mrb[0].mxu0
      %1204 = vdwg.mxu0
      %v1205 = vmax.f32 %v1191, 0.0
      %v1206 = vmax.f32 %v1194, 0.0
      %v1207 = vmax.f32 %v1199, 0.0
      %v1208 = vmax.f32 %v1202, 0.0
      %v1209 = vmax.f32 %v886, %v1205
      %v1210 = vmax.f32 %v887, %v1206
      %v1211 = vmax.f32 %v888, %v1207
      %v1212 = vmax.f32 %v889, %v1208
      %s1213 = scalar_lea.vmem %s165, 648
      %v1214 = vld [vmem:[%s1213] sm:$0xf]
      %v1215 = vld [vmem:[%s1213 + $0x4] sm:$0xf]
      %v1216 = vld [vmem:[%s1213 + $0x8] sm:$0xf]
      %v1217 = vld [vmem:[%s1213 + $0xc] sm:$0xf]
      %v1218 = vld [vmem:[%s1213 + $0x10] sm:$0xf]
      %v1219 = vld [vmem:[%s1213 + $0x14] sm:$0xf]
      %v1220 = vld [vmem:[%s1213 + $0x18] sm:$0xf]
      %v1221 = vld [vmem:[%s1213 + $0x1c] sm:$0xf]
      %v1222 = vld [vmem:[%s1213 + $0x20] sm:$0xf]
      %v1223 = vld [vmem:[%s1213 + $0x24] sm:$0xf]
      %v1224 = vld [vmem:[%s1213 + $0x28] sm:$0xf]
      %v1225 = vld [vmem:[%s1213 + $0x2c] sm:$0xf]
      %v1226 = vld [vmem:[%s1213 + $0x30] sm:$0xf]
      %v1227 = vld [vmem:[%s1213 + $0x34] sm:$0xf]
      %v1228 = vld [vmem:[%s1213 + $0x38] sm:$0xf]
      %v1229 = vld [vmem:[%s1213 + $0x3c] sm:$0xf]
      %v1230 = vld [vmem:[%s1213 + $0x40] sm:$0xf]
      %v1231 = vld [vmem:[%s1213 + $0x44] sm:$0xf]
      %v1232 = vld [vmem:[%s1213 + $0x48] sm:$0xf]
      %v1233 = vld [vmem:[%s1213 + $0x4c] sm:$0xf]
      %v1234 = vld [vmem:[%s1213 + $0x50] sm:$0xf]
      %v1235 = vld [vmem:[%s1213 + $0x54] sm:$0xf]
      %v1236 = vld [vmem:[%s1213 + $0x58] sm:$0xf]
      %v1237 = vld [vmem:[%s1213 + $0x5c] sm:$0xf]
      %v1238 = vld [vmem:[%s1213 + $0x60] sm:$0xf]
      %v1239 = vld [vmem:[%s1213 + $0x64] sm:$0xf]
      %v1240 = vld [vmem:[%s1213 + $0x68] sm:$0xf]
      %v1241 = vld [vmem:[%s1213 + $0x6c] sm:$0xf]
      %v1242 = vld [vmem:[%s1213 + $0x70] sm:$0xf]
      %v1243 = vld [vmem:[%s1213 + $0x74] sm:$0xf]
      %v1244 = vld [vmem:[%s1213 + $0x78] sm:$0xf]
      %v1245 = vld [vmem:[%s1213 + $0x7c] sm:$0xf]
      %v1246 = vld [vmem:[%s1213 + $0x80] sm:$0xf]
      %v1247 = vld [vmem:[%s1213 + $0x84] sm:$0xf]
      %v1248 = vld [vmem:[%s1213 + $0x88] sm:$0xf]
      %v1249 = vld [vmem:[%s1213 + $0x8c] sm:$0xf]
      %v1250 = vld [vmem:[%s1213 + $0x90] sm:$0xf]
      %v1251 = vld [vmem:[%s1213 + $0x94] sm:$0xf]
      %v1252 = vld [vmem:[%s1213 + $0x98] sm:$0xf]
      %v1253 = vld [vmem:[%s1213 + $0x9c] sm:$0xf]
      %v1254 = vld [vmem:[%s1213 + $0xa0] sm:$0xf]
      %v1255 = vld [vmem:[%s1213 + $0xa4] sm:$0xf]
      %v1256 = vld [vmem:[%s1213 + $0xa8] sm:$0xf]
      %v1257 = vld [vmem:[%s1213 + $0xac] sm:$0xf]
      %v1258 = vld [vmem:[%s1213 + $0xb0] sm:$0xf]
      %v1259 = vld [vmem:[%s1213 + $0xb4] sm:$0xf]
      %v1260 = vld [vmem:[%s1213 + $0xb8] sm:$0xf]
      %v1261 = vld [vmem:[%s1213 + $0xbc] sm:$0xf]
      %v1262 = vld [vmem:[%s1213 + $0xc0] sm:$0xf]
      %v1263 = vld [vmem:[%s1213 + $0xc4] sm:$0xf]
      %v1264 = vld [vmem:[%s1213 + $0xc8] sm:$0xf]
      %v1265 = vld [vmem:[%s1213 + $0xcc] sm:$0xf]
      %v1266 = vld [vmem:[%s1213 + $0xd0] sm:$0xf]
      %v1267 = vld [vmem:[%s1213 + $0xd4] sm:$0xf]
      %v1322 = vunpack.c.l.b16 %v1214
      %v1323 = vunpack.c.l.b16 %v1215
      %v1324 = vunpack.c.l.b16 %v1216
      %v1325 = vunpack.c.l.b16 %v1217
      %v1326 = vunpack.c.l.b16 %v1218
      %v1327 = vunpack.c.l.b16 %v1219
      %v1328 = vunpack.c.l.b16 %v1220
      %v1329 = vunpack.c.l.b16 %v1221
      %v1330 = vunpack.c.l.b16 %v1222
      %v1331 = vunpack.c.l.b16 %v1223
      %v1332 = vunpack.c.l.b16 %v1224
      %v1333 = vunpack.c.l.b16 %v1225
      %v1334 = vunpack.c.l.b16 %v1226
      %v1335 = vunpack.c.l.b16 %v1227
      %v1336 = vunpack.c.l.b16 %v1228
      %v1337 = vunpack.c.l.b16 %v1229
      %v1338 = vunpack.c.l.b16 %v1230
      %v1339 = vunpack.c.l.b16 %v1231
      %v1340 = vunpack.c.l.b16 %v1232
      %v1341 = vunpack.c.l.b16 %v1233
      %v1342 = vunpack.c.l.b16 %v1234
      %v1343 = vunpack.c.l.b16 %v1235
      %v1344 = vunpack.c.l.b16 %v1236
      %v1345 = vunpack.c.l.b16 %v1237
      %v1346 = vunpack.c.l.b16 %v1238
      %v1347 = vunpack.c.l.b16 %v1239
      %v1348 = vunpack.c.l.b16 %v1240
      %v1349 = vunpack.c.l.b16 %v1241
      %v1350 = vunpack.c.l.b16 %v1242
      %v1351 = vunpack.c.l.b16 %v1243
      %v1352 = vunpack.c.l.b16 %v1244
      %v1353 = vunpack.c.l.b16 %v1245
      %v1354 = vunpack.c.l.b16 %v1246
      %v1355 = vunpack.c.l.b16 %v1247
      %v1356 = vunpack.c.l.b16 %v1248
      %v1357 = vunpack.c.l.b16 %v1249
      %v1358 = vunpack.c.l.b16 %v1250
      %v1359 = vunpack.c.l.b16 %v1251
      %v1360 = vunpack.c.l.b16 %v1252
      %v1361 = vunpack.c.l.b16 %v1253
      %v1362 = vunpack.c.l.b16 %v1254
      %v1363 = vunpack.c.l.b16 %v1255
      %v1364 = vunpack.c.l.b16 %v1256
      %v1365 = vunpack.c.l.b16 %v1257
      %v1366 = vunpack.c.l.b16 %v1258
      %v1367 = vunpack.c.l.b16 %v1259
      %v1368 = vunpack.c.l.b16 %v1260
      %v1369 = vunpack.c.l.b16 %v1261
      %v1370 = vunpack.c.l.b16 %v1262
      %v1371 = vunpack.c.l.b16 %v1263
      %v1372 = vunpack.c.l.b16 %v1264
      %v1373 = vunpack.c.l.b16 %v1265
      %v1374 = vunpack.c.l.b16 %v1266
      %v1375 = vunpack.c.l.b16 %v1267
      %v1376 = vpack.c.b16 %v1323, %v1322
      %v1377 = vpack.c.b16 %v1325, %v1324
      %v1378 = vpack.c.b16 %v1327, %v1326
      %v1379 = vpack.c.b16 %v1329, %v1328
      %v1380 = vpack.c.b16 %v1331, %v1330
      %v1381 = vpack.c.b16 %v1333, %v1332
      %v1382 = vpack.c.b16 %v1335, %v1334
      %v1383 = vpack.c.b16 %v1337, %v1336
      %v1384 = vpack.c.b16 %v1339, %v1338
      %v1385 = vpack.c.b16 %v1341, %v1340
      %v1386 = vpack.c.b16 %v1343, %v1342
      %v1387 = vpack.c.b16 %v1345, %v1344
      %v1388 = vpack.c.b16 %v1347, %v1346
      %v1389 = vpack.c.b16 %v1349, %v1348
      %v1390 = vpack.c.b16 %v1351, %v1350
      %v1391 = vpack.c.b16 %v1353, %v1352
      %v1392 = vpack.c.b16 %v1355, %v1354
      %v1393 = vpack.c.b16 %v1357, %v1356
      %v1394 = vpack.c.b16 %v1359, %v1358
      %v1395 = vpack.c.b16 %v1361, %v1360
      %v1396 = vpack.c.b16 %v1363, %v1362
      %v1397 = vpack.c.b16 %v1365, %v1364
      %v1398 = vpack.c.b16 %v1367, %v1366
      %v1399 = vpack.c.b16 %v1369, %v1368
      %v1400 = vpack.c.b16 %v1371, %v1370
      %v1401 = vpack.c.b16 %v1373, %v1372
      %v1402 = vpack.c.b16 %v1375, %v1374
      %1430 = vmatprep.subr.bf16.mxu0 0
      %1431 = vmatpush1.bf16.msra.mxu0 %v1376
      %1432 = vmatprep.subr.bf16.mxu0 0
      %1433 = vmatpush1.bf16.msra.mxu0 %v1377
      %1434 = vmatprep.subr.bf16.mxu0 0
      %1435 = vmatpush1.bf16.msra.mxu0 %v1378
      %1436 = vmatprep.subr.bf16.mxu0 0
      %1437 = vmatpush1.bf16.msra.mxu0 %v1379
      %1438 = vmatprep.subr.bf16.mxu0 0
      %1439 = vmatpush1.bf16.msra.mxu0 %v1380
      %1440 = vmatprep.subr.bf16.mxu0 0
      %1441 = vmatpush1.bf16.msra.mxu0 %v1381
      %1442 = vmatprep.subr.bf16.mxu0 0
      %1443 = vmatpush1.bf16.msra.mxu0 %v1382
      %1444 = vmatprep.subr.bf16.mxu0 0
      %1445 = vmatpush1.bf16.msra.mxu0 %v1383
      %1446 = vmatprep.subr.bf16.mxu0 0
      %1447 = vmatpush1.bf16.msra.mxu0 %v1384
      %1448 = vmatprep.subr.bf16.mxu0 0
      %1449 = vmatpush1.bf16.msra.mxu0 %v1385
      %1450 = vmatprep.subr.bf16.mxu0 0
      %1451 = vmatpush1.bf16.msra.mxu0 %v1386
      %1452 = vmatprep.subr.bf16.mxu0 0
      %1453 = vmatpush1.bf16.msra.mxu0 %v1387
      %1454 = vmatprep.subr.bf16.mxu0 0
      %1455 = vmatpush1.bf16.msra.mxu0 %v1388
      %1456 = vmatprep.subr.bf16.mxu0 0
      %1457 = vmatpush1.bf16.msra.mxu0 %v1389
      %1458 = vmatprep.subr.bf16.mxu0 0
      %1459 = vmatpush1.bf16.msra.mxu0 %v1390
      %1460 = vmatprep.subr.bf16.mxu0 0
      %1461 = vmatpush1.bf16.msra.mxu0 %v1391
      %1462 = vmatprep.mubr.bf16.mxu0 %v283
      %1463 = vmatmul.mubr.bf16.gmra.mrb[0].mxu0 %v282
      %v1464 = vpop.f32.mrb[0].mxu0
      %v1465 = vadd.f32 %v241, %v1464
      %v1466 = vpop.f32.mrb[0].mxu0
      %v1467 = vpop.f32.mrb[0].mxu0
      %v1468 = vadd.f32 %v246, %v1467
      %v1469 = vpop.f32.mrb[0].mxu0
      %1470 = vmatprep.mubr.bf16.mxu0 %v287
      %1471 = vmatmul.mubr.bf16.gmra.mrb[0].mxu0 %v286
      %v1472 = vpop.f32.mrb[0].mxu0
      %v1473 = vadd.f32 %v251, %v1472
      %v1474 = vpop.f32.mrb[0].mxu0
      %v1475 = vpop.f32.mrb[0].mxu0
      %v1476 = vadd.f32 %v256, %v1475
      %v1477 = vpop.f32.mrb[0].mxu0
      %1478 = vdwg.mxu0
      %1479 = vmatprep.subr.bf16.mxu0 0
      %1480 = vmatpush1.bf16.msra.mxu0 %v1392
      %1481 = vmatprep.subr.bf16.mxu0 0
      %1482 = vmatpush1.bf16.msra.mxu0 %v1393
      %1483 = vmatprep.subr.bf16.mxu0 0
      %1484 = vmatpush1.bf16.msra.mxu0 %v1394
      %1485 = vmatprep.subr.bf16.mxu0 0
      %1486 = vmatpush1.bf16.msra.mxu0 %v1395
      %1487 = vmatprep.subr.bf16.mxu0 0
      %1488 = vmatpush1.bf16.msra.mxu0 %v1396
      %1489 = vmatprep.subr.bf16.mxu0 0
      %1490 = vmatpush1.bf16.msra.mxu0 %v1397
      %1491 = vmatprep.subr.bf16.mxu0 0
      %1492 = vmatpush1.bf16.msra.mxu0 %v1398
      %1493 = vmatprep.subr.bf16.mxu0 0
      %1494 = vmatpush1.bf16.msra.mxu0 %v1399
      %1495 = vmatprep.subr.bf16.mxu0 0
      %1496 = vmatpush1.bf16.msra.mxu0 %v1400
      %1497 = vmatprep.subr.bf16.mxu0 0
      %1498 = vmatpush1.bf16.msra.mxu0 %v1401
      %1499 = vmatprep.subr.bf16.mxu0 0
      %1500 = vmatpush1.bf16.msra.mxu0 %v1402
      %1501 = vmatprep.subr.bf16.mxu0 0
      %1502 = vmatpush1.bf16.msra.mxu0 0
      %1503 = vmatprep.subr.bf16.mxu0 0
      %1504 = vmatpush1.bf16.msra.mxu0 0
      %1505 = vmatprep.subr.bf16.mxu0 0
      %1506 = vmatpush1.bf16.msra.mxu0 0
      %1507 = vmatprep.subr.bf16.mxu0 0
      %1508 = vmatpush1.bf16.msra.mxu0 0
      %1509 = vmatprep.subr.bf16.mxu0 0
      %1510 = vmatpush1.bf16.msra.mxu0 0
      %1511 = vmatprep.mubr.bf16.mxu0 %v460
      %1512 = vmatmul.mubr.bf16.gmra.mrb[0].mxu0 %v284
      %v1513 = vpop.f32.mrb[0].mxu0
      %v1514 = vadd.f32 %v1465, %v1513
      %v1515 = vpop.f32.mrb[0].mxu0
      %v1516 = vpop.f32.mrb[0].mxu0
      %v1517 = vadd.f32 %v1468, %v1516
      %v1518 = vpop.f32.mrb[0].mxu0
      %1519 = vmatprep.mubr.bf16.mxu0 %v463
      %1520 = vmatmul.mubr.bf16.gmra.mrb[0].mxu0 %v288
      %v1521 = vpop.f32.mrb[0].mxu0
      %v1522 = vadd.f32 %v1473, %v1521
      %v1523 = vpop.f32.mrb[0].mxu0
      %v1524 = vpop.f32.mrb[0].mxu0
      %v1525 = vadd.f32 %v1476, %v1524
      %v1526 = vpop.f32.mrb[0].mxu0
      %1527 = vdwg.mxu0
      %v1528 = vmax.f32 %v1514, 0.0
      %v1529 = vmax.f32 %v1517, 0.0
      %v1530 = vmax.f32 %v1522, 0.0
      %v1531 = vmax.f32 %v1525, 0.0
      %v1532 = vmax.f32 %v1209, %v1528
      %v1533 = vmax.f32 %v1210, %v1529
      %v1534 = vmax.f32 %v1211, %v1530
      %v1535 = vmax.f32 %v1212, %v1531
      %vm1536 = vcmask 261120
      %1537 = vst.msk [vmem:[%s170] sm:$0xff] %vm1536, %v1532
      %1538 = vst.msk [vmem:[%s170 + $0x8] sm:$0xff] %vm1536, %v1533
      %1539 = vst.msk [vmem:[%s170 + $0x10] sm:$0xff] %vm1536, %v1534
      %1540 = vst.msk [vmem:[%s170 + $0x18] sm:$0xff] %vm1536, %v1535
      %p1541 = scmp.lt.s32.totalorder %s14, 1
      %s1542 = scalar_select %p1541, %s14, 1
      %s1543 = smul.addr %s1542, 4
      %s1544 = smul.addr %s1543, 8
      %s1545 = scalar_lea.vmem %s3, %s1544
      // Predicated region
      $region33: #{conv3d_encoder.5} parent=31 // pred_check
        %p1546 = pneg %p100
      $region34: #{conv3d_encoder.5} parent=31 // pred_check_branch
        %1548 = sbr.rel (%p1546) target = $region36
      $region35: #{conv3d_encoder.5} parent=31 // pred_region
        _
      $region36: #{conv3d_encoder.5} parent=31 // pred_fallthru
        _
    $region32: #{conv3d_encoder.5} parent=5 // pred_fallthru
      _
    %p1549 = scmp.le.s32.totalorder 2, %s9
    // Predicated region
    $region37: #{conv3d_encoder.5} parent=5 // pred_check
      %p1550 = pneg %p1549
    $region38: #{conv3d_encoder.5} parent=5 // pred_check_branch
      %1552 = sbr.rel (%p1550) target = $region40
    $region39: #{conv3d_encoder.5} parent=5 // pred_region
      %s1553 = ssub.s32 %s9, 2
      // Predicated region
      $region41: #{conv3d_encoder.5} parent=39 // pred_check
        %p1554 = pneg %p106
      $region42: #{conv3d_encoder.5} parent=39 // pred_check_branch
        %1556 = sbr.rel (%p1554) target = $region44
      $region43: #{conv3d_encoder.5} parent=39 // pred_region
        %p1557 = scmp.lt.s32.totalorder %s15, 1
        %s1558 = scalar_select %p1557, %s15, 1
        %s1559 = smul.addr %s1558, 4
        %s1560 = smul.addr %s1559, 8
        %s1561 = scalar_lea.vmem %s3, %s1560
      $region44: #{conv3d_encoder.5} parent=39 // pred_fallthru
        _
    $region40: #{conv3d_encoder.5} parent=5 // pred_fallthru
      _
  $region6: #{conv3d_encoder.5} parent=0 // loop_footer
    %s13 = sadd.s32 1, %s9
  $region7: #{conv3d_encoder.5} parent=0 // loop_footer_branch
    %8 = sbr.rel target = $region3
  $region8: #{conv3d_encoder.5} parent=0 // loop_exit
    _

</llo_original>
